<compile_context>
chip_gen: v7x
topology: tpu7x:2x2x1
jax: 0.10.0
libtpu: 0.0.40
codegen_flags: <defaults>
</compile_context>

<pallas_src>
import functools
import numpy as np
import jax
import jax.numpy as jnp
from jax import lax
from jax.experimental import pallas as pl
from jax.experimental.pallas import tpu as pltpu


# ----------------------------- fused kernel ----------------------------------
def _cross_attention_kernel(*refs, num_heads, scale, qkv_bias):
    """One batch element per grid step: projections + attention + out-proj."""
    if qkv_bias:
        (q_ref, kv_ref, mask_ref, wq_ref, wk_ref, wv_ref, wp_ref,
         bq_ref, bk_ref, bv_ref, bp_ref, o_ref) = refs
    else:
        (q_ref, kv_ref, mask_ref, wq_ref, wk_ref, wv_ref, wp_ref,
         bp_ref, o_ref) = refs
        bq_ref = bk_ref = bv_ref = None

    N = q_ref.shape[1]
    C = q_ref.shape[2]

    # Load activations once, cast to bf16 for the MXU (accumulate in f32).
    x_q = q_ref[0].astype(jnp.bfloat16)        # (N, C)
    x_kv = kv_ref[0].astype(jnp.bfloat16)      # (N, C)
    mask = mask_ref[...]                       # (N, N) f32, broadcast over heads

    acc = jnp.zeros((N, C), jnp.float32)       # head-merged, lane-dense output

    # num_heads is a small static constant -> fully unrolled at trace time.
    for h in range(num_heads):
        qh = jnp.dot(x_q, wq_ref[h].astype(jnp.bfloat16),
                     preferred_element_type=jnp.float32)       # (N, Dh)
        kh = jnp.dot(x_kv, wk_ref[h].astype(jnp.bfloat16),
                     preferred_element_type=jnp.float32)       # (N, Dh)
        vh = jnp.dot(x_kv, wv_ref[h].astype(jnp.bfloat16),
                     preferred_element_type=jnp.float32)       # (N, Dh)
        if qkv_bias:
            qh = qh + bq_ref[h]
            kh = kh + bk_ref[h]
            vh = vh + bv_ref[h]

        # scores: contract the head dim of q with the head dim of k (q @ k^T)
        s = lax.dot_general(qh.astype(jnp.bfloat16), kh.astype(jnp.bfloat16),
                            (((1,), (1,)), ((), ())),
                            preferred_element_type=jnp.float32) * scale
        s = s + mask
        s = s - jnp.max(s, axis=-1, keepdims=True)
        p = jnp.exp(s)
        p = p * pl.reciprocal(jnp.sum(p, axis=-1, keepdims=True), approx=True)

        oh = jnp.dot(p.astype(jnp.bfloat16), vh.astype(jnp.bfloat16),
                     preferred_element_type=jnp.float32)       # (N, Dh)

        # output projection decomposed per head: out += oh @ Wp[h*Dh:(h+1)*Dh,:]
        acc = acc + jnp.dot(oh.astype(jnp.bfloat16),
                            wp_ref[h].astype(jnp.bfloat16),
                            preferred_element_type=jnp.float32)

    o_ref[0] = (acc + bp_ref[...]).astype(o_ref.dtype)


# ----------------------------- wrapper ---------------------------------------
def make_cross_attention(dim, num_heads=8, qkv_bias=False, qk_scale=None):
    assert dim % num_heads == 0
    head_dim = dim // num_heads
    scale = float(qk_scale) if qk_scale is not None else head_dim ** -0.5

    def forward(params, q, kv, mask):
        B, N, C = q.shape
        assert C == dim

        # Layout prep (plain JAX, fused by XLA): split weights per head so the
        # kernel never slices along lanes.  x @ W convention (W = W_pt.T).
        wq = params["wq"].reshape(C, num_heads, head_dim).transpose(1, 0, 2)
        wk = params["wkv"][:, :C].reshape(C, num_heads, head_dim).transpose(1, 0, 2)
        wv = params["wkv"][:, C:].reshape(C, num_heads, head_dim).transpose(1, 0, 2)
        wp = params["wp"].reshape(num_heads, head_dim, C)
        bp = params["bp"].reshape(1, C)

        def full_spec(*shape):
            return pl.BlockSpec(shape, lambda b: (0,) * len(shape))

        inputs = [q, kv, mask.astype(jnp.float32), wq, wk, wv, wp]
        in_specs = [
            pl.BlockSpec((1, N, C), lambda b: (b, 0, 0)),
            pl.BlockSpec((1, N, C), lambda b: (b, 0, 0)),
            full_spec(N, N),
            full_spec(num_heads, C, head_dim),
            full_spec(num_heads, C, head_dim),
            full_spec(num_heads, C, head_dim),
            full_spec(num_heads, head_dim, C),
        ]
        if qkv_bias:
            bq = params["bq"].reshape(num_heads, 1, head_dim)
            bk = params["bkv"][:C].reshape(num_heads, 1, head_dim)
            bv = params["bkv"][C:].reshape(num_heads, 1, head_dim)
            inputs += [bq, bk, bv]
            in_specs += [full_spec(num_heads, 1, head_dim)] * 3
        inputs.append(bp)
        in_specs.append(full_spec(1, C))

        kernel = functools.partial(_cross_attention_kernel,
                                   num_heads=num_heads, scale=scale,
                                   qkv_bias=qkv_bias)
        return pl.pallas_call(
            kernel,
            out_shape=jax.ShapeDtypeStruct((B, N, C), q.dtype),
            grid=(B,),
            in_specs=in_specs,
            out_specs=pl.BlockSpec((1, N, C), lambda b: (b, 0, 0)),
            compiler_params=pltpu.CompilerParams(
                dimension_semantics=("parallel",)),
        )(*inputs)

    return jax.jit(forward)


# ----------------------------- pure-JAX reference -----------------------------
def cross_attention_reference(params, q_in, kv_in, mask, num_heads,
                              qkv_bias=False, qk_scale=None):
    B, N, C = q_in.shape
    Dh = C // num_heads
    scale = qk_scale if qk_scale is not None else Dh ** -0.5
    q = q_in @ params["wq"]
    kv = kv_in @ params["wkv"]
    if qkv_bias:
        q = q + params["bq"]
        kv = kv + params["bkv"]
    q = q.reshape(B, N, 1, num_heads, Dh).transpose(2, 0, 3, 1, 4)[0]
    kv = kv.reshape(B, N, 2, num_heads, Dh).transpose(2, 0, 3, 1, 4)
    k, v = kv[0], kv[1]
    attn = jnp.einsum("bhqd,bhkd->bhqk", q, k) * scale
    attn = attn + mask
    attn = jax.nn.softmax(attn, axis=-1)
    x = jnp.einsum("bhqk,bhkd->bhqd", attn, v).transpose(0, 2, 1, 3).reshape(B, N, C)
    return x @ params["wp"] + params["bp"]


# ----------------------------- params / main ----------------------------------
def init_params(key, dim, qkv_bias):
    ks = jax.random.split(key, 5)
    std = 0.02
    p = {
        "wq": std * jax.random.normal(ks[0], (dim, dim), jnp.float32),
        "wkv": std * jax.random.normal(ks[1], (dim, 2 * dim), jnp.float32),
        "wp": std * jax.random.normal(ks[2], (dim, dim), jnp.float32),
        "bp": std * jax.random.normal(ks[3], (dim,), jnp.float32),
    }
    if qkv_bias:
        p["bq"] = std * jax.random.normal(ks[4], (dim,), jnp.float32)
        p["bkv"] = std * jax.random.normal(
            jax.random.fold_in(ks[4], 1), (2 * dim,), jnp.float32)
    return p


def _run_case(key, B, N, dim, heads, qkv_bias):
    kq, kkv, kp = jax.random.split(key, 3)
    q = jax.random.normal(kq, (B, N, dim), jnp.float32)
    kv = jax.random.normal(kkv, (B, N, dim), jnp.float32)
    tri = jnp.tril(jnp.ones((N, N), jnp.float32))
    mask = jnp.where(tri == 0, -1e9, 0.0).astype(jnp.float32)
    params = init_params(kp, dim, qkv_bias)

    fwd = make_cross_attention(dim, num_heads=heads, qkv_bias=qkv_bias)
    out = jax.block_until_ready(fwd(params, q, kv, mask))
    ref = cross_attention_reference(params, q, kv, mask, heads, qkv_bias)
    err = float(jnp.max(jnp.abs(out - ref)))
    assert np.isfinite(err) and err < 2e-2, f"max abs err {err}"
    return err


if __name__ == "__main__":
    key = jax.random.PRNGKey(0)
    k0, k1 = jax.random.split(key)
    # default module config: num_heads=8, qkv_bias=False
    _run_case(k0, B=2, N=16, dim=128, heads=8, qkv_bias=False)
    # alternate config exercising the qkv_bias compile-time branch
    _run_case(k1, B=2, N=16, dim=64, heads=4, qkv_bias=True)
    print("KERNEL_OK")
</pallas_src>

<mosaic_0001>
module attributes {stable_mosaic.version = 11 : i64} {
  func.func @_cross_attention_kernel(%arg0: i32, %arg1: memref<1x16x128xf32, #tpu.memory_space<vmem>>, %arg2: memref<1x16x128xf32, #tpu.memory_space<vmem>>, %arg3: memref<16x16xf32, #tpu.memory_space<vmem>>, %arg4: memref<8x128x16xf32, #tpu.memory_space<vmem>>, %arg5: memref<8x128x16xf32, #tpu.memory_space<vmem>>, %arg6: memref<8x128x16xf32, #tpu.memory_space<vmem>>, %arg7: memref<8x16x128xf32, #tpu.memory_space<vmem>>, %arg8: memref<1x128xf32, #tpu.memory_space<vmem>>, %arg9: memref<1x16x128xf32, #tpu.memory_space<vmem>>) attributes {dimension_semantics = [#tpu.dimension_semantics<parallel>], iteration_bounds = array<i64: 2>, scalar_prefetch = 0 : i64, scratch_operands = 0 : i64, tpu.core_type = #tpu.core_type<tc>, window_params = [{transform_indices = @transform_0, window_bounds = array<i64: 1, 16, 128>}, {transform_indices = @transform_1, window_bounds = array<i64: 1, 16, 128>}, {pipeline_mode = #tpu.pipeline_mode<synchronous>, transform_indices = @transform_2, window_bounds = array<i64: 16, 16>}, {pipeline_mode = #tpu.pipeline_mode<synchronous>, transform_indices = @transform_3, window_bounds = array<i64: 8, 128, 16>}, {pipeline_mode = #tpu.pipeline_mode<synchronous>, transform_indices = @transform_4, window_bounds = array<i64: 8, 128, 16>}, {pipeline_mode = #tpu.pipeline_mode<synchronous>, transform_indices = @transform_5, window_bounds = array<i64: 8, 128, 16>}, {pipeline_mode = #tpu.pipeline_mode<synchronous>, transform_indices = @transform_6, window_bounds = array<i64: 8, 16, 128>}, {pipeline_mode = #tpu.pipeline_mode<synchronous>, transform_indices = @transform_7, window_bounds = array<i64: 1, 128>}, {transform_indices = @transform_8, window_bounds = array<i64: 1, 16, 128>}]} {
    %c0 = arith.constant 0 : index
    %c0_0 = arith.constant 0 : index
    %c0_1 = arith.constant 0 : index
    %0 = vector.load %arg1[%c0, %c0_0, %c0_1] : memref<1x16x128xf32, #tpu.memory_space<vmem>>, vector<1x16x128xf32>
    %1 = vector.shape_cast %0 : vector<1x16x128xf32> to vector<16x128xf32>
    %2 = arith.truncf %1 : vector<16x128xf32> to vector<16x128xbf16>
    %c0_2 = arith.constant 0 : index
    %c0_3 = arith.constant 0 : index
    %c0_4 = arith.constant 0 : index
    %3 = vector.load %arg2[%c0_2, %c0_3, %c0_4] : memref<1x16x128xf32, #tpu.memory_space<vmem>>, vector<1x16x128xf32>
    %4 = vector.shape_cast %3 : vector<1x16x128xf32> to vector<16x128xf32>
    %5 = arith.truncf %4 : vector<16x128xf32> to vector<16x128xbf16>
    %c0_5 = arith.constant 0 : index
    %c0_6 = arith.constant 0 : index
    %6 = vector.load %arg3[%c0_5, %c0_6] : memref<16x16xf32, #tpu.memory_space<vmem>>, vector<16x16xf32>
    %cst = arith.constant 0.000000e+00 : f32
    %7 = vector.broadcast %cst : f32 to vector<16x128xf32>
    %c0_7 = arith.constant 0 : index
    %c0_8 = arith.constant 0 : index
    %c0_9 = arith.constant 0 : index
    %8 = vector.load %arg4[%c0_7, %c0_8, %c0_9] : memref<8x128x16xf32, #tpu.memory_space<vmem>>, vector<1x128x16xf32>
    %9 = vector.shape_cast %8 : vector<1x128x16xf32> to vector<128x16xf32>
    %10 = arith.truncf %9 : vector<128x16xf32> to vector<128x16xbf16>
    %cst_10 = arith.constant dense<0.000000e+00> : vector<16x16xf32>
    %11 = tpu.matmul %2, %10, %cst_10 {dimension_numbers = #tpu.dot_dimension_numbers<[1], [0], [0], [1], [0, 0, 1, 1], [], []>} : vector<16x128xbf16>, vector<128x16xbf16>, vector<16x16xf32> -> vector<16x16xf32>
    %c0_11 = arith.constant 0 : index
    %c0_12 = arith.constant 0 : index
    %c0_13 = arith.constant 0 : index
    %12 = vector.load %arg5[%c0_11, %c0_12, %c0_13] : memref<8x128x16xf32, #tpu.memory_space<vmem>>, vector<1x128x16xf32>
    %13 = vector.shape_cast %12 : vector<1x128x16xf32> to vector<128x16xf32>
    %14 = arith.truncf %13 : vector<128x16xf32> to vector<128x16xbf16>
    %cst_14 = arith.constant dense<0.000000e+00> : vector<16x16xf32>
    %15 = tpu.matmul %5, %14, %cst_14 {dimension_numbers = #tpu.dot_dimension_numbers<[1], [0], [0], [1], [0, 0, 1, 1], [], []>} : vector<16x128xbf16>, vector<128x16xbf16>, vector<16x16xf32> -> vector<16x16xf32>
    %c0_15 = arith.constant 0 : index
    %c0_16 = arith.constant 0 : index
    %c0_17 = arith.constant 0 : index
    %16 = vector.load %arg6[%c0_15, %c0_16, %c0_17] : memref<8x128x16xf32, #tpu.memory_space<vmem>>, vector<1x128x16xf32>
    %17 = vector.shape_cast %16 : vector<1x128x16xf32> to vector<128x16xf32>
    %18 = arith.truncf %17 : vector<128x16xf32> to vector<128x16xbf16>
    %cst_18 = arith.constant dense<0.000000e+00> : vector<16x16xf32>
    %19 = tpu.matmul %5, %18, %cst_18 {dimension_numbers = #tpu.dot_dimension_numbers<[1], [0], [0], [1], [0, 0, 1, 1], [], []>} : vector<16x128xbf16>, vector<128x16xbf16>, vector<16x16xf32> -> vector<16x16xf32>
    %20 = arith.truncf %11 : vector<16x16xf32> to vector<16x16xbf16>
    %21 = arith.truncf %15 : vector<16x16xf32> to vector<16x16xbf16>
    %cst_19 = arith.constant dense<0.000000e+00> : vector<16x16xf32>
    %22 = tpu.matmul %20, %21, %cst_19 {dimension_numbers = #tpu.dot_dimension_numbers<[1], [1], [0], [0], [0, 0, 1, 0], [], []>} : vector<16x16xbf16>, vector<16x16xbf16>, vector<16x16xf32> -> vector<16x16xf32>
    %cst_20 = arith.constant 2.500000e-01 : f32
    %23 = vector.broadcast %cst_20 : f32 to vector<16x16xf32>
    %24 = arith.mulf %22, %23 : vector<16x16xf32>
    %25 = arith.addf %24, %6 : vector<16x16xf32>
    %cst_21 = arith.constant dense<0xFF800000> : vector<16xf32>
    %26 = vector.multi_reduction <maximumf>, %25, %cst_21 [1] : vector<16x16xf32> to vector<16xf32>
    %27 = vector.shape_cast %26 : vector<16xf32> to vector<16x1xf32>
    %28 = vector.broadcast %27 : vector<16x1xf32> to vector<16x16xf32>
    %29 = arith.subf %25, %28 : vector<16x16xf32>
    %30 = math.exp %29 : vector<16x16xf32>
    %cst_22 = arith.constant dense<0.000000e+00> : vector<16xf32>
    %31 = vector.multi_reduction <add>, %30, %cst_22 [1] : vector<16x16xf32> to vector<16xf32>
    %32 = vector.shape_cast %31 : vector<16xf32> to vector<16x1xf32>
    %33 = tpu.reciprocal %32 {approx = true} : vector<16x1xf32> -> vector<16x1xf32>
    %34 = vector.broadcast %33 : vector<16x1xf32> to vector<16x16xf32>
    %35 = arith.mulf %30, %34 : vector<16x16xf32>
    %36 = arith.truncf %35 : vector<16x16xf32> to vector<16x16xbf16>
    %37 = arith.truncf %19 : vector<16x16xf32> to vector<16x16xbf16>
    %cst_23 = arith.constant dense<0.000000e+00> : vector<16x16xf32>
    %38 = tpu.matmul %36, %37, %cst_23 {dimension_numbers = #tpu.dot_dimension_numbers<[1], [0], [0], [1], [0, 0, 1, 1], [], []>} : vector<16x16xbf16>, vector<16x16xbf16>, vector<16x16xf32> -> vector<16x16xf32>
    %39 = arith.truncf %38 : vector<16x16xf32> to vector<16x16xbf16>
    %c0_24 = arith.constant 0 : index
    %c0_25 = arith.constant 0 : index
    %c0_26 = arith.constant 0 : index
    %40 = vector.load %arg7[%c0_24, %c0_25, %c0_26] : memref<8x16x128xf32, #tpu.memory_space<vmem>>, vector<1x16x128xf32>
    %41 = vector.shape_cast %40 : vector<1x16x128xf32> to vector<16x128xf32>
    %42 = arith.truncf %41 : vector<16x128xf32> to vector<16x128xbf16>
    %cst_27 = arith.constant dense<0.000000e+00> : vector<16x128xf32>
    %43 = tpu.matmul %39, %42, %cst_27 {dimension_numbers = #tpu.dot_dimension_numbers<[1], [0], [0], [1], [0, 0, 1, 1], [], []>} : vector<16x16xbf16>, vector<16x128xbf16>, vector<16x128xf32> -> vector<16x128xf32>
    %44 = arith.addf %7, %43 : vector<16x128xf32>
    %c1 = arith.constant 1 : index
    %c0_28 = arith.constant 0 : index
    %c0_29 = arith.constant 0 : index
    %45 = vector.load %arg4[%c1, %c0_28, %c0_29] : memref<8x128x16xf32, #tpu.memory_space<vmem>>, vector<1x128x16xf32>
    %46 = vector.shape_cast %45 : vector<1x128x16xf32> to vector<128x16xf32>
    %47 = arith.truncf %46 : vector<128x16xf32> to vector<128x16xbf16>
    %cst_30 = arith.constant dense<0.000000e+00> : vector<16x16xf32>
    %48 = tpu.matmul %2, %47, %cst_30 {dimension_numbers = #tpu.dot_dimension_numbers<[1], [0], [0], [1], [0, 0, 1, 1], [], []>} : vector<16x128xbf16>, vector<128x16xbf16>, vector<16x16xf32> -> vector<16x16xf32>
    %c1_31 = arith.constant 1 : index
    %c0_32 = arith.constant 0 : index
    %c0_33 = arith.constant 0 : index
    %49 = vector.load %arg5[%c1_31, %c0_32, %c0_33] : memref<8x128x16xf32, #tpu.memory_space<vmem>>, vector<1x128x16xf32>
    %50 = vector.shape_cast %49 : vector<1x128x16xf32> to vector<128x16xf32>
    %51 = arith.truncf %50 : vector<128x16xf32> to vector<128x16xbf16>
    %cst_34 = arith.constant dense<0.000000e+00> : vector<16x16xf32>
    %52 = tpu.matmul %5, %51, %cst_34 {dimension_numbers = #tpu.dot_dimension_numbers<[1], [0], [0], [1], [0, 0, 1, 1], [], []>} : vector<16x128xbf16>, vector<128x16xbf16>, vector<16x16xf32> -> vector<16x16xf32>
    %c1_35 = arith.constant 1 : index
    %c0_36 = arith.constant 0 : index
    %c0_37 = arith.constant 0 : index
    %53 = vector.load %arg6[%c1_35, %c0_36, %c0_37] : memref<8x128x16xf32, #tpu.memory_space<vmem>>, vector<1x128x16xf32>
    %54 = vector.shape_cast %53 : vector<1x128x16xf32> to vector<128x16xf32>
    %55 = arith.truncf %54 : vector<128x16xf32> to vector<128x16xbf16>
    %cst_38 = arith.constant dense<0.000000e+00> : vector<16x16xf32>
    %56 = tpu.matmul %5, %55, %cst_38 {dimension_numbers = #tpu.dot_dimension_numbers<[1], [0], [0], [1], [0, 0, 1, 1], [], []>} : vector<16x128xbf16>, vector<128x16xbf16>, vector<16x16xf32> -> vector<16x16xf32>
    %57 = arith.truncf %48 : vector<16x16xf32> to vector<16x16xbf16>
    %58 = arith.truncf %52 : vector<16x16xf32> to vector<16x16xbf16>
    %cst_39 = arith.constant dense<0.000000e+00> : vector<16x16xf32>
    %59 = tpu.matmul %57, %58, %cst_39 {dimension_numbers = #tpu.dot_dimension_numbers<[1], [1], [0], [0], [0, 0, 1, 0], [], []>} : vector<16x16xbf16>, vector<16x16xbf16>, vector<16x16xf32> -> vector<16x16xf32>
    %cst_40 = arith.constant 2.500000e-01 : f32
    %60 = vector.broadcast %cst_40 : f32 to vector<16x16xf32>
    %61 = arith.mulf %59, %60 : vector<16x16xf32>
    %62 = arith.addf %61, %6 : vector<16x16xf32>
    %cst_41 = arith.constant dense<0xFF800000> : vector<16xf32>
    %63 = vector.multi_reduction <maximumf>, %62, %cst_41 [1] : vector<16x16xf32> to vector<16xf32>
    %64 = vector.shape_cast %63 : vector<16xf32> to vector<16x1xf32>
    %65 = vector.broadcast %64 : vector<16x1xf32> to vector<16x16xf32>
    %66 = arith.subf %62, %65 : vector<16x16xf32>
    %67 = math.exp %66 : vector<16x16xf32>
    %cst_42 = arith.constant dense<0.000000e+00> : vector<16xf32>
    %68 = vector.multi_reduction <add>, %67, %cst_42 [1] : vector<16x16xf32> to vector<16xf32>
    %69 = vector.shape_cast %68 : vector<16xf32> to vector<16x1xf32>
    %70 = tpu.reciprocal %69 {approx = true} : vector<16x1xf32> -> vector<16x1xf32>
    %71 = vector.broadcast %70 : vector<16x1xf32> to vector<16x16xf32>
    %72 = arith.mulf %67, %71 : vector<16x16xf32>
    %73 = arith.truncf %72 : vector<16x16xf32> to vector<16x16xbf16>
    %74 = arith.truncf %56 : vector<16x16xf32> to vector<16x16xbf16>
    %cst_43 = arith.constant dense<0.000000e+00> : vector<16x16xf32>
    %75 = tpu.matmul %73, %74, %cst_43 {dimension_numbers = #tpu.dot_dimension_numbers<[1], [0], [0], [1], [0, 0, 1, 1], [], []>} : vector<16x16xbf16>, vector<16x16xbf16>, vector<16x16xf32> -> vector<16x16xf32>
    %76 = arith.truncf %75 : vector<16x16xf32> to vector<16x16xbf16>
    %c1_44 = arith.constant 1 : index
    %c0_45 = arith.constant 0 : index
    %c0_46 = arith.constant 0 : index
    %77 = vector.load %arg7[%c1_44, %c0_45, %c0_46] : memref<8x16x128xf32, #tpu.memory_space<vmem>>, vector<1x16x128xf32>
    %78 = vector.shape_cast %77 : vector<1x16x128xf32> to vector<16x128xf32>
    %79 = arith.truncf %78 : vector<16x128xf32> to vector<16x128xbf16>
    %cst_47 = arith.constant dense<0.000000e+00> : vector<16x128xf32>
    %80 = tpu.matmul %76, %79, %cst_47 {dimension_numbers = #tpu.dot_dimension_numbers<[1], [0], [0], [1], [0, 0, 1, 1], [], []>} : vector<16x16xbf16>, vector<16x128xbf16>, vector<16x128xf32> -> vector<16x128xf32>
    %81 = arith.addf %44, %80 : vector<16x128xf32>
    %c2 = arith.constant 2 : index
    %c0_48 = arith.constant 0 : index
    %c0_49 = arith.constant 0 : index
    %82 = vector.load %arg4[%c2, %c0_48, %c0_49] : memref<8x128x16xf32, #tpu.memory_space<vmem>>, vector<1x128x16xf32>
    %83 = vector.shape_cast %82 : vector<1x128x16xf32> to vector<128x16xf32>
    %84 = arith.truncf %83 : vector<128x16xf32> to vector<128x16xbf16>
    %cst_50 = arith.constant dense<0.000000e+00> : vector<16x16xf32>
    %85 = tpu.matmul %2, %84, %cst_50 {dimension_numbers = #tpu.dot_dimension_numbers<[1], [0], [0], [1], [0, 0, 1, 1], [], []>} : vector<16x128xbf16>, vector<128x16xbf16>, vector<16x16xf32> -> vector<16x16xf32>
    %c2_51 = arith.constant 2 : index
    %c0_52 = arith.constant 0 : index
    %c0_53 = arith.constant 0 : index
    %86 = vector.load %arg5[%c2_51, %c0_52, %c0_53] : memref<8x128x16xf32, #tpu.memory_space<vmem>>, vector<1x128x16xf32>
    %87 = vector.shape_cast %86 : vector<1x128x16xf32> to vector<128x16xf32>
    %88 = arith.truncf %87 : vector<128x16xf32> to vector<128x16xbf16>
    %cst_54 = arith.constant dense<0.000000e+00> : vector<16x16xf32>
    %89 = tpu.matmul %5, %88, %cst_54 {dimension_numbers = #tpu.dot_dimension_numbers<[1], [0], [0], [1], [0, 0, 1, 1], [], []>} : vector<16x128xbf16>, vector<128x16xbf16>, vector<16x16xf32> -> vector<16x16xf32>
    %c2_55 = arith.constant 2 : index
    %c0_56 = arith.constant 0 : index
    %c0_57 = arith.constant 0 : index
    %90 = vector.load %arg6[%c2_55, %c0_56, %c0_57] : memref<8x128x16xf32, #tpu.memory_space<vmem>>, vector<1x128x16xf32>
    %91 = vector.shape_cast %90 : vector<1x128x16xf32> to vector<128x16xf32>
    %92 = arith.truncf %91 : vector<128x16xf32> to vector<128x16xbf16>
    %cst_58 = arith.constant dense<0.000000e+00> : vector<16x16xf32>
    %93 = tpu.matmul %5, %92, %cst_58 {dimension_numbers = #tpu.dot_dimension_numbers<[1], [0], [0], [1], [0, 0, 1, 1], [], []>} : vector<16x128xbf16>, vector<128x16xbf16>, vector<16x16xf32> -> vector<16x16xf32>
    %94 = arith.truncf %85 : vector<16x16xf32> to vector<16x16xbf16>
    %95 = arith.truncf %89 : vector<16x16xf32> to vector<16x16xbf16>
    %cst_59 = arith.constant dense<0.000000e+00> : vector<16x16xf32>
    %96 = tpu.matmul %94, %95, %cst_59 {dimension_numbers = #tpu.dot_dimension_numbers<[1], [1], [0], [0], [0, 0, 1, 0], [], []>} : vector<16x16xbf16>, vector<16x16xbf16>, vector<16x16xf32> -> vector<16x16xf32>
    %cst_60 = arith.constant 2.500000e-01 : f32
    %97 = vector.broadcast %cst_60 : f32 to vector<16x16xf32>
    %98 = arith.mulf %96, %97 : vector<16x16xf32>
    %99 = arith.addf %98, %6 : vector<16x16xf32>
    %cst_61 = arith.constant dense<0xFF800000> : vector<16xf32>
    %100 = vector.multi_reduction <maximumf>, %99, %cst_61 [1] : vector<16x16xf32> to vector<16xf32>
    %101 = vector.shape_cast %100 : vector<16xf32> to vector<16x1xf32>
    %102 = vector.broadcast %101 : vector<16x1xf32> to vector<16x16xf32>
    %103 = arith.subf %99, %102 : vector<16x16xf32>
    %104 = math.exp %103 : vector<16x16xf32>
    %cst_62 = arith.constant dense<0.000000e+00> : vector<16xf32>
    %105 = vector.multi_reduction <add>, %104, %cst_62 [1] : vector<16x16xf32> to vector<16xf32>
    %106 = vector.shape_cast %105 : vector<16xf32> to vector<16x1xf32>
    %107 = tpu.reciprocal %106 {approx = true} : vector<16x1xf32> -> vector<16x1xf32>
    %108 = vector.broadcast %107 : vector<16x1xf32> to vector<16x16xf32>
    %109 = arith.mulf %104, %108 : vector<16x16xf32>
    %110 = arith.truncf %109 : vector<16x16xf32> to vector<16x16xbf16>
    %111 = arith.truncf %93 : vector<16x16xf32> to vector<16x16xbf16>
    %cst_63 = arith.constant dense<0.000000e+00> : vector<16x16xf32>
    %112 = tpu.matmul %110, %111, %cst_63 {dimension_numbers = #tpu.dot_dimension_numbers<[1], [0], [0], [1], [0, 0, 1, 1], [], []>} : vector<16x16xbf16>, vector<16x16xbf16>, vector<16x16xf32> -> vector<16x16xf32>
    %113 = arith.truncf %112 : vector<16x16xf32> to vector<16x16xbf16>
    %c2_64 = arith.constant 2 : index
    %c0_65 = arith.constant 0 : index
    %c0_66 = arith.constant 0 : index
    %114 = vector.load %arg7[%c2_64, %c0_65, %c0_66] : memref<8x16x128xf32, #tpu.memory_space<vmem>>, vector<1x16x128xf32>
    %115 = vector.shape_cast %114 : vector<1x16x128xf32> to vector<16x128xf32>
    %116 = arith.truncf %115 : vector<16x128xf32> to vector<16x128xbf16>
    %cst_67 = arith.constant dense<0.000000e+00> : vector<16x128xf32>
    %117 = tpu.matmul %113, %116, %cst_67 {dimension_numbers = #tpu.dot_dimension_numbers<[1], [0], [0], [1], [0, 0, 1, 1], [], []>} : vector<16x16xbf16>, vector<16x128xbf16>, vector<16x128xf32> -> vector<16x128xf32>
    %118 = arith.addf %81, %117 : vector<16x128xf32>
    %c3 = arith.constant 3 : index
    %c0_68 = arith.constant 0 : index
    %c0_69 = arith.constant 0 : index
    %119 = vector.load %arg4[%c3, %c0_68, %c0_69] : memref<8x128x16xf32, #tpu.memory_space<vmem>>, vector<1x128x16xf32>
    %120 = vector.shape_cast %119 : vector<1x128x16xf32> to vector<128x16xf32>
    %121 = arith.truncf %120 : vector<128x16xf32> to vector<128x16xbf16>
    %cst_70 = arith.constant dense<0.000000e+00> : vector<16x16xf32>
    %122 = tpu.matmul %2, %121, %cst_70 {dimension_numbers = #tpu.dot_dimension_numbers<[1], [0], [0], [1], [0, 0, 1, 1], [], []>} : vector<16x128xbf16>, vector<128x16xbf16>, vector<16x16xf32> -> vector<16x16xf32>
    %c3_71 = arith.constant 3 : index
    %c0_72 = arith.constant 0 : index
    %c0_73 = arith.constant 0 : index
    %123 = vector.load %arg5[%c3_71, %c0_72, %c0_73] : memref<8x128x16xf32, #tpu.memory_space<vmem>>, vector<1x128x16xf32>
    %124 = vector.shape_cast %123 : vector<1x128x16xf32> to vector<128x16xf32>
    %125 = arith.truncf %124 : vector<128x16xf32> to vector<128x16xbf16>
    %cst_74 = arith.constant dense<0.000000e+00> : vector<16x16xf32>
    %126 = tpu.matmul %5, %125, %cst_74 {dimension_numbers = #tpu.dot_dimension_numbers<[1], [0], [0], [1], [0, 0, 1, 1], [], []>} : vector<16x128xbf16>, vector<128x16xbf16>, vector<16x16xf32> -> vector<16x16xf32>
    %c3_75 = arith.constant 3 : index
    %c0_76 = arith.constant 0 : index
    %c0_77 = arith.constant 0 : index
    %127 = vector.load %arg6[%c3_75, %c0_76, %c0_77] : memref<8x128x16xf32, #tpu.memory_space<vmem>>, vector<1x128x16xf32>
    %128 = vector.shape_cast %127 : vector<1x128x16xf32> to vector<128x16xf32>
    %129 = arith.truncf %128 : vector<128x16xf32> to vector<128x16xbf16>
    %cst_78 = arith.constant dense<0.000000e+00> : vector<16x16xf32>
    %130 = tpu.matmul %5, %129, %cst_78 {dimension_numbers = #tpu.dot_dimension_numbers<[1], [0], [0], [1], [0, 0, 1, 1], [], []>} : vector<16x128xbf16>, vector<128x16xbf16>, vector<16x16xf32> -> vector<16x16xf32>
    %131 = arith.truncf %122 : vector<16x16xf32> to vector<16x16xbf16>
    %132 = arith.truncf %126 : vector<16x16xf32> to vector<16x16xbf16>
    %cst_79 = arith.constant dense<0.000000e+00> : vector<16x16xf32>
    %133 = tpu.matmul %131, %132, %cst_79 {dimension_numbers = #tpu.dot_dimension_numbers<[1], [1], [0], [0], [0, 0, 1, 0], [], []>} : vector<16x16xbf16>, vector<16x16xbf16>, vector<16x16xf32> -> vector<16x16xf32>
    %cst_80 = arith.constant 2.500000e-01 : f32
    %134 = vector.broadcast %cst_80 : f32 to vector<16x16xf32>
    %135 = arith.mulf %133, %134 : vector<16x16xf32>
    %136 = arith.addf %135, %6 : vector<16x16xf32>
    %cst_81 = arith.constant dense<0xFF800000> : vector<16xf32>
    %137 = vector.multi_reduction <maximumf>, %136, %cst_81 [1] : vector<16x16xf32> to vector<16xf32>
    %138 = vector.shape_cast %137 : vector<16xf32> to vector<16x1xf32>
    %139 = vector.broadcast %138 : vector<16x1xf32> to vector<16x16xf32>
    %140 = arith.subf %136, %139 : vector<16x16xf32>
    %141 = math.exp %140 : vector<16x16xf32>
    %cst_82 = arith.constant dense<0.000000e+00> : vector<16xf32>
    %142 = vector.multi_reduction <add>, %141, %cst_82 [1] : vector<16x16xf32> to vector<16xf32>
    %143 = vector.shape_cast %142 : vector<16xf32> to vector<16x1xf32>
    %144 = tpu.reciprocal %143 {approx = true} : vector<16x1xf32> -> vector<16x1xf32>
    %145 = vector.broadcast %144 : vector<16x1xf32> to vector<16x16xf32>
    %146 = arith.mulf %141, %145 : vector<16x16xf32>
    %147 = arith.truncf %146 : vector<16x16xf32> to vector<16x16xbf16>
    %148 = arith.truncf %130 : vector<16x16xf32> to vector<16x16xbf16>
    %cst_83 = arith.constant dense<0.000000e+00> : vector<16x16xf32>
    %149 = tpu.matmul %147, %148, %cst_83 {dimension_numbers = #tpu.dot_dimension_numbers<[1], [0], [0], [1], [0, 0, 1, 1], [], []>} : vector<16x16xbf16>, vector<16x16xbf16>, vector<16x16xf32> -> vector<16x16xf32>
    %150 = arith.truncf %149 : vector<16x16xf32> to vector<16x16xbf16>
    %c3_84 = arith.constant 3 : index
    %c0_85 = arith.constant 0 : index
    %c0_86 = arith.constant 0 : index
    %151 = vector.load %arg7[%c3_84, %c0_85, %c0_86] : memref<8x16x128xf32, #tpu.memory_space<vmem>>, vector<1x16x128xf32>
    %152 = vector.shape_cast %151 : vector<1x16x128xf32> to vector<16x128xf32>
    %153 = arith.truncf %152 : vector<16x128xf32> to vector<16x128xbf16>
    %cst_87 = arith.constant dense<0.000000e+00> : vector<16x128xf32>
    %154 = tpu.matmul %150, %153, %cst_87 {dimension_numbers = #tpu.dot_dimension_numbers<[1], [0], [0], [1], [0, 0, 1, 1], [], []>} : vector<16x16xbf16>, vector<16x128xbf16>, vector<16x128xf32> -> vector<16x128xf32>
    %155 = arith.addf %118, %154 : vector<16x128xf32>
    %c4 = arith.constant 4 : index
    %c0_88 = arith.constant 0 : index
    %c0_89 = arith.constant 0 : index
    %156 = vector.load %arg4[%c4, %c0_88, %c0_89] : memref<8x128x16xf32, #tpu.memory_space<vmem>>, vector<1x128x16xf32>
    %157 = vector.shape_cast %156 : vector<1x128x16xf32> to vector<128x16xf32>
    %158 = arith.truncf %157 : vector<128x16xf32> to vector<128x16xbf16>
    %cst_90 = arith.constant dense<0.000000e+00> : vector<16x16xf32>
    %159 = tpu.matmul %2, %158, %cst_90 {dimension_numbers = #tpu.dot_dimension_numbers<[1], [0], [0], [1], [0, 0, 1, 1], [], []>} : vector<16x128xbf16>, vector<128x16xbf16>, vector<16x16xf32> -> vector<16x16xf32>
    %c4_91 = arith.constant 4 : index
    %c0_92 = arith.constant 0 : index
    %c0_93 = arith.constant 0 : index
    %160 = vector.load %arg5[%c4_91, %c0_92, %c0_93] : memref<8x128x16xf32, #tpu.memory_space<vmem>>, vector<1x128x16xf32>
    %161 = vector.shape_cast %160 : vector<1x128x16xf32> to vector<128x16xf32>
    %162 = arith.truncf %161 : vector<128x16xf32> to vector<128x16xbf16>
    %cst_94 = arith.constant dense<0.000000e+00> : vector<16x16xf32>
    %163 = tpu.matmul %5, %162, %cst_94 {dimension_numbers = #tpu.dot_dimension_numbers<[1], [0], [0], [1], [0, 0, 1, 1], [], []>} : vector<16x128xbf16>, vector<128x16xbf16>, vector<16x16xf32> -> vector<16x16xf32>
    %c4_95 = arith.constant 4 : index
    %c0_96 = arith.constant 0 : index
    %c0_97 = arith.constant 0 : index
    %164 = vector.load %arg6[%c4_95, %c0_96, %c0_97] : memref<8x128x16xf32, #tpu.memory_space<vmem>>, vector<1x128x16xf32>
    %165 = vector.shape_cast %164 : vector<1x128x16xf32> to vector<128x16xf32>
    %166 = arith.truncf %165 : vector<128x16xf32> to vector<128x16xbf16>
    %cst_98 = arith.constant dense<0.000000e+00> : vector<16x16xf32>
    %167 = tpu.matmul %5, %166, %cst_98 {dimension_numbers = #tpu.dot_dimension_numbers<[1], [0], [0], [1], [0, 0, 1, 1], [], []>} : vector<16x128xbf16>, vector<128x16xbf16>, vector<16x16xf32> -> vector<16x16xf32>
    %168 = arith.truncf %159 : vector<16x16xf32> to vector<16x16xbf16>
    %169 = arith.truncf %163 : vector<16x16xf32> to vector<16x16xbf16>
    %cst_99 = arith.constant dense<0.000000e+00> : vector<16x16xf32>
    %170 = tpu.matmul %168, %169, %cst_99 {dimension_numbers = #tpu.dot_dimension_numbers<[1], [1], [0], [0], [0, 0, 1, 0], [], []>} : vector<16x16xbf16>, vector<16x16xbf16>, vector<16x16xf32> -> vector<16x16xf32>
    %cst_100 = arith.constant 2.500000e-01 : f32
    %171 = vector.broadcast %cst_100 : f32 to vector<16x16xf32>
    %172 = arith.mulf %170, %171 : vector<16x16xf32>
    %173 = arith.addf %172, %6 : vector<16x16xf32>
    %cst_101 = arith.constant dense<0xFF800000> : vector<16xf32>
    %174 = vector.multi_reduction <maximumf>, %173, %cst_101 [1] : vector<16x16xf32> to vector<16xf32>
    %175 = vector.shape_cast %174 : vector<16xf32> to vector<16x1xf32>
    %176 = vector.broadcast %175 : vector<16x1xf32> to vector<16x16xf32>
    %177 = arith.subf %173, %176 : vector<16x16xf32>
    %178 = math.exp %177 : vector<16x16xf32>
    %cst_102 = arith.constant dense<0.000000e+00> : vector<16xf32>
    %179 = vector.multi_reduction <add>, %178, %cst_102 [1] : vector<16x16xf32> to vector<16xf32>
    %180 = vector.shape_cast %179 : vector<16xf32> to vector<16x1xf32>
    %181 = tpu.reciprocal %180 {approx = true} : vector<16x1xf32> -> vector<16x1xf32>
    %182 = vector.broadcast %181 : vector<16x1xf32> to vector<16x16xf32>
    %183 = arith.mulf %178, %182 : vector<16x16xf32>
    %184 = arith.truncf %183 : vector<16x16xf32> to vector<16x16xbf16>
    %185 = arith.truncf %167 : vector<16x16xf32> to vector<16x16xbf16>
    %cst_103 = arith.constant dense<0.000000e+00> : vector<16x16xf32>
    %186 = tpu.matmul %184, %185, %cst_103 {dimension_numbers = #tpu.dot_dimension_numbers<[1], [0], [0], [1], [0, 0, 1, 1], [], []>} : vector<16x16xbf16>, vector<16x16xbf16>, vector<16x16xf32> -> vector<16x16xf32>
    %187 = arith.truncf %186 : vector<16x16xf32> to vector<16x16xbf16>
    %c4_104 = arith.constant 4 : index
    %c0_105 = arith.constant 0 : index
    %c0_106 = arith.constant 0 : index
    %188 = vector.load %arg7[%c4_104, %c0_105, %c0_106] : memref<8x16x128xf32, #tpu.memory_space<vmem>>, vector<1x16x128xf32>
    %189 = vector.shape_cast %188 : vector<1x16x128xf32> to vector<16x128xf32>
    %190 = arith.truncf %189 : vector<16x128xf32> to vector<16x128xbf16>
    %cst_107 = arith.constant dense<0.000000e+00> : vector<16x128xf32>
    %191 = tpu.matmul %187, %190, %cst_107 {dimension_numbers = #tpu.dot_dimension_numbers<[1], [0], [0], [1], [0, 0, 1, 1], [], []>} : vector<16x16xbf16>, vector<16x128xbf16>, vector<16x128xf32> -> vector<16x128xf32>
    %192 = arith.addf %155, %191 : vector<16x128xf32>
    %c5 = arith.constant 5 : index
    %c0_108 = arith.constant 0 : index
    %c0_109 = arith.constant 0 : index
    %193 = vector.load %arg4[%c5, %c0_108, %c0_109] : memref<8x128x16xf32, #tpu.memory_space<vmem>>, vector<1x128x16xf32>
    %194 = vector.shape_cast %193 : vector<1x128x16xf32> to vector<128x16xf32>
    %195 = arith.truncf %194 : vector<128x16xf32> to vector<128x16xbf16>
    %cst_110 = arith.constant dense<0.000000e+00> : vector<16x16xf32>
    %196 = tpu.matmul %2, %195, %cst_110 {dimension_numbers = #tpu.dot_dimension_numbers<[1], [0], [0], [1], [0, 0, 1, 1], [], []>} : vector<16x128xbf16>, vector<128x16xbf16>, vector<16x16xf32> -> vector<16x16xf32>
    %c5_111 = arith.constant 5 : index
    %c0_112 = arith.constant 0 : index
    %c0_113 = arith.constant 0 : index
    %197 = vector.load %arg5[%c5_111, %c0_112, %c0_113] : memref<8x128x16xf32, #tpu.memory_space<vmem>>, vector<1x128x16xf32>
    %198 = vector.shape_cast %197 : vector<1x128x16xf32> to vector<128x16xf32>
    %199 = arith.truncf %198 : vector<128x16xf32> to vector<128x16xbf16>
    %cst_114 = arith.constant dense<0.000000e+00> : vector<16x16xf32>
    %200 = tpu.matmul %5, %199, %cst_114 {dimension_numbers = #tpu.dot_dimension_numbers<[1], [0], [0], [1], [0, 0, 1, 1], [], []>} : vector<16x128xbf16>, vector<128x16xbf16>, vector<16x16xf32> -> vector<16x16xf32>
    %c5_115 = arith.constant 5 : index
    %c0_116 = arith.constant 0 : index
    %c0_117 = arith.constant 0 : index
    %201 = vector.load %arg6[%c5_115, %c0_116, %c0_117] : memref<8x128x16xf32, #tpu.memory_space<vmem>>, vector<1x128x16xf32>
    %202 = vector.shape_cast %201 : vector<1x128x16xf32> to vector<128x16xf32>
    %203 = arith.truncf %202 : vector<128x16xf32> to vector<128x16xbf16>
    %cst_118 = arith.constant dense<0.000000e+00> : vector<16x16xf32>
    %204 = tpu.matmul %5, %203, %cst_118 {dimension_numbers = #tpu.dot_dimension_numbers<[1], [0], [0], [1], [0, 0, 1, 1], [], []>} : vector<16x128xbf16>, vector<128x16xbf16>, vector<16x16xf32> -> vector<16x16xf32>
    %205 = arith.truncf %196 : vector<16x16xf32> to vector<16x16xbf16>
    %206 = arith.truncf %200 : vector<16x16xf32> to vector<16x16xbf16>
    %cst_119 = arith.constant dense<0.000000e+00> : vector<16x16xf32>
    %207 = tpu.matmul %205, %206, %cst_119 {dimension_numbers = #tpu.dot_dimension_numbers<[1], [1], [0], [0], [0, 0, 1, 0], [], []>} : vector<16x16xbf16>, vector<16x16xbf16>, vector<16x16xf32> -> vector<16x16xf32>
    %cst_120 = arith.constant 2.500000e-01 : f32
    %208 = vector.broadcast %cst_120 : f32 to vector<16x16xf32>
    %209 = arith.mulf %207, %208 : vector<16x16xf32>
    %210 = arith.addf %209, %6 : vector<16x16xf32>
    %cst_121 = arith.constant dense<0xFF800000> : vector<16xf32>
    %211 = vector.multi_reduction <maximumf>, %210, %cst_121 [1] : vector<16x16xf32> to vector<16xf32>
    %212 = vector.shape_cast %211 : vector<16xf32> to vector<16x1xf32>
    %213 = vector.broadcast %212 : vector<16x1xf32> to vector<16x16xf32>
    %214 = arith.subf %210, %213 : vector<16x16xf32>
    %215 = math.exp %214 : vector<16x16xf32>
    %cst_122 = arith.constant dense<0.000000e+00> : vector<16xf32>
    %216 = vector.multi_reduction <add>, %215, %cst_122 [1] : vector<16x16xf32> to vector<16xf32>
    %217 = vector.shape_cast %216 : vector<16xf32> to vector<16x1xf32>
    %218 = tpu.reciprocal %217 {approx = true} : vector<16x1xf32> -> vector<16x1xf32>
    %219 = vector.broadcast %218 : vector<16x1xf32> to vector<16x16xf32>
    %220 = arith.mulf %215, %219 : vector<16x16xf32>
    %221 = arith.truncf %220 : vector<16x16xf32> to vector<16x16xbf16>
    %222 = arith.truncf %204 : vector<16x16xf32> to vector<16x16xbf16>
    %cst_123 = arith.constant dense<0.000000e+00> : vector<16x16xf32>
    %223 = tpu.matmul %221, %222, %cst_123 {dimension_numbers = #tpu.dot_dimension_numbers<[1], [0], [0], [1], [0, 0, 1, 1], [], []>} : vector<16x16xbf16>, vector<16x16xbf16>, vector<16x16xf32> -> vector<16x16xf32>
    %224 = arith.truncf %223 : vector<16x16xf32> to vector<16x16xbf16>
    %c5_124 = arith.constant 5 : index
    %c0_125 = arith.constant 0 : index
    %c0_126 = arith.constant 0 : index
    %225 = vector.load %arg7[%c5_124, %c0_125, %c0_126] : memref<8x16x128xf32, #tpu.memory_space<vmem>>, vector<1x16x128xf32>
    %226 = vector.shape_cast %225 : vector<1x16x128xf32> to vector<16x128xf32>
    %227 = arith.truncf %226 : vector<16x128xf32> to vector<16x128xbf16>
    %cst_127 = arith.constant dense<0.000000e+00> : vector<16x128xf32>
    %228 = tpu.matmul %224, %227, %cst_127 {dimension_numbers = #tpu.dot_dimension_numbers<[1], [0], [0], [1], [0, 0, 1, 1], [], []>} : vector<16x16xbf16>, vector<16x128xbf16>, vector<16x128xf32> -> vector<16x128xf32>
    %229 = arith.addf %192, %228 : vector<16x128xf32>
    %c6 = arith.constant 6 : index
    %c0_128 = arith.constant 0 : index
    %c0_129 = arith.constant 0 : index
    %230 = vector.load %arg4[%c6, %c0_128, %c0_129] : memref<8x128x16xf32, #tpu.memory_space<vmem>>, vector<1x128x16xf32>
    %231 = vector.shape_cast %230 : vector<1x128x16xf32> to vector<128x16xf32>
    %232 = arith.truncf %231 : vector<128x16xf32> to vector<128x16xbf16>
    %cst_130 = arith.constant dense<0.000000e+00> : vector<16x16xf32>
    %233 = tpu.matmul %2, %232, %cst_130 {dimension_numbers = #tpu.dot_dimension_numbers<[1], [0], [0], [1], [0, 0, 1, 1], [], []>} : vector<16x128xbf16>, vector<128x16xbf16>, vector<16x16xf32> -> vector<16x16xf32>
    %c6_131 = arith.constant 6 : index
    %c0_132 = arith.constant 0 : index
    %c0_133 = arith.constant 0 : index
    %234 = vector.load %arg5[%c6_131, %c0_132, %c0_133] : memref<8x128x16xf32, #tpu.memory_space<vmem>>, vector<1x128x16xf32>
    %235 = vector.shape_cast %234 : vector<1x128x16xf32> to vector<128x16xf32>
    %236 = arith.truncf %235 : vector<128x16xf32> to vector<128x16xbf16>
    %cst_134 = arith.constant dense<0.000000e+00> : vector<16x16xf32>
    %237 = tpu.matmul %5, %236, %cst_134 {dimension_numbers = #tpu.dot_dimension_numbers<[1], [0], [0], [1], [0, 0, 1, 1], [], []>} : vector<16x128xbf16>, vector<128x16xbf16>, vector<16x16xf32> -> vector<16x16xf32>
    %c6_135 = arith.constant 6 : index
    %c0_136 = arith.constant 0 : index
    %c0_137 = arith.constant 0 : index
    %238 = vector.load %arg6[%c6_135, %c0_136, %c0_137] : memref<8x128x16xf32, #tpu.memory_space<vmem>>, vector<1x128x16xf32>
    %239 = vector.shape_cast %238 : vector<1x128x16xf32> to vector<128x16xf32>
    %240 = arith.truncf %239 : vector<128x16xf32> to vector<128x16xbf16>
    %cst_138 = arith.constant dense<0.000000e+00> : vector<16x16xf32>
    %241 = tpu.matmul %5, %240, %cst_138 {dimension_numbers = #tpu.dot_dimension_numbers<[1], [0], [0], [1], [0, 0, 1, 1], [], []>} : vector<16x128xbf16>, vector<128x16xbf16>, vector<16x16xf32> -> vector<16x16xf32>
    %242 = arith.truncf %233 : vector<16x16xf32> to vector<16x16xbf16>
    %243 = arith.truncf %237 : vector<16x16xf32> to vector<16x16xbf16>
    %cst_139 = arith.constant dense<0.000000e+00> : vector<16x16xf32>
    %244 = tpu.matmul %242, %243, %cst_139 {dimension_numbers = #tpu.dot_dimension_numbers<[1], [1], [0], [0], [0, 0, 1, 0], [], []>} : vector<16x16xbf16>, vector<16x16xbf16>, vector<16x16xf32> -> vector<16x16xf32>
    %cst_140 = arith.constant 2.500000e-01 : f32
    %245 = vector.broadcast %cst_140 : f32 to vector<16x16xf32>
    %246 = arith.mulf %244, %245 : vector<16x16xf32>
    %247 = arith.addf %246, %6 : vector<16x16xf32>
    %cst_141 = arith.constant dense<0xFF800000> : vector<16xf32>
    %248 = vector.multi_reduction <maximumf>, %247, %cst_141 [1] : vector<16x16xf32> to vector<16xf32>
    %249 = vector.shape_cast %248 : vector<16xf32> to vector<16x1xf32>
    %250 = vector.broadcast %249 : vector<16x1xf32> to vector<16x16xf32>
    %251 = arith.subf %247, %250 : vector<16x16xf32>
    %252 = math.exp %251 : vector<16x16xf32>
    %cst_142 = arith.constant dense<0.000000e+00> : vector<16xf32>
    %253 = vector.multi_reduction <add>, %252, %cst_142 [1] : vector<16x16xf32> to vector<16xf32>
    %254 = vector.shape_cast %253 : vector<16xf32> to vector<16x1xf32>
    %255 = tpu.reciprocal %254 {approx = true} : vector<16x1xf32> -> vector<16x1xf32>
    %256 = vector.broadcast %255 : vector<16x1xf32> to vector<16x16xf32>
    %257 = arith.mulf %252, %256 : vector<16x16xf32>
    %258 = arith.truncf %257 : vector<16x16xf32> to vector<16x16xbf16>
    %259 = arith.truncf %241 : vector<16x16xf32> to vector<16x16xbf16>
    %cst_143 = arith.constant dense<0.000000e+00> : vector<16x16xf32>
    %260 = tpu.matmul %258, %259, %cst_143 {dimension_numbers = #tpu.dot_dimension_numbers<[1], [0], [0], [1], [0, 0, 1, 1], [], []>} : vector<16x16xbf16>, vector<16x16xbf16>, vector<16x16xf32> -> vector<16x16xf32>
    %261 = arith.truncf %260 : vector<16x16xf32> to vector<16x16xbf16>
    %c6_144 = arith.constant 6 : index
    %c0_145 = arith.constant 0 : index
    %c0_146 = arith.constant 0 : index
    %262 = vector.load %arg7[%c6_144, %c0_145, %c0_146] : memref<8x16x128xf32, #tpu.memory_space<vmem>>, vector<1x16x128xf32>
    %263 = vector.shape_cast %262 : vector<1x16x128xf32> to vector<16x128xf32>
    %264 = arith.truncf %263 : vector<16x128xf32> to vector<16x128xbf16>
    %cst_147 = arith.constant dense<0.000000e+00> : vector<16x128xf32>
    %265 = tpu.matmul %261, %264, %cst_147 {dimension_numbers = #tpu.dot_dimension_numbers<[1], [0], [0], [1], [0, 0, 1, 1], [], []>} : vector<16x16xbf16>, vector<16x128xbf16>, vector<16x128xf32> -> vector<16x128xf32>
    %266 = arith.addf %229, %265 : vector<16x128xf32>
    %c7 = arith.constant 7 : index
    %c0_148 = arith.constant 0 : index
    %c0_149 = arith.constant 0 : index
    %267 = vector.load %arg4[%c7, %c0_148, %c0_149] : memref<8x128x16xf32, #tpu.memory_space<vmem>>, vector<1x128x16xf32>
    %268 = vector.shape_cast %267 : vector<1x128x16xf32> to vector<128x16xf32>
    %269 = arith.truncf %268 : vector<128x16xf32> to vector<128x16xbf16>
    %cst_150 = arith.constant dense<0.000000e+00> : vector<16x16xf32>
    %270 = tpu.matmul %2, %269, %cst_150 {dimension_numbers = #tpu.dot_dimension_numbers<[1], [0], [0], [1], [0, 0, 1, 1], [], []>} : vector<16x128xbf16>, vector<128x16xbf16>, vector<16x16xf32> -> vector<16x16xf32>
    %c7_151 = arith.constant 7 : index
    %c0_152 = arith.constant 0 : index
    %c0_153 = arith.constant 0 : index
    %271 = vector.load %arg5[%c7_151, %c0_152, %c0_153] : memref<8x128x16xf32, #tpu.memory_space<vmem>>, vector<1x128x16xf32>
    %272 = vector.shape_cast %271 : vector<1x128x16xf32> to vector<128x16xf32>
    %273 = arith.truncf %272 : vector<128x16xf32> to vector<128x16xbf16>
    %cst_154 = arith.constant dense<0.000000e+00> : vector<16x16xf32>
    %274 = tpu.matmul %5, %273, %cst_154 {dimension_numbers = #tpu.dot_dimension_numbers<[1], [0], [0], [1], [0, 0, 1, 1], [], []>} : vector<16x128xbf16>, vector<128x16xbf16>, vector<16x16xf32> -> vector<16x16xf32>
    %c7_155 = arith.constant 7 : index
    %c0_156 = arith.constant 0 : index
    %c0_157 = arith.constant 0 : index
    %275 = vector.load %arg6[%c7_155, %c0_156, %c0_157] : memref<8x128x16xf32, #tpu.memory_space<vmem>>, vector<1x128x16xf32>
    %276 = vector.shape_cast %275 : vector<1x128x16xf32> to vector<128x16xf32>
    %277 = arith.truncf %276 : vector<128x16xf32> to vector<128x16xbf16>
    %cst_158 = arith.constant dense<0.000000e+00> : vector<16x16xf32>
    %278 = tpu.matmul %5, %277, %cst_158 {dimension_numbers = #tpu.dot_dimension_numbers<[1], [0], [0], [1], [0, 0, 1, 1], [], []>} : vector<16x128xbf16>, vector<128x16xbf16>, vector<16x16xf32> -> vector<16x16xf32>
    %279 = arith.truncf %270 : vector<16x16xf32> to vector<16x16xbf16>
    %280 = arith.truncf %274 : vector<16x16xf32> to vector<16x16xbf16>
    %cst_159 = arith.constant dense<0.000000e+00> : vector<16x16xf32>
    %281 = tpu.matmul %279, %280, %cst_159 {dimension_numbers = #tpu.dot_dimension_numbers<[1], [1], [0], [0], [0, 0, 1, 0], [], []>} : vector<16x16xbf16>, vector<16x16xbf16>, vector<16x16xf32> -> vector<16x16xf32>
    %cst_160 = arith.constant 2.500000e-01 : f32
    %282 = vector.broadcast %cst_160 : f32 to vector<16x16xf32>
    %283 = arith.mulf %281, %282 : vector<16x16xf32>
    %284 = arith.addf %283, %6 : vector<16x16xf32>
    %cst_161 = arith.constant dense<0xFF800000> : vector<16xf32>
    %285 = vector.multi_reduction <maximumf>, %284, %cst_161 [1] : vector<16x16xf32> to vector<16xf32>
    %286 = vector.shape_cast %285 : vector<16xf32> to vector<16x1xf32>
    %287 = vector.broadcast %286 : vector<16x1xf32> to vector<16x16xf32>
    %288 = arith.subf %284, %287 : vector<16x16xf32>
    %289 = math.exp %288 : vector<16x16xf32>
    %cst_162 = arith.constant dense<0.000000e+00> : vector<16xf32>
    %290 = vector.multi_reduction <add>, %289, %cst_162 [1] : vector<16x16xf32> to vector<16xf32>
    %291 = vector.shape_cast %290 : vector<16xf32> to vector<16x1xf32>
    %292 = tpu.reciprocal %291 {approx = true} : vector<16x1xf32> -> vector<16x1xf32>
    %293 = vector.broadcast %292 : vector<16x1xf32> to vector<16x16xf32>
    %294 = arith.mulf %289, %293 : vector<16x16xf32>
    %295 = arith.truncf %294 : vector<16x16xf32> to vector<16x16xbf16>
    %296 = arith.truncf %278 : vector<16x16xf32> to vector<16x16xbf16>
    %cst_163 = arith.constant dense<0.000000e+00> : vector<16x16xf32>
    %297 = tpu.matmul %295, %296, %cst_163 {dimension_numbers = #tpu.dot_dimension_numbers<[1], [0], [0], [1], [0, 0, 1, 1], [], []>} : vector<16x16xbf16>, vector<16x16xbf16>, vector<16x16xf32> -> vector<16x16xf32>
    %298 = arith.truncf %297 : vector<16x16xf32> to vector<16x16xbf16>
    %c7_164 = arith.constant 7 : index
    %c0_165 = arith.constant 0 : index
    %c0_166 = arith.constant 0 : index
    %299 = vector.load %arg7[%c7_164, %c0_165, %c0_166] : memref<8x16x128xf32, #tpu.memory_space<vmem>>, vector<1x16x128xf32>
    %300 = vector.shape_cast %299 : vector<1x16x128xf32> to vector<16x128xf32>
    %301 = arith.truncf %300 : vector<16x128xf32> to vector<16x128xbf16>
    %cst_167 = arith.constant dense<0.000000e+00> : vector<16x128xf32>
    %302 = tpu.matmul %298, %301, %cst_167 {dimension_numbers = #tpu.dot_dimension_numbers<[1], [0], [0], [1], [0, 0, 1, 1], [], []>} : vector<16x16xbf16>, vector<16x128xbf16>, vector<16x128xf32> -> vector<16x128xf32>
    %303 = arith.addf %266, %302 : vector<16x128xf32>
    %c0_168 = arith.constant 0 : index
    %c0_169 = arith.constant 0 : index
    %304 = vector.load %arg8[%c0_168, %c0_169] : memref<1x128xf32, #tpu.memory_space<vmem>>, vector<1x128xf32>
    %305 = vector.broadcast %304 : vector<1x128xf32> to vector<16x128xf32>
    %306 = arith.addf %303, %305 : vector<16x128xf32>
    %c0_170 = arith.constant 0 : index
    %c0_171 = arith.constant 0 : index
    %c0_172 = arith.constant 0 : index
    %307 = vector.load %arg9[%c0_170, %c0_171, %c0_172] : memref<1x16x128xf32, #tpu.memory_space<vmem>>, vector<1x16x128xf32>
    %308 = vector.shape_cast %307 : vector<1x16x128xf32> to vector<16x128xf32>
    %309 = vector.shape_cast %306 : vector<16x128xf32> to vector<1x16x128xf32>
    tpu.vector_store %arg9[%c0_170, %c0_171, %c0_172], %309 {strides = array<i32>} : memref<1x16x128xf32, #tpu.memory_space<vmem>>, vector<1x16x128xf32>,
    return
  }
  func.func @transform_0(%arg0: i32) -> (i32, i32, i32) {
    %c0_i32 = arith.constant 0 : i32
    %c0_i32_0 = arith.constant 0 : i32
    %c0_i32_1 = arith.constant 0 : i32
    return %arg0, %c0_i32, %c0_i32_0 : i32, i32, i32
  }
  func.func @transform_1(%arg0: i32) -> (i32, i32, i32) {
    %c0_i32 = arith.constant 0 : i32
    %c0_i32_0 = arith.constant 0 : i32
    %c0_i32_1 = arith.constant 0 : i32
    return %arg0, %c0_i32, %c0_i32_0 : i32, i32, i32
  }
  func.func @transform_2(%arg0: i32) -> (i32, i32) {
    %c0_i32 = arith.constant 0 : i32
    %c0_i32_0 = arith.constant 0 : i32
    %c0_i32_1 = arith.constant 0 : i32
    return %c0_i32, %c0_i32_0 : i32, i32
  }
  func.func @transform_3(%arg0: i32) -> (i32, i32, i32) {
    %c0_i32 = arith.constant 0 : i32
    %c0_i32_0 = arith.constant 0 : i32
    %c0_i32_1 = arith.constant 0 : i32
    %c0_i32_2 = arith.constant 0 : i32
    return %c0_i32, %c0_i32_0, %c0_i32_1 : i32, i32, i32
  }
  func.func @transform_4(%arg0: i32) -> (i32, i32, i32) {
    %c0_i32 = arith.constant 0 : i32
    %c0_i32_0 = arith.constant 0 : i32
    %c0_i32_1 = arith.constant 0 : i32
    %c0_i32_2 = arith.constant 0 : i32
    return %c0_i32, %c0_i32_0, %c0_i32_1 : i32, i32, i32
  }
  func.func @transform_5(%arg0: i32) -> (i32, i32, i32) {
    %c0_i32 = arith.constant 0 : i32
    %c0_i32_0 = arith.constant 0 : i32
    %c0_i32_1 = arith.constant 0 : i32
    %c0_i32_2 = arith.constant 0 : i32
    return %c0_i32, %c0_i32_0, %c0_i32_1 : i32, i32, i32
  }
  func.func @transform_6(%arg0: i32) -> (i32, i32, i32) {
    %c0_i32 = arith.constant 0 : i32
    %c0_i32_0 = arith.constant 0 : i32
    %c0_i32_1 = arith.constant 0 : i32
    %c0_i32_2 = arith.constant 0 : i32
    return %c0_i32, %c0_i32_0, %c0_i32_1 : i32, i32, i32
  }
  func.func @transform_7(%arg0: i32) -> (i32, i32) {
    %c0_i32 = arith.constant 0 : i32
    %c0_i32_0 = arith.constant 0 : i32
    %c0_i32_1 = arith.constant 0 : i32
    return %c0_i32, %c0_i32_0 : i32, i32
  }
  func.func @transform_8(%arg0: i32) -> (i32, i32, i32) {
    %c0_i32 = arith.constant 0 : i32
    %c0_i32_0 = arith.constant 0 : i32
    %c0_i32_1 = arith.constant 0 : i32
    return %arg0, %c0_i32, %c0_i32_0 : i32, i32, i32
  }
}

</mosaic_0001>

<llo_original>
// kernel: forward.1
$region0: #{forward.1}
  #allocation0 [shape = 'u32[]', space=smem, size = 0x4, offset = 0x4, fixed_abs, tag = 'smem constant byte address 0x4 - core index']
  #allocation1 [shape = 'u32[144,128]{1,0:T(1,128)}', space=vmem, size = 0x12000, scoped, tag = 'internal scratch']
  %s0 = inlined_call_operand.vmem [shape: f32[2,16,128], index: 0, kind: input, shape index: {}]
  %s1 = inlined_call_operand.vmem [shape: f32[2,16,128], index: 1, kind: input, shape index: {}]
  %s2 = inlined_call_operand.vmem [shape: f32[16,16], index: 2, kind: input, shape index: {}]
  %s3 = inlined_call_operand.vmem [shape: f32[8,128,16], index: 3, kind: input, shape index: {}]
  %s4 = inlined_call_operand.vmem [shape: f32[8,128,16], index: 4, kind: input, shape index: {}]
  %s5 = inlined_call_operand.vmem [shape: f32[8,128,16], index: 5, kind: input, shape index: {}]
  %s6 = inlined_call_operand.vmem [shape: f32[8,16,128], index: 6, kind: input, shape index: {}]
  %s7 = inlined_call_operand.vmem [shape: f32[1,128], index: 7, kind: input, shape index: {}]
  %s8 = inlined_call_operand.hbm [shape: f32[2,16,128], index: 8, kind: output, shape index: {}]
  %s9 = sld [smem:[#allocation0]]
  $region65: #{forward.1} parent=0
    _
  %s11 = ssub.s32 1, %s9
  %s12 = scalar_select 0, %s11, %s9
  $region1: #{forward.1} parent=0
    #allocation2 [shape = 'u8[16384]{0}', space=vmem, size = 0x4000, scoped, tag = 'output window, operand 0']
    #allocation3 [shape = 's32[2]{0}', space=sflag, size = 0x8, scoped, tag = 'scoped memory for forward.1']
    %13 = vsyncpa [#allocation3], 0
    %s14 = scalar_lea.sflag [#allocation3], 1
    %15 = vsyncpa %s14, 0
    loop: start=0, step=1, limit=4
    $region2: #{forward.1} parent=1 // loop_pre_header
      _
    $region3: #{forward.1} parent=1 // loop_header
      %s17 = sphi 0, %s21
      %p18 = scmp.ge.s32.totalorder %s17, 4
      %s27 = sphi 0, %s29
      %s30 = sphi 0, %s27
      %s31 = sphi 0, %s30
      %s47 = sphi 0, %s31
      %s53 = sphi 0, %s55
      %s56 = sphi 0, %s53
      %s57 = sphi 0, %s56
      %s73 = sphi 0, %s57
      %s77 = sphi 0, %s77
      %s79 = sphi 0, %s77
      %s80 = sphi 0, %s79
      %s94 = sphi 0, %s80
      %s98 = sphi 0, %s98
      %s100 = sphi 0, %s98
      %s101 = sphi 0, %s100
      %s115 = sphi 0, %s101
      %s119 = sphi 0, %s119
      %s121 = sphi 0, %s119
      %s122 = sphi 0, %s121
      %s136 = sphi 0, %s122
      %s140 = sphi 0, %s140
      %s142 = sphi 0, %s140
      %s143 = sphi 0, %s142
      %s157 = sphi 0, %s143
      %s161 = sphi 0, %s161
      %s163 = sphi 0, %s161
      %s164 = sphi 0, %s163
      %s178 = sphi 0, %s164
      %s182 = sphi 0, %s182
      %s184 = sphi 0, %s182
      %s185 = sphi 0, %s184
      %s199 = sphi 0, %s185
      %s205 = sphi 0, %s207
      %s208 = sphi 0, %s205
      %s209 = sphi 0, %s208
      %s225 = sphi 0, %s209
    $region4: #{forward.1} parent=1 // loop_header_branch
      %20 = sbr.rel (%p18) target = $region8
    $region5: #{forward.1} parent=1 // loop_body
      %s22 = ssub.s32 %s17, 1
      %s23 = ssub.s32 %s17, 2
      %s24 = sadd.s32 %s17, 1
      %s25 = ssub.s32 %s17, %s24
      %p26 = scmp.eq.s32.totalorder %s25, 0
      %s28 = sadd.s32 %s27, 1
      %s29 = scalar_select %p26, %s27, %s28
      %p32 = pneg %p26
      %p33 = scmp.eq.s32.totalorder %s17, 1
      %p34 = por %p32, %p33
      %p35 = scmp.ne.s32.totalorder %s27, %s30
      %p36 = scmp.eq.s32.totalorder %s17, 0
      %p37 = por %p35, %p36
      %p38 = scmp.ne.s32.totalorder %s27, %s30
      %p39 = scmp.eq.s32.totalorder %s22, 1
      %p40 = por %p38, %p39
      %p41 = scmp.ne.s32.totalorder %s30, %s31
      %p42 = scmp.eq.s32.totalorder %s22, 0
      %p43 = por %p41, %p42
      %p44 = scmp.ne.s32.totalorder %s30, %s31
      %p45 = scmp.eq.s32.totalorder %s23, 1
      %p46 = por %p44, %p45
      %p48 = scmp.ne.s32.totalorder %s31, %s47
      %p49 = scmp.eq.s32.totalorder %s23, 0
      %p50 = por %p48, %p49
      %s51 = ssub.s32 %s17, %s24
      %p52 = scmp.eq.s32.totalorder %s51, 0
      %s54 = sadd.s32 %s53, 1
      %s55 = scalar_select %p52, %s53, %s54
      %p58 = pneg %p52
      %p59 = scmp.eq.s32.totalorder %s17, 1
      %p60 = por %p58, %p59
      %p61 = scmp.ne.s32.totalorder %s53, %s56
      %p62 = scmp.eq.s32.totalorder %s17, 0
      %p63 = por %p61, %p62
      %p64 = scmp.ne.s32.totalorder %s53, %s56
      %p65 = scmp.eq.s32.totalorder %s22, 1
      %p66 = por %p64, %p65
      %p67 = scmp.ne.s32.totalorder %s56, %s57
      %p68 = scmp.eq.s32.totalorder %s22, 0
      %p69 = por %p67, %p68
      %p70 = scmp.ne.s32.totalorder %s56, %s57
      %p71 = scmp.eq.s32.totalorder %s23, 1
      %p72 = por %p70, %p71
      %p74 = scmp.ne.s32.totalorder %s57, %s73
      %p75 = scmp.eq.s32.totalorder %s23, 0
      %p76 = por %p74, %p75
      %s78 = sadd.s32 %s77, 1
      %p81 = scmp.eq.s32.totalorder %s17, 1
      %p82 = scmp.ne.s32.totalorder %s77, %s79
      %p83 = scmp.eq.s32.totalorder %s17, 0
      %p84 = por %p82, %p83
      %p85 = scmp.ne.s32.totalorder %s77, %s79
      %p86 = scmp.eq.s32.totalorder %s22, 1
      %p87 = por %p85, %p86
      %p88 = scmp.ne.s32.totalorder %s79, %s80
      %p89 = scmp.eq.s32.totalorder %s22, 0
      %p90 = por %p88, %p89
      %p91 = scmp.ne.s32.totalorder %s79, %s80
      %p92 = scmp.eq.s32.totalorder %s23, 1
      %p93 = por %p91, %p92
      %p95 = scmp.ne.s32.totalorder %s80, %s94
      %p96 = scmp.eq.s32.totalorder %s23, 0
      %p97 = por %p95, %p96
      %s99 = sadd.s32 %s98, 1
      %p102 = scmp.eq.s32.totalorder %s17, 1
      %p103 = scmp.ne.s32.totalorder %s98, %s100
      %p104 = scmp.eq.s32.totalorder %s17, 0
      %p105 = por %p103, %p104
      %p106 = scmp.ne.s32.totalorder %s98, %s100
      %p107 = scmp.eq.s32.totalorder %s22, 1
      %p108 = por %p106, %p107
      %p109 = scmp.ne.s32.totalorder %s100, %s101
      %p110 = scmp.eq.s32.totalorder %s22, 0
      %p111 = por %p109, %p110
      %p112 = scmp.ne.s32.totalorder %s100, %s101
      %p113 = scmp.eq.s32.totalorder %s23, 1
      %p114 = por %p112, %p113
      %p116 = scmp.ne.s32.totalorder %s101, %s115
      %p117 = scmp.eq.s32.totalorder %s23, 0
      %p118 = por %p116, %p117
      %s120 = sadd.s32 %s119, 1
      %p123 = scmp.eq.s32.totalorder %s17, 1
      %p124 = scmp.ne.s32.totalorder %s119, %s121
      %p125 = scmp.eq.s32.totalorder %s17, 0
      %p126 = por %p124, %p125
      %p127 = scmp.ne.s32.totalorder %s119, %s121
      %p128 = scmp.eq.s32.totalorder %s22, 1
      %p129 = por %p127, %p128
      %p130 = scmp.ne.s32.totalorder %s121, %s122
      %p131 = scmp.eq.s32.totalorder %s22, 0
      %p132 = por %p130, %p131
      %p133 = scmp.ne.s32.totalorder %s121, %s122
      %p134 = scmp.eq.s32.totalorder %s23, 1
      %p135 = por %p133, %p134
      %p137 = scmp.ne.s32.totalorder %s122, %s136
      %p138 = scmp.eq.s32.totalorder %s23, 0
      %p139 = por %p137, %p138
      %s141 = sadd.s32 %s140, 1
      %p144 = scmp.eq.s32.totalorder %s17, 1
      %p145 = scmp.ne.s32.totalorder %s140, %s142
      %p146 = scmp.eq.s32.totalorder %s17, 0
      %p147 = por %p145, %p146
      %p148 = scmp.ne.s32.totalorder %s140, %s142
      %p149 = scmp.eq.s32.totalorder %s22, 1
      %p150 = por %p148, %p149
      %p151 = scmp.ne.s32.totalorder %s142, %s143
      %p152 = scmp.eq.s32.totalorder %s22, 0
      %p153 = por %p151, %p152
      %p154 = scmp.ne.s32.totalorder %s142, %s143
      %p155 = scmp.eq.s32.totalorder %s23, 1
      %p156 = por %p154, %p155
      %p158 = scmp.ne.s32.totalorder %s143, %s157
      %p159 = scmp.eq.s32.totalorder %s23, 0
      %p160 = por %p158, %p159
      %s162 = sadd.s32 %s161, 1
      %p165 = scmp.eq.s32.totalorder %s17, 1
      %p166 = scmp.ne.s32.totalorder %s161, %s163
      %p167 = scmp.eq.s32.totalorder %s17, 0
      %p168 = por %p166, %p167
      %p169 = scmp.ne.s32.totalorder %s161, %s163
      %p170 = scmp.eq.s32.totalorder %s22, 1
      %p171 = por %p169, %p170
      %p172 = scmp.ne.s32.totalorder %s163, %s164
      %p173 = scmp.eq.s32.totalorder %s22, 0
      %p174 = por %p172, %p173
      %p175 = scmp.ne.s32.totalorder %s163, %s164
      %p176 = scmp.eq.s32.totalorder %s23, 1
      %p177 = por %p175, %p176
      %p179 = scmp.ne.s32.totalorder %s164, %s178
      %p180 = scmp.eq.s32.totalorder %s23, 0
      %p181 = por %p179, %p180
      %s183 = sadd.s32 %s182, 1
      %p186 = scmp.eq.s32.totalorder %s17, 1
      %p187 = scmp.ne.s32.totalorder %s182, %s184
      %p188 = scmp.eq.s32.totalorder %s17, 0
      %p189 = por %p187, %p188
      %p190 = scmp.ne.s32.totalorder %s182, %s184
      %p191 = scmp.eq.s32.totalorder %s22, 1
      %p192 = por %p190, %p191
      %p193 = scmp.ne.s32.totalorder %s184, %s185
      %p194 = scmp.eq.s32.totalorder %s22, 0
      %p195 = por %p193, %p194
      %p196 = scmp.ne.s32.totalorder %s184, %s185
      %p197 = scmp.eq.s32.totalorder %s23, 1
      %p198 = por %p196, %p197
      %p200 = scmp.ne.s32.totalorder %s185, %s199
      %p201 = scmp.eq.s32.totalorder %s23, 0
      %p202 = por %p200, %p201
      %s203 = ssub.s32 %s17, %s24
      %p204 = scmp.eq.s32.totalorder %s203, 0
      %s206 = sadd.s32 %s205, 1
      %s207 = scalar_select %p204, %s205, %s206
      %p210 = pneg %p204
      %p211 = scmp.eq.s32.totalorder %s17, 1
      %p212 = por %p210, %p211
      %p213 = scmp.ne.s32.totalorder %s205, %s208
      %p214 = scmp.eq.s32.totalorder %s17, 0
      %p215 = por %p213, %p214
      %p216 = scmp.ne.s32.totalorder %s205, %s208
      %p217 = scmp.eq.s32.totalorder %s22, 1
      %p218 = por %p216, %p217
      %p219 = scmp.ne.s32.totalorder %s208, %s209
      %p220 = scmp.eq.s32.totalorder %s22, 0
      %p221 = por %p219, %p220
      %p222 = scmp.ne.s32.totalorder %s208, %s209
      %p223 = scmp.eq.s32.totalorder %s23, 1
      %p224 = por %p222, %p223
      %p226 = scmp.ne.s32.totalorder %s209, %s225
      %p227 = scmp.eq.s32.totalorder %s23, 0
      %p228 = por %p226, %p227
      %p229 = scmp.le.s32.totalorder 1, %s17
      %p230 = scmp.lt.s32.totalorder %s17, 3
      %p231 = pnand %p229, %p230
      %p232 = pneg %p231
      // Predicated region
      $region9: #{forward.1} parent=5 // pred_check
        _
      $region10: #{forward.1} parent=5 // pred_check_branch
        %234 = sbr.rel (%p231) target = $region12
      $region11: #{forward.1} parent=5 // pred_region
        %s235 = ssub.s32 %s17, 1
        // Predicated region
        $region13: #{forward.1} parent=11 // pred_check
          %p236 = pneg %p90
        $region14: #{forward.1} parent=11 // pred_check_branch
          %238 = sbr.rel (%p236) target = $region16
        $region15: #{forward.1} parent=11 // pred_region
          _
        $region16: #{forward.1} parent=11 // pred_fallthru
          _
        // Predicated region
        $region17: #{forward.1} parent=11 // pred_check
          %p239 = pneg %p111
        $region18: #{forward.1} parent=11 // pred_check_branch
          %241 = sbr.rel (%p239) target = $region20
        $region19: #{forward.1} parent=11 // pred_region
          _
        $region20: #{forward.1} parent=11 // pred_fallthru
          _
        // Predicated region
        $region21: #{forward.1} parent=11 // pred_check
          %p242 = pneg %p132
        $region22: #{forward.1} parent=11 // pred_check_branch
          %244 = sbr.rel (%p242) target = $region24
        $region23: #{forward.1} parent=11 // pred_region
          _
        $region24: #{forward.1} parent=11 // pred_fallthru
          _
        // Predicated region
        $region25: #{forward.1} parent=11 // pred_check
          %p245 = pneg %p153
        $region26: #{forward.1} parent=11 // pred_check_branch
          %247 = sbr.rel (%p245) target = $region28
        $region27: #{forward.1} parent=11 // pred_region
          _
        $region28: #{forward.1} parent=11 // pred_fallthru
          _
        // Predicated region
        $region29: #{forward.1} parent=11 // pred_check
          %p248 = pneg %p174
        $region30: #{forward.1} parent=11 // pred_check_branch
          %250 = sbr.rel (%p248) target = $region32
        $region31: #{forward.1} parent=11 // pred_region
          _
        $region32: #{forward.1} parent=11 // pred_fallthru
          _
        // Predicated region
        $region33: #{forward.1} parent=11 // pred_check
          %p251 = pneg %p195
        $region34: #{forward.1} parent=11 // pred_check_branch
          %253 = sbr.rel (%p251) target = $region36
        $region35: #{forward.1} parent=11 // pred_region
          _
        $region36: #{forward.1} parent=11 // pred_fallthru
          _
      $region12: #{forward.1} parent=5 // pred_fallthru
        _
      %p254 = scmp.lt.s32.totalorder %s17, 2
      // Predicated region
      $region37: #{forward.1} parent=5 // pred_check
        %p255 = pneg %p254
      $region38: #{forward.1} parent=5 // pred_check_branch
        %257 = sbr.rel (%p255) target = $region40
      $region39: #{forward.1} parent=5 // pred_region
        // Predicated region
        $region41: #{forward.1} parent=39 // pred_check
          %p258 = pneg %p37
        $region42: #{forward.1} parent=39 // pred_check_branch
          %260 = sbr.rel (%p258) target = $region44
        $region43: #{forward.1} parent=39 // pred_region
          %p261 = scmp.lt.s32.totalorder %s17, 1
          %s262 = scalar_select %p261, %s17, 1
          %s263 = smul.addr %s262, 2
          %s264 = smul.addr %s263, 8
          %s265 = scalar_lea.vmem %s0, %s264
        $region44: #{forward.1} parent=39 // pred_fallthru
          _
        // Predicated region
        $region45: #{forward.1} parent=39 // pred_check
          %p266 = pneg %p63
        $region46: #{forward.1} parent=39 // pred_check_branch
          %268 = sbr.rel (%p266) target = $region48
        $region47: #{forward.1} parent=39 // pred_region
          %p269 = scmp.lt.s32.totalorder %s17, 1
          %s270 = scalar_select %p269, %s17, 1
          %s271 = smul.addr %s270, 2
          %s272 = smul.addr %s271, 8
          %s273 = scalar_lea.vmem %s1, %s272
        $region48: #{forward.1} parent=39 // pred_fallthru
          _
      $region40: #{forward.1} parent=5 // pred_fallthru
        _
      %p274 = scmp.le.s32.totalorder 1, %s17
      %p275 = scmp.lt.s32.totalorder %s17, 3
      %p276 = pnand %p274, %p275
      %p277 = pneg %p276
      // Predicated region
      $region49: #{forward.1} parent=5 // pred_check
        _
      $region50: #{forward.1} parent=5 // pred_check_branch
        %279 = sbr.rel (%p276) target = $region52
      $region51: #{forward.1} parent=5 // pred_region
        %s280 = ssub.s32 %s17, 1
        %p281 = scmp.lt.s32.totalorder %s22, 1
        %s282 = scalar_select %p281, %s22, 1
        %s283 = smul.addr %s282, 2
        %s284 = smul.addr %s283, 8
        %s285 = scalar_lea.vmem %s0, %s284
        %p286 = pneg %p43
        %p287 = pneg %p40
        %p288 = scmp.lt.s32.totalorder %s22, 1
        %s289 = scalar_select %p288, %s22, 1
        %s290 = smul.addr %s289, 2
        %s291 = smul.addr %s290, 8
        %s292 = scalar_lea.vmem %s1, %s291
        %p293 = pneg %p69
        %p294 = pneg %p66
        %p295 = pneg %p90
        %p296 = pneg %p87
        %p297 = pneg %p111
        %p298 = pneg %p108
        %p299 = pneg %p132
        %p300 = pneg %p129
        %p301 = pneg %p153
        %p302 = pneg %p150
        %p303 = pneg %p174
        %p304 = pneg %p171
        %p305 = pneg %p195
        %p306 = pneg %p192
        %p307 = pneg %p221
        %p308 = pneg %p218
        %s309 = sand.u32 %s208, 1
        %s310 = scalar_lea.sflag [#allocation3], %s309
        %s311 = sand.u32 %s208, 1
        %s312 = smul.addr %s311, 16
        %s313 = scalar_lea.vmem [#allocation2], %s312
        %p314 = scmp.lt.s32.totalorder %s22, 1
        %s315 = scalar_select %p314, %s22, 1
        %s316 = smul.addr %s315, 2
        %s317 = smul.addr %s316, 8
        %s318 = scalar_lea.vmem %s0, %s317
        %p319 = scmp.lt.s32.totalorder %s22, 1
        %s320 = scalar_select %p319, %s22, 1
        %s321 = smul.addr %s320, 2
        %s322 = smul.addr %s321, 8
        %s323 = scalar_lea.vmem %s1, %s322
        %v325 = vld [vmem:[%s318] sm:$0xff]
        %v326 = vld [vmem:[%s318 + $0x8] sm:$0xff]
        %v327 = vpack.c.bf16 %v326, %v325
        %v328 = vld [vmem:[%s323] sm:$0xff]
        %v329 = vld [vmem:[%s323 + $0x8] sm:$0xff]
        %v330 = vpack.c.bf16 %v329, %v328
        %v331 = vld [vmem:[%s2] sm:$0xff]
        %v332 = vld [vmem:[%s2 + $0x8] sm:$0xff]
        %v333 = vld [vmem:[%s3] sm:$0xff]
        %v334 = vld [vmem:[%s3 + $0x8] sm:$0xff]
        %v335 = vld [vmem:[%s3 + $0x10] sm:$0xff]
        %v336 = vld [vmem:[%s3 + $0x18] sm:$0xff]
        %v337 = vld [vmem:[%s3 + $0x20] sm:$0xff]
        %v338 = vld [vmem:[%s3 + $0x28] sm:$0xff]
        %v339 = vld [vmem:[%s3 + $0x30] sm:$0xff]
        %v340 = vld [vmem:[%s3 + $0x38] sm:$0xff]
        %v341 = vld [vmem:[%s3 + $0x40] sm:$0xff]
        %v342 = vld [vmem:[%s3 + $0x48] sm:$0xff]
        %v343 = vld [vmem:[%s3 + $0x50] sm:$0xff]
        %v344 = vld [vmem:[%s3 + $0x58] sm:$0xff]
        %v345 = vld [vmem:[%s3 + $0x60] sm:$0xff]
        %v346 = vld [vmem:[%s3 + $0x68] sm:$0xff]
        %v347 = vld [vmem:[%s3 + $0x70] sm:$0xff]
        %v348 = vld [vmem:[%s3 + $0x78] sm:$0xff]
        %v349 = vpack.c.bf16 %v334, %v333
        %v350 = vpack.c.bf16 %v336, %v335
        %v351 = vpack.c.bf16 %v338, %v337
        %v352 = vpack.c.bf16 %v340, %v339
        %v353 = vpack.c.bf16 %v342, %v341
        %v354 = vpack.c.bf16 %v344, %v343
        %v355 = vpack.c.bf16 %v346, %v345
        %v356 = vpack.c.bf16 %v348, %v347
        %357 = vmatprep.subr.bf16.mxu0 0
        %358 = vmatpush1.bf16.msra.mxu0 %v349
        %359 = vmatprep.subr.bf16.mxu0 0
        %360 = vmatpush1.bf16.msra.mxu0 %v350
        %361 = vmatprep.subr.bf16.mxu0 0
        %362 = vmatpush1.bf16.msra.mxu0 %v351
        %363 = vmatprep.subr.bf16.mxu0 0
        %364 = vmatpush1.bf16.msra.mxu0 %v352
        %365 = vmatprep.subr.bf16.mxu0 0
        %366 = vmatpush1.bf16.msra.mxu0 %v353
        %367 = vmatprep.subr.bf16.mxu0 0
        %368 = vmatpush1.bf16.msra.mxu0 %v354
        %369 = vmatprep.subr.bf16.mxu0 0
        %370 = vmatpush1.bf16.msra.mxu0 %v355
        %371 = vmatprep.subr.bf16.mxu0 0
        %372 = vmatpush1.bf16.msra.mxu0 %v356
        %373 = vmatprep.subr.bf16.mxu0 0
        %374 = vmatpush1.bf16.msra.mxu0 0
        %375 = vmatprep.subr.bf16.mxu0 0
        %376 = vmatpush1.bf16.msra.mxu0 0
        %377 = vmatprep.subr.bf16.mxu0 0
        %378 = vmatpush1.bf16.msra.mxu0 0
        %379 = vmatprep.subr.bf16.mxu0 0
        %380 = vmatpush1.bf16.msra.mxu0 0
        %381 = vmatprep.subr.bf16.mxu0 0
        %382 = vmatpush1.bf16.msra.mxu0 0
        %383 = vmatprep.subr.bf16.mxu0 0
        %384 = vmatpush1.bf16.msra.mxu0 0
        %385 = vmatprep.subr.bf16.mxu0 0
        %386 = vmatpush1.bf16.msra.mxu0 0
        %387 = vmatprep.subr.bf16.mxu0 0
        %388 = vmatpush1.bf16.msra.mxu0 0
        %389 = vmatprep.mubr.bf16.mxu0 0
        %390 = vmatmul.mubr.bf16.gmra.mrb[0].mxu0 %v327
        %v391 = vpop.f32.mrb[0].mxu0
        %v392 = vadd.f32 0.0, %v391
        %v393 = vpop.f32.mrb[0].mxu0
        %v394 = vpop.f32.mrb[0].mxu0
        %v395 = vadd.f32 0.0, %v394
        %v396 = vpop.f32.mrb[0].mxu0
        %397 = vdwg.mxu0
        %v398 = vld [vmem:[%s4] sm:$0xff]
        %v399 = vld [vmem:[%s4 + $0x8] sm:$0xff]
        %v400 = vld [vmem:[%s4 + $0x10] sm:$0xff]
        %v401 = vld [vmem:[%s4 + $0x18] sm:$0xff]
        %v402 = vld [vmem:[%s4 + $0x20] sm:$0xff]
        %v403 = vld [vmem:[%s4 + $0x28] sm:$0xff]
        %v404 = vld [vmem:[%s4 + $0x30] sm:$0xff]
        %v405 = vld [vmem:[%s4 + $0x38] sm:$0xff]
        %v406 = vld [vmem:[%s4 + $0x40] sm:$0xff]
        %v407 = vld [vmem:[%s4 + $0x48] sm:$0xff]
        %v408 = vld [vmem:[%s4 + $0x50] sm:$0xff]
        %v409 = vld [vmem:[%s4 + $0x58] sm:$0xff]
        %v410 = vld [vmem:[%s4 + $0x60] sm:$0xff]
        %v411 = vld [vmem:[%s4 + $0x68] sm:$0xff]
        %v412 = vld [vmem:[%s4 + $0x70] sm:$0xff]
        %v413 = vld [vmem:[%s4 + $0x78] sm:$0xff]
        %v414 = vpack.c.bf16 %v399, %v398
        %v415 = vpack.c.bf16 %v401, %v400
        %v416 = vpack.c.bf16 %v403, %v402
        %v417 = vpack.c.bf16 %v405, %v404
        %v418 = vpack.c.bf16 %v407, %v406
        %v419 = vpack.c.bf16 %v409, %v408
        %v420 = vpack.c.bf16 %v411, %v410
        %v421 = vpack.c.bf16 %v413, %v412
        %422 = vmatprep.subr.bf16.mxu0 0
        %423 = vmatpush1.bf16.msra.mxu0 %v414
        %424 = vmatprep.subr.bf16.mxu0 0
        %425 = vmatpush1.bf16.msra.mxu0 %v415
        %426 = vmatprep.subr.bf16.mxu0 0
        %427 = vmatpush1.bf16.msra.mxu0 %v416
        %428 = vmatprep.subr.bf16.mxu0 0
        %429 = vmatpush1.bf16.msra.mxu0 %v417
        %430 = vmatprep.subr.bf16.mxu0 0
        %431 = vmatpush1.bf16.msra.mxu0 %v418
        %432 = vmatprep.subr.bf16.mxu0 0
        %433 = vmatpush1.bf16.msra.mxu0 %v419
        %434 = vmatprep.subr.bf16.mxu0 0
        %435 = vmatpush1.bf16.msra.mxu0 %v420
        %436 = vmatprep.subr.bf16.mxu0 0
        %437 = vmatpush1.bf16.msra.mxu0 %v421
        %438 = vmatprep.subr.bf16.mxu0 0
        %439 = vmatpush1.bf16.msra.mxu0 0
        %440 = vmatprep.subr.bf16.mxu0 0
        %441 = vmatpush1.bf16.msra.mxu0 0
        %442 = vmatprep.subr.bf16.mxu0 0
        %443 = vmatpush1.bf16.msra.mxu0 0
        %444 = vmatprep.subr.bf16.mxu0 0
        %445 = vmatpush1.bf16.msra.mxu0 0
        %446 = vmatprep.subr.bf16.mxu0 0
        %447 = vmatpush1.bf16.msra.mxu0 0
        %448 = vmatprep.subr.bf16.mxu0 0
        %449 = vmatpush1.bf16.msra.mxu0 0
        %450 = vmatprep.subr.bf16.mxu0 0
        %451 = vmatpush1.bf16.msra.mxu0 0
        %452 = vmatprep.subr.bf16.mxu0 0
        %453 = vmatpush1.bf16.msra.mxu0 0
        %454 = vmatprep.mubr.bf16.mxu0 0
        %455 = vmatmul.mubr.bf16.gmra.mrb[0].mxu0 %v330
        %v456 = vpop.f32.mrb[0].mxu0
        %v457 = vadd.f32 0.0, %v456
        %v458 = vpop.f32.mrb[0].mxu0
        %v459 = vpop.f32.mrb[0].mxu0
        %v460 = vadd.f32 0.0, %v459
        %v461 = vpop.f32.mrb[0].mxu0
        %462 = vdwg.mxu0
        %v463 = vld [vmem:[%s5] sm:$0xff]
        %v464 = vld [vmem:[%s5 + $0x8] sm:$0xff]
        %v465 = vld [vmem:[%s5 + $0x10] sm:$0xff]
        %v466 = vld [vmem:[%s5 + $0x18] sm:$0xff]
        %v467 = vld [vmem:[%s5 + $0x20] sm:$0xff]
        %v468 = vld [vmem:[%s5 + $0x28] sm:$0xff]
        %v469 = vld [vmem:[%s5 + $0x30] sm:$0xff]
        %v470 = vld [vmem:[%s5 + $0x38] sm:$0xff]
        %v471 = vld [vmem:[%s5 + $0x40] sm:$0xff]
        %v472 = vld [vmem:[%s5 + $0x48] sm:$0xff]
        %v473 = vld [vmem:[%s5 + $0x50] sm:$0xff]
        %v474 = vld [vmem:[%s5 + $0x58] sm:$0xff]
        %v475 = vld [vmem:[%s5 + $0x60] sm:$0xff]
        %v476 = vld [vmem:[%s5 + $0x68] sm:$0xff]
        %v477 = vld [vmem:[%s5 + $0x70] sm:$0xff]
        %v478 = vld [vmem:[%s5 + $0x78] sm:$0xff]
        %v479 = vpack.c.bf16 %v464, %v463
        %v480 = vpack.c.bf16 %v466, %v465
        %v481 = vpack.c.bf16 %v468, %v467
        %v482 = vpack.c.bf16 %v470, %v469
        %v483 = vpack.c.bf16 %v472, %v471
        %v484 = vpack.c.bf16 %v474, %v473
        %v485 = vpack.c.bf16 %v476, %v475
        %v486 = vpack.c.bf16 %v478, %v477
        %487 = vmatprep.subr.bf16.mxu0 0
        %488 = vmatpush1.bf16.msra.mxu0 %v479
        %489 = vmatprep.subr.bf16.mxu0 0
        %490 = vmatpush1.bf16.msra.mxu0 %v480
        %491 = vmatprep.subr.bf16.mxu0 0
        %492 = vmatpush1.bf16.msra.mxu0 %v481
        %493 = vmatprep.subr.bf16.mxu0 0
        %494 = vmatpush1.bf16.msra.mxu0 %v482
        %495 = vmatprep.subr.bf16.mxu0 0
        %496 = vmatpush1.bf16.msra.mxu0 %v483
        %497 = vmatprep.subr.bf16.mxu0 0
        %498 = vmatpush1.bf16.msra.mxu0 %v484
        %499 = vmatprep.subr.bf16.mxu0 0
        %500 = vmatpush1.bf16.msra.mxu0 %v485
        %501 = vmatprep.subr.bf16.mxu0 0
        %502 = vmatpush1.bf16.msra.mxu0 %v486
        %503 = vmatprep.subr.bf16.mxu0 0
        %504 = vmatpush1.bf16.msra.mxu0 0
        %505 = vmatprep.subr.bf16.mxu0 0
        %506 = vmatpush1.bf16.msra.mxu0 0
        %507 = vmatprep.subr.bf16.mxu0 0
        %508 = vmatpush1.bf16.msra.mxu0 0
        %509 = vmatprep.subr.bf16.mxu0 0
        %510 = vmatpush1.bf16.msra.mxu0 0
        %511 = vmatprep.subr.bf16.mxu0 0
        %512 = vmatpush1.bf16.msra.mxu0 0
        %513 = vmatprep.subr.bf16.mxu0 0
        %514 = vmatpush1.bf16.msra.mxu0 0
        %515 = vmatprep.subr.bf16.mxu0 0
        %516 = vmatpush1.bf16.msra.mxu0 0
        %517 = vmatprep.subr.bf16.mxu0 0
        %518 = vmatpush1.bf16.msra.mxu0 0
        %519 = vmatprep.mubr.bf16.mxu0 0
        %520 = vmatmul.mubr.bf16.gmra.mrb[0].mxu0 %v330
        %v521 = vpop.f32.mrb[0].mxu0
        %v522 = vadd.f32 0.0, %v521
        %v523 = vpop.f32.mrb[0].mxu0
        %v524 = vpop.f32.mrb[0].mxu0
        %v525 = vadd.f32 0.0, %v524
        %v526 = vpop.f32.mrb[0].mxu0
        %527 = vdwg.mxu0
        %v528 = vpack.c.bf16 %v395, %v392
        %v529 = vpack.c.bf16 %v460, %v457
        %vm530 = vcmask 130048
        %v532 = vsel %vm530, %v528, 0
        %v535 = vsel %vm530, %v529, 0
        %537 = vmatprep.subr.bf16.mxu0 0
        %538 = vmatpush1.bf16.xpose.msra.mxu0 %v535
        %539 = vmatprep.subr.bf16.mxu0 0
        %540 = vmatpush1.bf16.xpose.msra.mxu0 0
        %541 = vmatprep.subr.bf16.mxu0 0
        %542 = vmatpush1.bf16.xpose.msra.mxu0 0
        %543 = vmatprep.subr.bf16.mxu0 0
        %544 = vmatpush1.bf16.xpose.msra.mxu0 0
        %545 = vmatprep.subr.bf16.mxu0 0
        %546 = vmatpush1.bf16.xpose.msra.mxu0 0
        %547 = vmatprep.subr.bf16.mxu0 0
        %548 = vmatpush1.bf16.xpose.msra.mxu0 0
        %549 = vmatprep.subr.bf16.mxu0 0
        %550 = vmatpush1.bf16.xpose.msra.mxu0 0
        %551 = vmatprep.subr.bf16.mxu0 0
        %552 = vmatpush1.bf16.xpose.msra.mxu0 0
        %553 = vmatprep.subr.bf16.mxu0 0
        %554 = vmatpush1.bf16.xpose.msra.mxu0 0
        %555 = vmatprep.subr.bf16.mxu0 0
        %556 = vmatpush1.bf16.xpose.msra.mxu0 0
        %557 = vmatprep.subr.bf16.mxu0 0
        %558 = vmatpush1.bf16.xpose.msra.mxu0 0
        %559 = vmatprep.subr.bf16.mxu0 0
        %560 = vmatpush1.bf16.xpose.msra.mxu0 0
        %561 = vmatprep.subr.bf16.mxu0 0
        %562 = vmatpush1.bf16.xpose.msra.mxu0 0
        %563 = vmatprep.subr.bf16.mxu0 0
        %564 = vmatpush1.bf16.xpose.msra.mxu0 0
        %565 = vmatprep.subr.bf16.mxu0 0
        %566 = vmatpush1.bf16.xpose.msra.mxu0 0
        %567 = vmatprep.subr.bf16.mxu0 0
        %568 = vmatpush1.bf16.xpose.msra.mxu0 0
        %569 = vmatprep.mubr.bf16.mxu0 0
        %570 = vmatmul.mubr.bf16.gmra.mrb[0].mxu0 %v532
        %v571 = vpop.f32.mrb[0].mxu0
        %v572 = vadd.f32 0.0, %v571
        %v573 = vpop.f32.mrb[0].mxu0
        %v574 = vpop.f32.mrb[0].mxu0
        %v575 = vadd.f32 0.0, %v574
        %v576 = vpop.f32.mrb[0].mxu0
        %577 = vdwg.mxu0
        %v578 = vmul.f32 %v572, 0.25
        %v579 = vmul.f32 %v575, 0.25
        %v580 = vadd.f32 %v578, %v331
        %v581 = vadd.f32 %v579, %v332
        %v582 = vsel %vm530, %v580, -inf
        %583 = vmax.xlane.f32.xlu0 %v582
        %v584 = vpop.xlane.xlu0 %583
        %v585 = vsel %vm530, %v581, -inf
        %586 = vmax.xlane.f32.xlu0 %v585
        %v587 = vpop.xlane.xlu0 %586
        %v588 = vsub.f32 %v580, %v584
        %v589 = vsub.f32 %v581, %v587
        %v590 = vmul.f32 %v588, 1.442695
        %v591 = vpow.pop %v590
        %v592 = vmul.f32 %v589, 1.442695
        %v593 = vpow.pop %v592
        %v594 = vsel %vm530, %v591, 0.0
        %595 = vadd.xlane.f32.xlu0 %v594
        %v596 = vpop.xlane.xlu0 %595
        %v597 = vsel %vm530, %v593, 0.0
        %598 = vadd.xlane.f32.xlu0 %v597
        %v599 = vpop.xlane.xlu0 %598
        %v600 = vrcp.pop %v596
        %v601 = vrcp.pop %v599
        %v602 = vmul.f32 %v591, %v600
        %v603 = vmul.f32 %v593, %v601
        %v604 = vpack.c.bf16 %v603, %v602
        %v605 = vpack.c.bf16 %v525, %v522
        %v607 = vsel %vm530, %v604, 0
        %609 = vmatprep.subr.bf16.mxu0 0
        %610 = vmatpush1.bf16.msra.mxu0 %v605
        %611 = vmatprep.subr.bf16.mxu0 0
        %612 = vmatpush1.bf16.msra.mxu0 0
        %613 = vmatprep.subr.bf16.mxu0 0
        %614 = vmatpush1.bf16.msra.mxu0 0
        %615 = vmatprep.subr.bf16.mxu0 0
        %616 = vmatpush1.bf16.msra.mxu0 0
        %617 = vmatprep.subr.bf16.mxu0 0
        %618 = vmatpush1.bf16.msra.mxu0 0
        %619 = vmatprep.subr.bf16.mxu0 0
        %620 = vmatpush1.bf16.msra.mxu0 0
        %621 = vmatprep.subr.bf16.mxu0 0
        %622 = vmatpush1.bf16.msra.mxu0 0
        %623 = vmatprep.subr.bf16.mxu0 0
        %624 = vmatpush1.bf16.msra.mxu0 0
        %625 = vmatprep.subr.bf16.mxu0 0
        %626 = vmatpush1.bf16.msra.mxu0 0
        %627 = vmatprep.subr.bf16.mxu0 0
        %628 = vmatpush1.bf16.msra.mxu0 0
        %629 = vmatprep.subr.bf16.mxu0 0
        %630 = vmatpush1.bf16.msra.mxu0 0
        %631 = vmatprep.subr.bf16.mxu0 0
        %632 = vmatpush1.bf16.msra.mxu0 0
        %633 = vmatprep.subr.bf16.mxu0 0
        %634 = vmatpush1.bf16.msra.mxu0 0
        %635 = vmatprep.subr.bf16.mxu0 0
        %636 = vmatpush1.bf16.msra.mxu0 0
        %637 = vmatprep.subr.bf16.mxu0 0
        %638 = vmatpush1.bf16.msra.mxu0 0
        %639 = vmatprep.subr.bf16.mxu0 0
        %640 = vmatpush1.bf16.msra.mxu0 0
        %641 = vmatprep.mubr.bf16.mxu0 0
        %642 = vmatmul.mubr.bf16.gmra.mrb[0].mxu0 %v607
        %v643 = vpop.f32.mrb[0].mxu0
        %v644 = vadd.f32 0.0, %v643
        %v645 = vpop.f32.mrb[0].mxu0
        %v646 = vpop.f32.mrb[0].mxu0
        %v647 = vadd.f32 0.0, %v646
        %v648 = vpop.f32.mrb[0].mxu0
        %649 = vdwg.mxu0
        %v650 = vpack.c.bf16 %v647, %v644
        %v651 = vld [vmem:[%s6] sm:$0xff]
        %v652 = vld [vmem:[%s6 + $0x8] sm:$0xff]
        %v653 = vpack.c.bf16 %v652, %v651
        %s654 = scalar_lea.vmem %s3, 128
        %v655 = vld [vmem:[%s654] sm:$0xff]
        %v656 = vld [vmem:[%s654 + $0x8] sm:$0xff]
        %v657 = vld [vmem:[%s654 + $0x10] sm:$0xff]
        %v658 = vld [vmem:[%s654 + $0x18] sm:$0xff]
        %v659 = vld [vmem:[%s654 + $0x20] sm:$0xff]
        %v660 = vld [vmem:[%s654 + $0x28] sm:$0xff]
        %v661 = vld [vmem:[%s654 + $0x30] sm:$0xff]
        %v662 = vld [vmem:[%s654 + $0x38] sm:$0xff]
        %v663 = vld [vmem:[%s654 + $0x40] sm:$0xff]
        %v664 = vld [vmem:[%s654 + $0x48] sm:$0xff]
        %v665 = vld [vmem:[%s654 + $0x50] sm:$0xff]
        %v666 = vld [vmem:[%s654 + $0x58] sm:$0xff]
        %v667 = vld [vmem:[%s654 + $0x60] sm:$0xff]
        %v668 = vld [vmem:[%s654 + $0x68] sm:$0xff]
        %v669 = vld [vmem:[%s654 + $0x70] sm:$0xff]
        %v670 = vld [vmem:[%s654 + $0x78] sm:$0xff]
        %v671 = vpack.c.bf16 %v656, %v655
        %v672 = vpack.c.bf16 %v658, %v657
        %v673 = vpack.c.bf16 %v660, %v659
        %v674 = vpack.c.bf16 %v662, %v661
        %v675 = vpack.c.bf16 %v664, %v663
        %v676 = vpack.c.bf16 %v666, %v665
        %v677 = vpack.c.bf16 %v668, %v667
        %v678 = vpack.c.bf16 %v670, %v669
        %679 = vmatprep.subr.bf16.mxu0 0
        %680 = vmatpush1.bf16.msra.mxu0 %v671
        %681 = vmatprep.subr.bf16.mxu0 0
        %682 = vmatpush1.bf16.msra.mxu0 %v672
        %683 = vmatprep.subr.bf16.mxu0 0
        %684 = vmatpush1.bf16.msra.mxu0 %v673
        %685 = vmatprep.subr.bf16.mxu0 0
        %686 = vmatpush1.bf16.msra.mxu0 %v674
        %687 = vmatprep.subr.bf16.mxu0 0
        %688 = vmatpush1.bf16.msra.mxu0 %v675
        %689 = vmatprep.subr.bf16.mxu0 0
        %690 = vmatpush1.bf16.msra.mxu0 %v676
        %691 = vmatprep.subr.bf16.mxu0 0
        %692 = vmatpush1.bf16.msra.mxu0 %v677
        %693 = vmatprep.subr.bf16.mxu0 0
        %694 = vmatpush1.bf16.msra.mxu0 %v678
        %695 = vmatprep.subr.bf16.mxu0 0
        %696 = vmatpush1.bf16.msra.mxu0 0
        %697 = vmatprep.subr.bf16.mxu0 0
        %698 = vmatpush1.bf16.msra.mxu0 0
        %699 = vmatprep.subr.bf16.mxu0 0
        %700 = vmatpush1.bf16.msra.mxu0 0
        %701 = vmatprep.subr.bf16.mxu0 0
        %702 = vmatpush1.bf16.msra.mxu0 0
        %703 = vmatprep.subr.bf16.mxu0 0
        %704 = vmatpush1.bf16.msra.mxu0 0
        %705 = vmatprep.subr.bf16.mxu0 0
        %706 = vmatpush1.bf16.msra.mxu0 0
        %707 = vmatprep.subr.bf16.mxu0 0
        %708 = vmatpush1.bf16.msra.mxu0 0
        %709 = vmatprep.subr.bf16.mxu0 0
        %710 = vmatpush1.bf16.msra.mxu0 0
        %711 = vmatprep.mubr.bf16.mxu0 0
        %712 = vmatmul.mubr.bf16.gmra.mrb[0].mxu0 %v327
        %v713 = vpop.f32.mrb[0].mxu0
        %v714 = vadd.f32 0.0, %v713
        %v715 = vpop.f32.mrb[0].mxu0
        %v716 = vpop.f32.mrb[0].mxu0
        %v717 = vadd.f32 0.0, %v716
        %v718 = vpop.f32.mrb[0].mxu0
        %719 = vdwg.mxu0
        %s720 = scalar_lea.vmem %s4, 128
        %v721 = vld [vmem:[%s720] sm:$0xff]
        %v722 = vld [vmem:[%s720 + $0x8] sm:$0xff]
        %v723 = vld [vmem:[%s720 + $0x10] sm:$0xff]
        %v724 = vld [vmem:[%s720 + $0x18] sm:$0xff]
        %v725 = vld [vmem:[%s720 + $0x20] sm:$0xff]
        %v726 = vld [vmem:[%s720 + $0x28] sm:$0xff]
        %v727 = vld [vmem:[%s720 + $0x30] sm:$0xff]
        %v728 = vld [vmem:[%s720 + $0x38] sm:$0xff]
        %v729 = vld [vmem:[%s720 + $0x40] sm:$0xff]
        %v730 = vld [vmem:[%s720 + $0x48] sm:$0xff]
        %v731 = vld [vmem:[%s720 + $0x50] sm:$0xff]
        %v732 = vld [vmem:[%s720 + $0x58] sm:$0xff]
        %v733 = vld [vmem:[%s720 + $0x60] sm:$0xff]
        %v734 = vld [vmem:[%s720 + $0x68] sm:$0xff]
        %v735 = vld [vmem:[%s720 + $0x70] sm:$0xff]
        %v736 = vld [vmem:[%s720 + $0x78] sm:$0xff]
        %v737 = vpack.c.bf16 %v722, %v721
        %v738 = vpack.c.bf16 %v724, %v723
        %v739 = vpack.c.bf16 %v726, %v725
        %v740 = vpack.c.bf16 %v728, %v727
        %v741 = vpack.c.bf16 %v730, %v729
        %v742 = vpack.c.bf16 %v732, %v731
        %v743 = vpack.c.bf16 %v734, %v733
        %v744 = vpack.c.bf16 %v736, %v735
        %745 = vmatprep.subr.bf16.mxu0 0
        %746 = vmatpush1.bf16.msra.mxu0 %v737
        %747 = vmatprep.subr.bf16.mxu0 0
        %748 = vmatpush1.bf16.msra.mxu0 %v738
        %749 = vmatprep.subr.bf16.mxu0 0
        %750 = vmatpush1.bf16.msra.mxu0 %v739
        %751 = vmatprep.subr.bf16.mxu0 0
        %752 = vmatpush1.bf16.msra.mxu0 %v740
        %753 = vmatprep.subr.bf16.mxu0 0
        %754 = vmatpush1.bf16.msra.mxu0 %v741
        %755 = vmatprep.subr.bf16.mxu0 0
        %756 = vmatpush1.bf16.msra.mxu0 %v742
        %757 = vmatprep.subr.bf16.mxu0 0
        %758 = vmatpush1.bf16.msra.mxu0 %v743
        %759 = vmatprep.subr.bf16.mxu0 0
        %760 = vmatpush1.bf16.msra.mxu0 %v744
        %761 = vmatprep.subr.bf16.mxu0 0
        %762 = vmatpush1.bf16.msra.mxu0 0
        %763 = vmatprep.subr.bf16.mxu0 0
        %764 = vmatpush1.bf16.msra.mxu0 0
        %765 = vmatprep.subr.bf16.mxu0 0
        %766 = vmatpush1.bf16.msra.mxu0 0
        %767 = vmatprep.subr.bf16.mxu0 0
        %768 = vmatpush1.bf16.msra.mxu0 0
        %769 = vmatprep.subr.bf16.mxu0 0
        %770 = vmatpush1.bf16.msra.mxu0 0
        %771 = vmatprep.subr.bf16.mxu0 0
        %772 = vmatpush1.bf16.msra.mxu0 0
        %773 = vmatprep.subr.bf16.mxu0 0
        %774 = vmatpush1.bf16.msra.mxu0 0
        %775 = vmatprep.subr.bf16.mxu0 0
        %776 = vmatpush1.bf16.msra.mxu0 0
        %777 = vmatprep.mubr.bf16.mxu0 0
        %778 = vmatmul.mubr.bf16.gmra.mrb[0].mxu0 %v330
        %v779 = vpop.f32.mrb[0].mxu0
        %v780 = vadd.f32 0.0, %v779
        %v781 = vpop.f32.mrb[0].mxu0
        %v782 = vpop.f32.mrb[0].mxu0
        %v783 = vadd.f32 0.0, %v782
        %v784 = vpop.f32.mrb[0].mxu0
        %785 = vdwg.mxu0
        %s786 = scalar_lea.vmem %s5, 128
        %v787 = vld [vmem:[%s786] sm:$0xff]
        %v788 = vld [vmem:[%s786 + $0x8] sm:$0xff]
        %v789 = vld [vmem:[%s786 + $0x10] sm:$0xff]
        %v790 = vld [vmem:[%s786 + $0x18] sm:$0xff]
        %v791 = vld [vmem:[%s786 + $0x20] sm:$0xff]
        %v792 = vld [vmem:[%s786 + $0x28] sm:$0xff]
        %v793 = vld [vmem:[%s786 + $0x30] sm:$0xff]
        %v794 = vld [vmem:[%s786 + $0x38] sm:$0xff]
        %v795 = vld [vmem:[%s786 + $0x40] sm:$0xff]
        %v796 = vld [vmem:[%s786 + $0x48] sm:$0xff]
        %v797 = vld [vmem:[%s786 + $0x50] sm:$0xff]
        %v798 = vld [vmem:[%s786 + $0x58] sm:$0xff]
        %v799 = vld [vmem:[%s786 + $0x60] sm:$0xff]
        %v800 = vld [vmem:[%s786 + $0x68] sm:$0xff]
        %v801 = vld [vmem:[%s786 + $0x70] sm:$0xff]
        %v802 = vld [vmem:[%s786 + $0x78] sm:$0xff]
        %v803 = vpack.c.bf16 %v788, %v787
        %v804 = vpack.c.bf16 %v790, %v789
        %v805 = vpack.c.bf16 %v792, %v791
        %v806 = vpack.c.bf16 %v794, %v793
        %v807 = vpack.c.bf16 %v796, %v795
        %v808 = vpack.c.bf16 %v798, %v797
        %v809 = vpack.c.bf16 %v800, %v799
        %v810 = vpack.c.bf16 %v802, %v801
        %811 = vmatprep.subr.bf16.mxu0 0
        %812 = vmatpush1.bf16.msra.mxu0 %v803
        %813 = vmatprep.subr.bf16.mxu0 0
        %814 = vmatpush1.bf16.msra.mxu0 %v804
        %815 = vmatprep.subr.bf16.mxu0 0
        %816 = vmatpush1.bf16.msra.mxu0 %v805
        %817 = vmatprep.subr.bf16.mxu0 0
        %818 = vmatpush1.bf16.msra.mxu0 %v806
        %819 = vmatprep.subr.bf16.mxu0 0
        %820 = vmatpush1.bf16.msra.mxu0 %v807
        %821 = vmatprep.subr.bf16.mxu0 0
        %822 = vmatpush1.bf16.msra.mxu0 %v808
        %823 = vmatprep.subr.bf16.mxu0 0
        %824 = vmatpush1.bf16.msra.mxu0 %v809
        %825 = vmatprep.subr.bf16.mxu0 0
        %826 = vmatpush1.bf16.msra.mxu0 %v810
        %827 = vmatprep.subr.bf16.mxu0 0
        %828 = vmatpush1.bf16.msra.mxu0 0
        %829 = vmatprep.subr.bf16.mxu0 0
        %830 = vmatpush1.bf16.msra.mxu0 0
        %831 = vmatprep.subr.bf16.mxu0 0
        %832 = vmatpush1.bf16.msra.mxu0 0
        %833 = vmatprep.subr.bf16.mxu0 0
        %834 = vmatpush1.bf16.msra.mxu0 0
        %835 = vmatprep.subr.bf16.mxu0 0
        %836 = vmatpush1.bf16.msra.mxu0 0
        %837 = vmatprep.subr.bf16.mxu0 0
        %838 = vmatpush1.bf16.msra.mxu0 0
        %839 = vmatprep.subr.bf16.mxu0 0
        %840 = vmatpush1.bf16.msra.mxu0 0
        %841 = vmatprep.subr.bf16.mxu0 0
        %842 = vmatpush1.bf16.msra.mxu0 0
        %843 = vmatprep.mubr.bf16.mxu0 0
        %844 = vmatmul.mubr.bf16.gmra.mrb[0].mxu0 %v330
        %v845 = vpop.f32.mrb[0].mxu0
        %v846 = vadd.f32 0.0, %v845
        %v847 = vpop.f32.mrb[0].mxu0
        %v848 = vpop.f32.mrb[0].mxu0
        %v849 = vadd.f32 0.0, %v848
        %v850 = vpop.f32.mrb[0].mxu0
        %851 = vdwg.mxu0
        %v852 = vpack.c.bf16 %v717, %v714
        %v853 = vpack.c.bf16 %v783, %v780
        %v855 = vsel %vm530, %v852, 0
        %v858 = vsel %vm530, %v853, 0
        %860 = vmatprep.subr.bf16.mxu0 0
        %861 = vmatpush1.bf16.xpose.msra.mxu0 %v858
        %862 = vmatprep.subr.bf16.mxu0 0
        %863 = vmatpush1.bf16.xpose.msra.mxu0 0
        %864 = vmatprep.subr.bf16.mxu0 0
        %865 = vmatpush1.bf16.xpose.msra.mxu0 0
        %866 = vmatprep.subr.bf16.mxu0 0
        %867 = vmatpush1.bf16.xpose.msra.mxu0 0
        %868 = vmatprep.subr.bf16.mxu0 0
        %869 = vmatpush1.bf16.xpose.msra.mxu0 0
        %870 = vmatprep.subr.bf16.mxu0 0
        %871 = vmatpush1.bf16.xpose.msra.mxu0 0
        %872 = vmatprep.subr.bf16.mxu0 0
        %873 = vmatpush1.bf16.xpose.msra.mxu0 0
        %874 = vmatprep.subr.bf16.mxu0 0
        %875 = vmatpush1.bf16.xpose.msra.mxu0 0
        %876 = vmatprep.subr.bf16.mxu0 0
        %877 = vmatpush1.bf16.xpose.msra.mxu0 0
        %878 = vmatprep.subr.bf16.mxu0 0
        %879 = vmatpush1.bf16.xpose.msra.mxu0 0
        %880 = vmatprep.subr.bf16.mxu0 0
        %881 = vmatpush1.bf16.xpose.msra.mxu0 0
        %882 = vmatprep.subr.bf16.mxu0 0
        %883 = vmatpush1.bf16.xpose.msra.mxu0 0
        %884 = vmatprep.subr.bf16.mxu0 0
        %885 = vmatpush1.bf16.xpose.msra.mxu0 0
        %886 = vmatprep.subr.bf16.mxu0 0
        %887 = vmatpush1.bf16.xpose.msra.mxu0 0
        %888 = vmatprep.subr.bf16.mxu0 0
        %889 = vmatpush1.bf16.xpose.msra.mxu0 0
        %890 = vmatprep.subr.bf16.mxu0 0
        %891 = vmatpush1.bf16.xpose.msra.mxu0 0
        %892 = vmatprep.mubr.bf16.mxu0 0
        %893 = vmatmul.mubr.bf16.gmra.mrb[0].mxu0 %v855
        %v894 = vpop.f32.mrb[0].mxu0
        %v895 = vadd.f32 0.0, %v894
        %v896 = vpop.f32.mrb[0].mxu0
        %v897 = vpop.f32.mrb[0].mxu0
        %v898 = vadd.f32 0.0, %v897
        %v899 = vpop.f32.mrb[0].mxu0
        %900 = vdwg.mxu0
        %v901 = vmul.f32 %v895, 0.25
        %v902 = vmul.f32 %v898, 0.25
        %v903 = vadd.f32 %v901, %v331
        %v904 = vadd.f32 %v902, %v332
        %v905 = vsel %vm530, %v903, -inf
        %906 = vmax.xlane.f32.xlu0 %v905
        %v907 = vpop.xlane.xlu0 %906
        %v908 = vsel %vm530, %v904, -inf
        %909 = vmax.xlane.f32.xlu0 %v908
        %v910 = vpop.xlane.xlu0 %909
        %v911 = vsub.f32 %v903, %v907
        %v912 = vsub.f32 %v904, %v910
        %v913 = vmul.f32 %v911, 1.442695
        %v914 = vpow.pop %v913
        %v915 = vmul.f32 %v912, 1.442695
        %v916 = vpow.pop %v915
        %v917 = vsel %vm530, %v914, 0.0
        %918 = vadd.xlane.f32.xlu0 %v917
        %v919 = vpop.xlane.xlu0 %918
        %v920 = vsel %vm530, %v916, 0.0
        %921 = vadd.xlane.f32.xlu0 %v920
        %v922 = vpop.xlane.xlu0 %921
        %v923 = vrcp.pop %v919
        %v924 = vrcp.pop %v922
        %v925 = vmul.f32 %v914, %v923
        %v926 = vmul.f32 %v916, %v924
        %v927 = vpack.c.bf16 %v926, %v925
        %v928 = vpack.c.bf16 %v849, %v846
        %v930 = vsel %vm530, %v927, 0
        %932 = vmatprep.subr.bf16.mxu0 0
        %933 = vmatpush1.bf16.msra.mxu0 %v928
        %934 = vmatprep.subr.bf16.mxu0 0
        %935 = vmatpush1.bf16.msra.mxu0 0
        %936 = vmatprep.subr.bf16.mxu0 0
        %937 = vmatpush1.bf16.msra.mxu0 0
        %938 = vmatprep.subr.bf16.mxu0 0
        %939 = vmatpush1.bf16.msra.mxu0 0
        %940 = vmatprep.subr.bf16.mxu0 0
        %941 = vmatpush1.bf16.msra.mxu0 0
        %942 = vmatprep.subr.bf16.mxu0 0
        %943 = vmatpush1.bf16.msra.mxu0 0
        %944 = vmatprep.subr.bf16.mxu0 0
        %945 = vmatpush1.bf16.msra.mxu0 0
        %946 = vmatprep.subr.bf16.mxu0 0
        %947 = vmatpush1.bf16.msra.mxu0 0
        %948 = vmatprep.subr.bf16.mxu0 0
        %949 = vmatpush1.bf16.msra.mxu0 0
        %950 = vmatprep.subr.bf16.mxu0 0
        %951 = vmatpush1.bf16.msra.mxu0 0
        %952 = vmatprep.subr.bf16.mxu0 0
        %953 = vmatpush1.bf16.msra.mxu0 0
        %954 = vmatprep.subr.bf16.mxu0 0
        %955 = vmatpush1.bf16.msra.mxu0 0
        %956 = vmatprep.subr.bf16.mxu0 0
        %957 = vmatpush1.bf16.msra.mxu0 0
        %958 = vmatprep.subr.bf16.mxu0 0
        %959 = vmatpush1.bf16.msra.mxu0 0
        %960 = vmatprep.subr.bf16.mxu0 0
        %961 = vmatpush1.bf16.msra.mxu0 0
        %962 = vmatprep.subr.bf16.mxu0 0
        %963 = vmatpush1.bf16.msra.mxu0 0
        %964 = vmatprep.mubr.bf16.mxu0 0
        %965 = vmatmul.mubr.bf16.gmra.mrb[0].mxu0 %v930
        %v966 = vpop.f32.mrb[0].mxu0
        %v967 = vadd.f32 0.0, %v966
        %v968 = vpop.f32.mrb[0].mxu0
        %v969 = vpop.f32.mrb[0].mxu0
        %v970 = vadd.f32 0.0, %v969
        %v971 = vpop.f32.mrb[0].mxu0
        %972 = vdwg.mxu0
        %v973 = vpack.c.bf16 %v970, %v967
        %s974 = scalar_lea.vmem %s6, 16
        %v975 = vld [vmem:[%s974] sm:$0xff]
        %v976 = vld [vmem:[%s974 + $0x8] sm:$0xff]
        %v977 = vpack.c.bf16 %v976, %v975
        %v979 = vsel %vm530, %v973, 0
        %981 = vmatprep.subr.bf16.mxu0 0
        %982 = vmatpush1.bf16.msra.mxu0 %v977
        %983 = vmatprep.subr.bf16.mxu0 0
        %984 = vmatpush1.bf16.msra.mxu0 0
        %985 = vmatprep.subr.bf16.mxu0 0
        %986 = vmatpush1.bf16.msra.mxu0 0
        %987 = vmatprep.subr.bf16.mxu0 0
        %988 = vmatpush1.bf16.msra.mxu0 0
        %989 = vmatprep.subr.bf16.mxu0 0
        %990 = vmatpush1.bf16.msra.mxu0 0
        %991 = vmatprep.subr.bf16.mxu0 0
        %992 = vmatpush1.bf16.msra.mxu0 0
        %993 = vmatprep.subr.bf16.mxu0 0
        %994 = vmatpush1.bf16.msra.mxu0 0
        %995 = vmatprep.subr.bf16.mxu0 0
        %996 = vmatpush1.bf16.msra.mxu0 0
        %997 = vmatprep.subr.bf16.mxu0 0
        %998 = vmatpush1.bf16.msra.mxu0 0
        %999 = vmatprep.subr.bf16.mxu0 0
        %1000 = vmatpush1.bf16.msra.mxu0 0
        %1001 = vmatprep.subr.bf16.mxu0 0
        %1002 = vmatpush1.bf16.msra.mxu0 0
        %1003 = vmatprep.subr.bf16.mxu0 0
        %1004 = vmatpush1.bf16.msra.mxu0 0
        %1005 = vmatprep.subr.bf16.mxu0 0
        %1006 = vmatpush1.bf16.msra.mxu0 0
        %1007 = vmatprep.subr.bf16.mxu0 0
        %1008 = vmatpush1.bf16.msra.mxu0 0
        %1009 = vmatprep.subr.bf16.mxu0 0
        %1010 = vmatpush1.bf16.msra.mxu0 0
        %1011 = vmatprep.subr.bf16.mxu0 0
        %1012 = vmatpush1.bf16.msra.mxu0 0
        %1013 = vmatprep.mubr.bf16.mxu0 0
        %1014 = vmatmul.mubr.bf16.gmra.mrb[0].mxu0 %v979
        %v1015 = vpop.f32.mrb[0].mxu0
        %v1016 = vadd.f32 0.0, %v1015
        %v1017 = vpop.f32.mrb[0].mxu0
        %v1018 = vpop.f32.mrb[0].mxu0
        %v1019 = vadd.f32 0.0, %v1018
        %v1020 = vpop.f32.mrb[0].mxu0
        %1021 = vdwg.mxu0
        %v1023 = vsel %vm530, %v650, 0
        %1025 = vmatprep.subr.bf16.mxu0 0
        %1026 = vmatpush1.bf16.msra.mxu0 %v653
        %1027 = vmatprep.subr.bf16.mxu0 0
        %1028 = vmatpush1.bf16.msra.mxu0 0
        %1029 = vmatprep.subr.bf16.mxu0 0
        %1030 = vmatpush1.bf16.msra.mxu0 0
        %1031 = vmatprep.subr.bf16.mxu0 0
        %1032 = vmatpush1.bf16.msra.mxu0 0
        %1033 = vmatprep.subr.bf16.mxu0 0
        %1034 = vmatpush1.bf16.msra.mxu0 0
        %1035 = vmatprep.subr.bf16.mxu0 0
        %1036 = vmatpush1.bf16.msra.mxu0 0
        %1037 = vmatprep.subr.bf16.mxu0 0
        %1038 = vmatpush1.bf16.msra.mxu0 0
        %1039 = vmatprep.subr.bf16.mxu0 0
        %1040 = vmatpush1.bf16.msra.mxu0 0
        %1041 = vmatprep.subr.bf16.mxu0 0
        %1042 = vmatpush1.bf16.msra.mxu0 0
        %1043 = vmatprep.subr.bf16.mxu0 0
        %1044 = vmatpush1.bf16.msra.mxu0 0
        %1045 = vmatprep.subr.bf16.mxu0 0
        %1046 = vmatpush1.bf16.msra.mxu0 0
        %1047 = vmatprep.subr.bf16.mxu0 0
        %1048 = vmatpush1.bf16.msra.mxu0 0
        %1049 = vmatprep.subr.bf16.mxu0 0
        %1050 = vmatpush1.bf16.msra.mxu0 0
        %1051 = vmatprep.subr.bf16.mxu0 0
        %1052 = vmatpush1.bf16.msra.mxu0 0
        %1053 = vmatprep.subr.bf16.mxu0 0
        %1054 = vmatpush1.bf16.msra.mxu0 0
        %1055 = vmatprep.subr.bf16.mxu0 0
        %1056 = vmatpush1.bf16.msra.mxu0 0
        %1057 = vmatprep.mubr.bf16.mxu0 0
        %1058 = vmatmul.mubr.bf16.gmra.mrb[0].mxu0 %v1023
        %v1059 = vpop.f32.mrb[0].mxu0
        %v1060 = vadd.f32 %v1016, %v1059
        %v1061 = vpop.f32.mrb[0].mxu0
        %v1062 = vpop.f32.mrb[0].mxu0
        %v1063 = vadd.f32 %v1019, %v1062
        %v1064 = vpop.f32.mrb[0].mxu0
        %1065 = vdwg.mxu0
        %s1066 = scalar_lea.vmem %s3, 256
        %v1067 = vld [vmem:[%s1066] sm:$0xff]
        %v1068 = vld [vmem:[%s1066 + $0x8] sm:$0xff]
        %v1069 = vld [vmem:[%s1066 + $0x10] sm:$0xff]
        %v1070 = vld [vmem:[%s1066 + $0x18] sm:$0xff]
        %v1071 = vld [vmem:[%s1066 + $0x20] sm:$0xff]
        %v1072 = vld [vmem:[%s1066 + $0x28] sm:$0xff]
        %v1073 = vld [vmem:[%s1066 + $0x30] sm:$0xff]
        %v1074 = vld [vmem:[%s1066 + $0x38] sm:$0xff]
        %v1075 = vld [vmem:[%s1066 + $0x40] sm:$0xff]
        %v1076 = vld [vmem:[%s1066 + $0x48] sm:$0xff]
        %v1077 = vld [vmem:[%s1066 + $0x50] sm:$0xff]
        %v1078 = vld [vmem:[%s1066 + $0x58] sm:$0xff]
        %v1079 = vld [vmem:[%s1066 + $0x60] sm:$0xff]
        %v1080 = vld [vmem:[%s1066 + $0x68] sm:$0xff]
        %v1081 = vld [vmem:[%s1066 + $0x70] sm:$0xff]
        %v1082 = vld [vmem:[%s1066 + $0x78] sm:$0xff]
        %v1083 = vpack.c.bf16 %v1068, %v1067
        %v1084 = vpack.c.bf16 %v1070, %v1069
        %v1085 = vpack.c.bf16 %v1072, %v1071
        %v1086 = vpack.c.bf16 %v1074, %v1073
        %v1087 = vpack.c.bf16 %v1076, %v1075
        %v1088 = vpack.c.bf16 %v1078, %v1077
        %v1089 = vpack.c.bf16 %v1080, %v1079
        %v1090 = vpack.c.bf16 %v1082, %v1081
        %1091 = vmatprep.subr.bf16.mxu0 0
        %1092 = vmatpush1.bf16.msra.mxu0 %v1083
        %1093 = vmatprep.subr.bf16.mxu0 0
        %1094 = vmatpush1.bf16.msra.mxu0 %v1084
        %1095 = vmatprep.subr.bf16.mxu0 0
        %1096 = vmatpush1.bf16.msra.mxu0 %v1085
        %1097 = vmatprep.subr.bf16.mxu0 0
        %1098 = vmatpush1.bf16.msra.mxu0 %v1086
        %1099 = vmatprep.subr.bf16.mxu0 0
        %1100 = vmatpush1.bf16.msra.mxu0 %v1087
        %1101 = vmatprep.subr.bf16.mxu0 0
        %1102 = vmatpush1.bf16.msra.mxu0 %v1088
        %1103 = vmatprep.subr.bf16.mxu0 0
        %1104 = vmatpush1.bf16.msra.mxu0 %v1089
        %1105 = vmatprep.subr.bf16.mxu0 0
        %1106 = vmatpush1.bf16.msra.mxu0 %v1090
        %1107 = vmatprep.subr.bf16.mxu0 0
        %1108 = vmatpush1.bf16.msra.mxu0 0
        %1109 = vmatprep.subr.bf16.mxu0 0
        %1110 = vmatpush1.bf16.msra.mxu0 0
        %1111 = vmatprep.subr.bf16.mxu0 0
        %1112 = vmatpush1.bf16.msra.mxu0 0
        %1113 = vmatprep.subr.bf16.mxu0 0
        %1114 = vmatpush1.bf16.msra.mxu0 0
        %1115 = vmatprep.subr.bf16.mxu0 0
        %1116 = vmatpush1.bf16.msra.mxu0 0
        %1117 = vmatprep.subr.bf16.mxu0 0
        %1118 = vmatpush1.bf16.msra.mxu0 0
        %1119 = vmatprep.subr.bf16.mxu0 0
        %1120 = vmatpush1.bf16.msra.mxu0 0
        %1121 = vmatprep.subr.bf16.mxu0 0
        %1122 = vmatpush1.bf16.msra.mxu0 0
        %1123 = vmatprep.mubr.bf16.mxu0 0
        %1124 = vmatmul.mubr.bf16.gmra.mrb[0].mxu0 %v327
        %v1125 = vpop.f32.mrb[0].mxu0
        %v1126 = vadd.f32 0.0, %v1125
        %v1127 = vpop.f32.mrb[0].mxu0
        %v1128 = vpop.f32.mrb[0].mxu0
        %v1129 = vadd.f32 0.0, %v1128
        %v1130 = vpop.f32.mrb[0].mxu0
        %1131 = vdwg.mxu0
        %s1132 = scalar_lea.vmem %s4, 256
        %v1133 = vld [vmem:[%s1132] sm:$0xff]
        %v1134 = vld [vmem:[%s1132 + $0x8] sm:$0xff]
        %v1135 = vld [vmem:[%s1132 + $0x10] sm:$0xff]
        %v1136 = vld [vmem:[%s1132 + $0x18] sm:$0xff]
        %v1137 = vld [vmem:[%s1132 + $0x20] sm:$0xff]
        %v1138 = vld [vmem:[%s1132 + $0x28] sm:$0xff]
        %v1139 = vld [vmem:[%s1132 + $0x30] sm:$0xff]
        %v1140 = vld [vmem:[%s1132 + $0x38] sm:$0xff]
        %v1141 = vld [vmem:[%s1132 + $0x40] sm:$0xff]
        %v1142 = vld [vmem:[%s1132 + $0x48] sm:$0xff]
        %v1143 = vld [vmem:[%s1132 + $0x50] sm:$0xff]
        %v1144 = vld [vmem:[%s1132 + $0x58] sm:$0xff]
        %v1145 = vld [vmem:[%s1132 + $0x60] sm:$0xff]
        %v1146 = vld [vmem:[%s1132 + $0x68] sm:$0xff]
        %v1147 = vld [vmem:[%s1132 + $0x70] sm:$0xff]
        %v1148 = vld [vmem:[%s1132 + $0x78] sm:$0xff]
        %v1149 = vpack.c.bf16 %v1134, %v1133
        %v1150 = vpack.c.bf16 %v1136, %v1135
        %v1151 = vpack.c.bf16 %v1138, %v1137
        %v1152 = vpack.c.bf16 %v1140, %v1139
        %v1153 = vpack.c.bf16 %v1142, %v1141
        %v1154 = vpack.c.bf16 %v1144, %v1143
        %v1155 = vpack.c.bf16 %v1146, %v1145
        %v1156 = vpack.c.bf16 %v1148, %v1147
        %1157 = vmatprep.subr.bf16.mxu0 0
        %1158 = vmatpush1.bf16.msra.mxu0 %v1149
        %1159 = vmatprep.subr.bf16.mxu0 0
        %1160 = vmatpush1.bf16.msra.mxu0 %v1150
        %1161 = vmatprep.subr.bf16.mxu0 0
        %1162 = vmatpush1.bf16.msra.mxu0 %v1151
        %1163 = vmatprep.subr.bf16.mxu0 0
        %1164 = vmatpush1.bf16.msra.mxu0 %v1152
        %1165 = vmatprep.subr.bf16.mxu0 0
        %1166 = vmatpush1.bf16.msra.mxu0 %v1153
        %1167 = vmatprep.subr.bf16.mxu0 0
        %1168 = vmatpush1.bf16.msra.mxu0 %v1154
        %1169 = vmatprep.subr.bf16.mxu0 0
        %1170 = vmatpush1.bf16.msra.mxu0 %v1155
        %1171 = vmatprep.subr.bf16.mxu0 0
        %1172 = vmatpush1.bf16.msra.mxu0 %v1156
        %1173 = vmatprep.subr.bf16.mxu0 0
        %1174 = vmatpush1.bf16.msra.mxu0 0
        %1175 = vmatprep.subr.bf16.mxu0 0
        %1176 = vmatpush1.bf16.msra.mxu0 0
        %1177 = vmatprep.subr.bf16.mxu0 0
        %1178 = vmatpush1.bf16.msra.mxu0 0
        %1179 = vmatprep.subr.bf16.mxu0 0
        %1180 = vmatpush1.bf16.msra.mxu0 0
        %1181 = vmatprep.subr.bf16.mxu0 0
        %1182 = vmatpush1.bf16.msra.mxu0 0
        %1183 = vmatprep.subr.bf16.mxu0 0
        %1184 = vmatpush1.bf16.msra.mxu0 0
        %1185 = vmatprep.subr.bf16.mxu0 0
        %1186 = vmatpush1.bf16.msra.mxu0 0
        %1187 = vmatprep.subr.bf16.mxu0 0
        %1188 = vmatpush1.bf16.msra.mxu0 0
        %1189 = vmatprep.mubr.bf16.mxu0 0
        %1190 = vmatmul.mubr.bf16.gmra.mrb[0].mxu0 %v330
        %v1191 = vpop.f32.mrb[0].mxu0
        %v1192 = vadd.f32 0.0, %v1191
        %v1193 = vpop.f32.mrb[0].mxu0
        %v1194 = vpop.f32.mrb[0].mxu0
        %v1195 = vadd.f32 0.0, %v1194
        %v1196 = vpop.f32.mrb[0].mxu0
        %1197 = vdwg.mxu0
        %s1198 = scalar_lea.vmem %s5, 256
        %v1199 = vld [vmem:[%s1198] sm:$0xff]
        %v1200 = vld [vmem:[%s1198 + $0x8] sm:$0xff]
        %v1201 = vld [vmem:[%s1198 + $0x10] sm:$0xff]
        %v1202 = vld [vmem:[%s1198 + $0x18] sm:$0xff]
        %v1203 = vld [vmem:[%s1198 + $0x20] sm:$0xff]
        %v1204 = vld [vmem:[%s1198 + $0x28] sm:$0xff]
        %v1205 = vld [vmem:[%s1198 + $0x30] sm:$0xff]
        %v1206 = vld [vmem:[%s1198 + $0x38] sm:$0xff]
        %v1207 = vld [vmem:[%s1198 + $0x40] sm:$0xff]
        %v1208 = vld [vmem:[%s1198 + $0x48] sm:$0xff]
        %v1209 = vld [vmem:[%s1198 + $0x50] sm:$0xff]
        %v1210 = vld [vmem:[%s1198 + $0x58] sm:$0xff]
        %v1211 = vld [vmem:[%s1198 + $0x60] sm:$0xff]
        %v1212 = vld [vmem:[%s1198 + $0x68] sm:$0xff]
        %v1213 = vld [vmem:[%s1198 + $0x70] sm:$0xff]
        %v1214 = vld [vmem:[%s1198 + $0x78] sm:$0xff]
        %v1215 = vpack.c.bf16 %v1200, %v1199
        %v1216 = vpack.c.bf16 %v1202, %v1201
        %v1217 = vpack.c.bf16 %v1204, %v1203
        %v1218 = vpack.c.bf16 %v1206, %v1205
        %v1219 = vpack.c.bf16 %v1208, %v1207
        %v1220 = vpack.c.bf16 %v1210, %v1209
        %v1221 = vpack.c.bf16 %v1212, %v1211
        %v1222 = vpack.c.bf16 %v1214, %v1213
        %1223 = vmatprep.subr.bf16.mxu0 0
        %1224 = vmatpush1.bf16.msra.mxu0 %v1215
        %1225 = vmatprep.subr.bf16.mxu0 0
        %1226 = vmatpush1.bf16.msra.mxu0 %v1216
        %1227 = vmatprep.subr.bf16.mxu0 0
        %1228 = vmatpush1.bf16.msra.mxu0 %v1217
        %1229 = vmatprep.subr.bf16.mxu0 0
        %1230 = vmatpush1.bf16.msra.mxu0 %v1218
        %1231 = vmatprep.subr.bf16.mxu0 0
        %1232 = vmatpush1.bf16.msra.mxu0 %v1219
        %1233 = vmatprep.subr.bf16.mxu0 0
        %1234 = vmatpush1.bf16.msra.mxu0 %v1220
        %1235 = vmatprep.subr.bf16.mxu0 0
        %1236 = vmatpush1.bf16.msra.mxu0 %v1221
        %1237 = vmatprep.subr.bf16.mxu0 0
        %1238 = vmatpush1.bf16.msra.mxu0 %v1222
        %1239 = vmatprep.subr.bf16.mxu0 0
        %1240 = vmatpush1.bf16.msra.mxu0 0
        %1241 = vmatprep.subr.bf16.mxu0 0
        %1242 = vmatpush1.bf16.msra.mxu0 0
        %1243 = vmatprep.subr.bf16.mxu0 0
        %1244 = vmatpush1.bf16.msra.mxu0 0
        %1245 = vmatprep.subr.bf16.mxu0 0
        %1246 = vmatpush1.bf16.msra.mxu0 0
        %1247 = vmatprep.subr.bf16.mxu0 0
        %1248 = vmatpush1.bf16.msra.mxu0 0
        %1249 = vmatprep.subr.bf16.mxu0 0
        %1250 = vmatpush1.bf16.msra.mxu0 0
        %1251 = vmatprep.subr.bf16.mxu0 0
        %1252 = vmatpush1.bf16.msra.mxu0 0
        %1253 = vmatprep.subr.bf16.mxu0 0
        %1254 = vmatpush1.bf16.msra.mxu0 0
        %1255 = vmatprep.mubr.bf16.mxu0 0
        %1256 = vmatmul.mubr.bf16.gmra.mrb[0].mxu0 %v330
        %v1257 = vpop.f32.mrb[0].mxu0
        %v1258 = vadd.f32 0.0, %v1257
        %v1259 = vpop.f32.mrb[0].mxu0
        %v1260 = vpop.f32.mrb[0].mxu0
        %v1261 = vadd.f32 0.0, %v1260
        %v1262 = vpop.f32.mrb[0].mxu0
        %1263 = vdwg.mxu0
        %v1264 = vpack.c.bf16 %v1129, %v1126
        %v1265 = vpack.c.bf16 %v1195, %v1192
        %v1267 = vsel %vm530, %v1264, 0
        %v1270 = vsel %vm530, %v1265, 0
        %1272 = vmatprep.subr.bf16.mxu0 0
        %1273 = vmatpush1.bf16.xpose.msra.mxu0 %v1270
        %1274 = vmatprep.subr.bf16.mxu0 0
        %1275 = vmatpush1.bf16.xpose.msra.mxu0 0
        %1276 = vmatprep.subr.bf16.mxu0 0
        %1277 = vmatpush1.bf16.xpose.msra.mxu0 0
        %1278 = vmatprep.subr.bf16.mxu0 0
        %1279 = vmatpush1.bf16.xpose.msra.mxu0 0
        %1280 = vmatprep.subr.bf16.mxu0 0
        %1281 = vmatpush1.bf16.xpose.msra.mxu0 0
        %1282 = vmatprep.subr.bf16.mxu0 0
        %1283 = vmatpush1.bf16.xpose.msra.mxu0 0
        %1284 = vmatprep.subr.bf16.mxu0 0
        %1285 = vmatpush1.bf16.xpose.msra.mxu0 0
        %1286 = vmatprep.subr.bf16.mxu0 0
        %1287 = vmatpush1.bf16.xpose.msra.mxu0 0
        %1288 = vmatprep.subr.bf16.mxu0 0
        %1289 = vmatpush1.bf16.xpose.msra.mxu0 0
        %1290 = vmatprep.subr.bf16.mxu0 0
        %1291 = vmatpush1.bf16.xpose.msra.mxu0 0
        %1292 = vmatprep.subr.bf16.mxu0 0
        %1293 = vmatpush1.bf16.xpose.msra.mxu0 0
        %1294 = vmatprep.subr.bf16.mxu0 0
        %1295 = vmatpush1.bf16.xpose.msra.mxu0 0
        %1296 = vmatprep.subr.bf16.mxu0 0
        %1297 = vmatpush1.bf16.xpose.msra.mxu0 0
        %1298 = vmatprep.subr.bf16.mxu0 0
        %1299 = vmatpush1.bf16.xpose.msra.mxu0 0
        %1300 = vmatprep.subr.bf16.mxu0 0
        %1301 = vmatpush1.bf16.xpose.msra.mxu0 0
        %1302 = vmatprep.subr.bf16.mxu0 0
        %1303 = vmatpush1.bf16.xpose.msra.mxu0 0
        %1304 = vmatprep.mubr.bf16.mxu0 0
        %1305 = vmatmul.mubr.bf16.gmra.mrb[0].mxu0 %v1267
        %v1306 = vpop.f32.mrb[0].mxu0
        %v1307 = vadd.f32 0.0, %v1306
        %v1308 = vpop.f32.mrb[0].mxu0
        %v1309 = vpop.f32.mrb[0].mxu0
        %v1310 = vadd.f32 0.0, %v1309
        %v1311 = vpop.f32.mrb[0].mxu0
        %1312 = vdwg.mxu0
        %v1313 = vmul.f32 %v1307, 0.25
        %v1314 = vmul.f32 %v1310, 0.25
        %v1315 = vadd.f32 %v1313, %v331
        %v1316 = vadd.f32 %v1314, %v332
        %v1317 = vsel %vm530, %v1315, -inf
        %1318 = vmax.xlane.f32.xlu0 %v1317
        %v1319 = vpop.xlane.xlu0 %1318
        %v1320 = vsel %vm530, %v1316, -inf
        %1321 = vmax.xlane.f32.xlu0 %v1320
        %v1322 = vpop.xlane.xlu0 %1321
        %v1323 = vsub.f32 %v1315, %v1319
        %v1324 = vsub.f32 %v1316, %v1322
        %v1325 = vmul.f32 %v1323, 1.442695
        %v1326 = vpow.pop %v1325
        %v1327 = vmul.f32 %v1324, 1.442695
        %v1328 = vpow.pop %v1327
        %v1329 = vsel %vm530, %v1326, 0.0
        %1330 = vadd.xlane.f32.xlu0 %v1329
        %v1331 = vpop.xlane.xlu0 %1330
        %v1332 = vsel %vm530, %v1328, 0.0
        %1333 = vadd.xlane.f32.xlu0 %v1332
        %v1334 = vpop.xlane.xlu0 %1333
        %v1335 = vrcp.pop %v1331
        %v1336 = vrcp.pop %v1334
        %v1337 = vmul.f32 %v1326, %v1335
        %v1338 = vmul.f32 %v1328, %v1336
        %v1339 = vpack.c.bf16 %v1338, %v1337
        %v1340 = vpack.c.bf16 %v1261, %v1258
        %v1342 = vsel %vm530, %v1339, 0
        %1344 = vmatprep.subr.bf16.mxu0 0
        %1345 = vmatpush1.bf16.msra.mxu0 %v1340
        %1346 = vmatprep.subr.bf16.mxu0 0
        %1347 = vmatpush1.bf16.msra.mxu0 0
        %1348 = vmatprep.subr.bf16.mxu0 0
        %1349 = vmatpush1.bf16.msra.mxu0 0
        %1350 = vmatprep.subr.bf16.mxu0 0
        %1351 = vmatpush1.bf16.msra.mxu0 0
        %1352 = vmatprep.subr.bf16.mxu0 0
        %1353 = vmatpush1.bf16.msra.mxu0 0
        %1354 = vmatprep.subr.bf16.mxu0 0
        %1355 = vmatpush1.bf16.msra.mxu0 0
        %1356 = vmatprep.subr.bf16.mxu0 0
        %1357 = vmatpush1.bf16.msra.mxu0 0
        %1358 = vmatprep.subr.bf16.mxu0 0
        %1359 = vmatpush1.bf16.msra.mxu0 0
        %1360 = vmatprep.subr.bf16.mxu0 0
        %1361 = vmatpush1.bf16.msra.mxu0 0
        %1362 = vmatprep.subr.bf16.mxu0 0
        %1363 = vmatpush1.bf16.msra.mxu0 0
        %1364 = vmatprep.subr.bf16.mxu0 0
        %1365 = vmatpush1.bf16.msra.mxu0 0
        %1366 = vmatprep.subr.bf16.mxu0 0
        %1367 = vmatpush1.bf16.msra.mxu0 0
        %1368 = vmatprep.subr.bf16.mxu0 0
        %1369 = vmatpush1.bf16.msra.mxu0 0
        %1370 = vmatprep.subr.bf16.mxu0 0
        %1371 = vmatpush1.bf16.msra.mxu0 0
        %1372 = vmatprep.subr.bf16.mxu0 0
        %1373 = vmatpush1.bf16.msra.mxu0 0
        %1374 = vmatprep.subr.bf16.mxu0 0
        %1375 = vmatpush1.bf16.msra.mxu0 0
        %1376 = vmatprep.mubr.bf16.mxu0 0
        %1377 = vmatmul.mubr.bf16.gmra.mrb[0].mxu0 %v1342
        %v1378 = vpop.f32.mrb[0].mxu0
        %v1379 = vadd.f32 0.0, %v1378
        %v1380 = vpop.f32.mrb[0].mxu0
        %v1381 = vpop.f32.mrb[0].mxu0
        %v1382 = vadd.f32 0.0, %v1381
        %v1383 = vpop.f32.mrb[0].mxu0
        %1384 = vdwg.mxu0
        %v1385 = vpack.c.bf16 %v1382, %v1379
        %s1386 = scalar_lea.vmem %s6, 32
        %v1387 = vld [vmem:[%s1386] sm:$0xff]
        %v1388 = vld [vmem:[%s1386 + $0x8] sm:$0xff]
        %v1389 = vpack.c.bf16 %v1388, %v1387
        %v1391 = vsel %vm530, %v1385, 0
        %1393 = vmatprep.subr.bf16.mxu0 0
        %1394 = vmatpush1.bf16.msra.mxu0 %v1389
        %1395 = vmatprep.subr.bf16.mxu0 0
        %1396 = vmatpush1.bf16.msra.mxu0 0
        %1397 = vmatprep.subr.bf16.mxu0 0
        %1398 = vmatpush1.bf16.msra.mxu0 0
        %1399 = vmatprep.subr.bf16.mxu0 0
        %1400 = vmatpush1.bf16.msra.mxu0 0
        %1401 = vmatprep.subr.bf16.mxu0 0
        %1402 = vmatpush1.bf16.msra.mxu0 0
        %1403 = vmatprep.subr.bf16.mxu0 0
        %1404 = vmatpush1.bf16.msra.mxu0 0
        %1405 = vmatprep.subr.bf16.mxu0 0
        %1406 = vmatpush1.bf16.msra.mxu0 0
        %1407 = vmatprep.subr.bf16.mxu0 0
        %1408 = vmatpush1.bf16.msra.mxu0 0
        %1409 = vmatprep.subr.bf16.mxu0 0
        %1410 = vmatpush1.bf16.msra.mxu0 0
        %1411 = vmatprep.subr.bf16.mxu0 0
        %1412 = vmatpush1.bf16.msra.mxu0 0
        %1413 = vmatprep.subr.bf16.mxu0 0
        %1414 = vmatpush1.bf16.msra.mxu0 0
        %1415 = vmatprep.subr.bf16.mxu0 0
        %1416 = vmatpush1.bf16.msra.mxu0 0
        %1417 = vmatprep.subr.bf16.mxu0 0
        %1418 = vmatpush1.bf16.msra.mxu0 0
        %1419 = vmatprep.subr.bf16.mxu0 0
        %1420 = vmatpush1.bf16.msra.mxu0 0
        %1421 = vmatprep.subr.bf16.mxu0 0
        %1422 = vmatpush1.bf16.msra.mxu0 0
        %1423 = vmatprep.subr.bf16.mxu0 0
        %1424 = vmatpush1.bf16.msra.mxu0 0
        %1425 = vmatprep.mubr.bf16.mxu0 0
        %1426 = vmatmul.mubr.bf16.gmra.mrb[0].mxu0 %v1391
        %v1427 = vpop.f32.mrb[0].mxu0
        %v1428 = vadd.f32 0.0, %v1427
        %v1429 = vpop.f32.mrb[0].mxu0
        %v1430 = vpop.f32.mrb[0].mxu0
        %v1431 = vadd.f32 0.0, %v1430
        %v1432 = vpop.f32.mrb[0].mxu0
        %1433 = vdwg.mxu0
        %v1434 = vadd.f32 %v1060, %v1428
        %v1435 = vadd.f32 %v1063, %v1431
        %s1436 = scalar_lea.vmem %s3, 384
        %v1437 = vld [vmem:[%s1436] sm:$0xff]
        %v1438 = vld [vmem:[%s1436 + $0x8] sm:$0xff]
        %v1439 = vld [vmem:[%s1436 + $0x10] sm:$0xff]
        %v1440 = vld [vmem:[%s1436 + $0x18] sm:$0xff]
        %v1441 = vld [vmem:[%s1436 + $0x20] sm:$0xff]
        %v1442 = vld [vmem:[%s1436 + $0x28] sm:$0xff]
        %v1443 = vld [vmem:[%s1436 + $0x30] sm:$0xff]
        %v1444 = vld [vmem:[%s1436 + $0x38] sm:$0xff]
        %v1445 = vld [vmem:[%s1436 + $0x40] sm:$0xff]
        %v1446 = vld [vmem:[%s1436 + $0x48] sm:$0xff]
        %v1447 = vld [vmem:[%s1436 + $0x50] sm:$0xff]
        %v1448 = vld [vmem:[%s1436 + $0x58] sm:$0xff]
        %v1449 = vld [vmem:[%s1436 + $0x60] sm:$0xff]
        %v1450 = vld [vmem:[%s1436 + $0x68] sm:$0xff]
        %v1451 = vld [vmem:[%s1436 + $0x70] sm:$0xff]
        %v1452 = vld [vmem:[%s1436 + $0x78] sm:$0xff]
        %v1453 = vpack.c.bf16 %v1438, %v1437
        %v1454 = vpack.c.bf16 %v1440, %v1439
        %v1455 = vpack.c.bf16 %v1442, %v1441
        %v1456 = vpack.c.bf16 %v1444, %v1443
        %v1457 = vpack.c.bf16 %v1446, %v1445
        %v1458 = vpack.c.bf16 %v1448, %v1447
        %v1459 = vpack.c.bf16 %v1450, %v1449
        %v1460 = vpack.c.bf16 %v1452, %v1451
        %1461 = vmatprep.subr.bf16.mxu0 0
        %1462 = vmatpush1.bf16.msra.mxu0 %v1453
        %1463 = vmatprep.subr.bf16.mxu0 0
        %1464 = vmatpush1.bf16.msra.mxu0 %v1454
        %1465 = vmatprep.subr.bf16.mxu0 0
        %1466 = vmatpush1.bf16.msra.mxu0 %v1455
        %1467 = vmatprep.subr.bf16.mxu0 0
        %1468 = vmatpush1.bf16.msra.mxu0 %v1456
        %1469 = vmatprep.subr.bf16.mxu0 0
        %1470 = vmatpush1.bf16.msra.mxu0 %v1457
        %1471 = vmatprep.subr.bf16.mxu0 0
        %1472 = vmatpush1.bf16.msra.mxu0 %v1458
        %1473 = vmatprep.subr.bf16.mxu0 0
        %1474 = vmatpush1.bf16.msra.mxu0 %v1459
        %1475 = vmatprep.subr.bf16.mxu0 0
        %1476 = vmatpush1.bf16.msra.mxu0 %v1460
        %1477 = vmatprep.subr.bf16.mxu0 0
        %1478 = vmatpush1.bf16.msra.mxu0 0
        %1479 = vmatprep.subr.bf16.mxu0 0
        %1480 = vmatpush1.bf16.msra.mxu0 0
        %1481 = vmatprep.subr.bf16.mxu0 0
        %1482 = vmatpush1.bf16.msra.mxu0 0
        %1483 = vmatprep.subr.bf16.mxu0 0
        %1484 = vmatpush1.bf16.msra.mxu0 0
        %1485 = vmatprep.subr.bf16.mxu0 0
        %1486 = vmatpush1.bf16.msra.mxu0 0
        %1487 = vmatprep.subr.bf16.mxu0 0
        %1488 = vmatpush1.bf16.msra.mxu0 0
        %1489 = vmatprep.subr.bf16.mxu0 0
        %1490 = vmatpush1.bf16.msra.mxu0 0
        %1491 = vmatprep.subr.bf16.mxu0 0
        %1492 = vmatpush1.bf16.msra.mxu0 0
        %1493 = vmatprep.mubr.bf16.mxu0 0
        %1494 = vmatmul.mubr.bf16.gmra.mrb[0].mxu0 %v327
        %v1495 = vpop.f32.mrb[0].mxu0
        %v1496 = vadd.f32 0.0, %v1495
        %v1497 = vpop.f32.mrb[0].mxu0
        %v1498 = vpop.f32.mrb[0].mxu0
        %v1499 = vadd.f32 0.0, %v1498
        %v1500 = vpop.f32.mrb[0].mxu0
        %1501 = vdwg.mxu0
        %s1502 = scalar_lea.vmem %s4, 384
        %v1503 = vld [vmem:[%s1502] sm:$0xff]
        %v1504 = vld [vmem:[%s1502 + $0x8] sm:$0xff]
        %v1505 = vld [vmem:[%s1502 + $0x10] sm:$0xff]
        %v1506 = vld [vmem:[%s1502 + $0x18] sm:$0xff]
        %v1507 = vld [vmem:[%s1502 + $0x20] sm:$0xff]
        %v1508 = vld [vmem:[%s1502 + $0x28] sm:$0xff]
        %v1509 = vld [vmem:[%s1502 + $0x30] sm:$0xff]
        %v1510 = vld [vmem:[%s1502 + $0x38] sm:$0xff]
        %v1511 = vld [vmem:[%s1502 + $0x40] sm:$0xff]
        %v1512 = vld [vmem:[%s1502 + $0x48] sm:$0xff]
        %v1513 = vld [vmem:[%s1502 + $0x50] sm:$0xff]
        %v1514 = vld [vmem:[%s1502 + $0x58] sm:$0xff]
        %v1515 = vld [vmem:[%s1502 + $0x60] sm:$0xff]
        %v1516 = vld [vmem:[%s1502 + $0x68] sm:$0xff]
        %v1517 = vld [vmem:[%s1502 + $0x70] sm:$0xff]
        %v1518 = vld [vmem:[%s1502 + $0x78] sm:$0xff]
        %v1519 = vpack.c.bf16 %v1504, %v1503
        %v1520 = vpack.c.bf16 %v1506, %v1505
        %v1521 = vpack.c.bf16 %v1508, %v1507
        %v1522 = vpack.c.bf16 %v1510, %v1509
        %v1523 = vpack.c.bf16 %v1512, %v1511
        %v1524 = vpack.c.bf16 %v1514, %v1513
        %v1525 = vpack.c.bf16 %v1516, %v1515
        %v1526 = vpack.c.bf16 %v1518, %v1517
        %1527 = vmatprep.subr.bf16.mxu0 0
        %1528 = vmatpush1.bf16.msra.mxu0 %v1519
        %1529 = vmatprep.subr.bf16.mxu0 0
        %1530 = vmatpush1.bf16.msra.mxu0 %v1520
        %1531 = vmatprep.subr.bf16.mxu0 0
        %1532 = vmatpush1.bf16.msra.mxu0 %v1521
        %1533 = vmatprep.subr.bf16.mxu0 0
        %1534 = vmatpush1.bf16.msra.mxu0 %v1522
        %1535 = vmatprep.subr.bf16.mxu0 0
        %1536 = vmatpush1.bf16.msra.mxu0 %v1523
        %1537 = vmatprep.subr.bf16.mxu0 0
        %1538 = vmatpush1.bf16.msra.mxu0 %v1524
        %1539 = vmatprep.subr.bf16.mxu0 0
        %1540 = vmatpush1.bf16.msra.mxu0 %v1525
        %1541 = vmatprep.subr.bf16.mxu0 0
        %1542 = vmatpush1.bf16.msra.mxu0 %v1526
        %1543 = vmatprep.subr.bf16.mxu0 0
        %1544 = vmatpush1.bf16.msra.mxu0 0
        %1545 = vmatprep.subr.bf16.mxu0 0
        %1546 = vmatpush1.bf16.msra.mxu0 0
        %1547 = vmatprep.subr.bf16.mxu0 0
        %1548 = vmatpush1.bf16.msra.mxu0 0
        %1549 = vmatprep.subr.bf16.mxu0 0
        %1550 = vmatpush1.bf16.msra.mxu0 0
        %1551 = vmatprep.subr.bf16.mxu0 0
        %1552 = vmatpush1.bf16.msra.mxu0 0
        %1553 = vmatprep.subr.bf16.mxu0 0
        %1554 = vmatpush1.bf16.msra.mxu0 0
        %1555 = vmatprep.subr.bf16.mxu0 0
        %1556 = vmatpush1.bf16.msra.mxu0 0
        %1557 = vmatprep.subr.bf16.mxu0 0
        %1558 = vmatpush1.bf16.msra.mxu0 0
        %1559 = vmatprep.mubr.bf16.mxu0 0
        %1560 = vmatmul.mubr.bf16.gmra.mrb[0].mxu0 %v330
        %v1561 = vpop.f32.mrb[0].mxu0
        %v1562 = vadd.f32 0.0, %v1561
        %v1563 = vpop.f32.mrb[0].mxu0
        %v1564 = vpop.f32.mrb[0].mxu0
        %v1565 = vadd.f32 0.0, %v1564
        %v1566 = vpop.f32.mrb[0].mxu0
        %1567 = vdwg.mxu0
        %s1568 = scalar_lea.vmem %s5, 384
        %v1569 = vld [vmem:[%s1568] sm:$0xff]
        %v1570 = vld [vmem:[%s1568 + $0x8] sm:$0xff]
        %v1571 = vld [vmem:[%s1568 + $0x10] sm:$0xff]
        %v1572 = vld [vmem:[%s1568 + $0x18] sm:$0xff]
        %v1573 = vld [vmem:[%s1568 + $0x20] sm:$0xff]
        %v1574 = vld [vmem:[%s1568 + $0x28] sm:$0xff]
        %v1575 = vld [vmem:[%s1568 + $0x30] sm:$0xff]
        %v1576 = vld [vmem:[%s1568 + $0x38] sm:$0xff]
        %v1577 = vld [vmem:[%s1568 + $0x40] sm:$0xff]
        %v1578 = vld [vmem:[%s1568 + $0x48] sm:$0xff]
        %v1579 = vld [vmem:[%s1568 + $0x50] sm:$0xff]
        %v1580 = vld [vmem:[%s1568 + $0x58] sm:$0xff]
        %v1581 = vld [vmem:[%s1568 + $0x60] sm:$0xff]
        %v1582 = vld [vmem:[%s1568 + $0x68] sm:$0xff]
        %v1583 = vld [vmem:[%s1568 + $0x70] sm:$0xff]
        %v1584 = vld [vmem:[%s1568 + $0x78] sm:$0xff]
        %v1585 = vpack.c.bf16 %v1570, %v1569
        %v1586 = vpack.c.bf16 %v1572, %v1571
        %v1587 = vpack.c.bf16 %v1574, %v1573
        %v1588 = vpack.c.bf16 %v1576, %v1575
        %v1589 = vpack.c.bf16 %v1578, %v1577
        %v1590 = vpack.c.bf16 %v1580, %v1579
        %v1591 = vpack.c.bf16 %v1582, %v1581
        %v1592 = vpack.c.bf16 %v1584, %v1583
        %1593 = vmatprep.subr.bf16.mxu0 0
        %1594 = vmatpush1.bf16.msra.mxu0 %v1585
        %1595 = vmatprep.subr.bf16.mxu0 0
        %1596 = vmatpush1.bf16.msra.mxu0 %v1586
        %1597 = vmatprep.subr.bf16.mxu0 0
        %1598 = vmatpush1.bf16.msra.mxu0 %v1587
        %1599 = vmatprep.subr.bf16.mxu0 0
        %1600 = vmatpush1.bf16.msra.mxu0 %v1588
        %1601 = vmatprep.subr.bf16.mxu0 0
        %1602 = vmatpush1.bf16.msra.mxu0 %v1589
        %1603 = vmatprep.subr.bf16.mxu0 0
        %1604 = vmatpush1.bf16.msra.mxu0 %v1590
        %1605 = vmatprep.subr.bf16.mxu0 0
        %1606 = vmatpush1.bf16.msra.mxu0 %v1591
        %1607 = vmatprep.subr.bf16.mxu0 0
        %1608 = vmatpush1.bf16.msra.mxu0 %v1592
        %1609 = vmatprep.subr.bf16.mxu0 0
        %1610 = vmatpush1.bf16.msra.mxu0 0
        %1611 = vmatprep.subr.bf16.mxu0 0
        %1612 = vmatpush1.bf16.msra.mxu0 0
        %1613 = vmatprep.subr.bf16.mxu0 0
        %1614 = vmatpush1.bf16.msra.mxu0 0
        %1615 = vmatprep.subr.bf16.mxu0 0
        %1616 = vmatpush1.bf16.msra.mxu0 0
        %1617 = vmatprep.subr.bf16.mxu0 0
        %1618 = vmatpush1.bf16.msra.mxu0 0
        %1619 = vmatprep.subr.bf16.mxu0 0
        %1620 = vmatpush1.bf16.msra.mxu0 0
        %1621 = vmatprep.subr.bf16.mxu0 0
        %1622 = vmatpush1.bf16.msra.mxu0 0
        %1623 = vmatprep.subr.bf16.mxu0 0
        %1624 = vmatpush1.bf16.msra.mxu0 0
        %1625 = vmatprep.mubr.bf16.mxu0 0
        %1626 = vmatmul.mubr.bf16.gmra.mrb[0].mxu0 %v330
        %v1627 = vpop.f32.mrb[0].mxu0
        %v1628 = vadd.f32 0.0, %v1627
        %v1629 = vpop.f32.mrb[0].mxu0
        %v1630 = vpop.f32.mrb[0].mxu0
        %v1631 = vadd.f32 0.0, %v1630
        %v1632 = vpop.f32.mrb[0].mxu0
        %1633 = vdwg.mxu0
        %v1634 = vpack.c.bf16 %v1499, %v1496
        %v1635 = vpack.c.bf16 %v1565, %v1562
        %v1637 = vsel %vm530, %v1634, 0
        %v1640 = vsel %vm530, %v1635, 0
        %1642 = vmatprep.subr.bf16.mxu0 0
        %1643 = vmatpush1.bf16.xpose.msra.mxu0 %v1640
        %1644 = vmatprep.subr.bf16.mxu0 0
        %1645 = vmatpush1.bf16.xpose.msra.mxu0 0
        %1646 = vmatprep.subr.bf16.mxu0 0
        %1647 = vmatpush1.bf16.xpose.msra.mxu0 0
        %1648 = vmatprep.subr.bf16.mxu0 0
        %1649 = vmatpush1.bf16.xpose.msra.mxu0 0
        %1650 = vmatprep.subr.bf16.mxu0 0
        %1651 = vmatpush1.bf16.xpose.msra.mxu0 0
        %1652 = vmatprep.subr.bf16.mxu0 0
        %1653 = vmatpush1.bf16.xpose.msra.mxu0 0
        %1654 = vmatprep.subr.bf16.mxu0 0
        %1655 = vmatpush1.bf16.xpose.msra.mxu0 0
        %1656 = vmatprep.subr.bf16.mxu0 0
        %1657 = vmatpush1.bf16.xpose.msra.mxu0 0
        %1658 = vmatprep.subr.bf16.mxu0 0
        %1659 = vmatpush1.bf16.xpose.msra.mxu0 0
        %1660 = vmatprep.subr.bf16.mxu0 0
        %1661 = vmatpush1.bf16.xpose.msra.mxu0 0
        %1662 = vmatprep.subr.bf16.mxu0 0
        %1663 = vmatpush1.bf16.xpose.msra.mxu0 0
        %1664 = vmatprep.subr.bf16.mxu0 0
        %1665 = vmatpush1.bf16.xpose.msra.mxu0 0
        %1666 = vmatprep.subr.bf16.mxu0 0
        %1667 = vmatpush1.bf16.xpose.msra.mxu0 0
        %1668 = vmatprep.subr.bf16.mxu0 0
        %1669 = vmatpush1.bf16.xpose.msra.mxu0 0
        %1670 = vmatprep.subr.bf16.mxu0 0
        %1671 = vmatpush1.bf16.xpose.msra.mxu0 0
        %1672 = vmatprep.subr.bf16.mxu0 0
        %1673 = vmatpush1.bf16.xpose.msra.mxu0 0
        %1674 = vmatprep.mubr.bf16.mxu0 0
        %1675 = vmatmul.mubr.bf16.gmra.mrb[0].mxu0 %v1637
        %v1676 = vpop.f32.mrb[0].mxu0
        %v1677 = vadd.f32 0.0, %v1676
        %v1678 = vpop.f32.mrb[0].mxu0
        %v1679 = vpop.f32.mrb[0].mxu0
        %v1680 = vadd.f32 0.0, %v1679
        %v1681 = vpop.f32.mrb[0].mxu0
        %1682 = vdwg.mxu0
        %v1683 = vmul.f32 %v1677, 0.25
        %v1684 = vmul.f32 %v1680, 0.25
        %v1685 = vadd.f32 %v1683, %v331
        %v1686 = vadd.f32 %v1684, %v332
        %v1687 = vsel %vm530, %v1685, -inf
        %1688 = vmax.xlane.f32.xlu0 %v1687
        %v1689 = vpop.xlane.xlu0 %1688
        %v1690 = vsel %vm530, %v1686, -inf
        %1691 = vmax.xlane.f32.xlu0 %v1690
        %v1692 = vpop.xlane.xlu0 %1691
        %v1693 = vsub.f32 %v1685, %v1689
        %v1694 = vsub.f32 %v1686, %v1692
        %v1695 = vmul.f32 %v1693, 1.442695
        %v1696 = vpow.pop %v1695
        %v1697 = vmul.f32 %v1694, 1.442695
        %v1698 = vpow.pop %v1697
        %v1699 = vsel %vm530, %v1696, 0.0
        %1700 = vadd.xlane.f32.xlu0 %v1699
        %v1701 = vpop.xlane.xlu0 %1700
        %v1702 = vsel %vm530, %v1698, 0.0
        %1703 = vadd.xlane.f32.xlu0 %v1702
        %v1704 = vpop.xlane.xlu0 %1703
        %v1705 = vrcp.pop %v1701
        %v1706 = vrcp.pop %v1704
        %v1707 = vmul.f32 %v1696, %v1705
        %v1708 = vmul.f32 %v1698, %v1706
        %v1709 = vpack.c.bf16 %v1708, %v1707
        %v1710 = vpack.c.bf16 %v1631, %v1628
        %v1712 = vsel %vm530, %v1709, 0
        %1714 = vmatprep.subr.bf16.mxu0 0
        %1715 = vmatpush1.bf16.msra.mxu0 %v1710
        %1716 = vmatprep.subr.bf16.mxu0 0
        %1717 = vmatpush1.bf16.msra.mxu0 0
        %1718 = vmatprep.subr.bf16.mxu0 0
        %1719 = vmatpush1.bf16.msra.mxu0 0
        %1720 = vmatprep.subr.bf16.mxu0 0
        %1721 = vmatpush1.bf16.msra.mxu0 0
        %1722 = vmatprep.subr.bf16.mxu0 0
        %1723 = vmatpush1.bf16.msra.mxu0 0
        %1724 = vmatprep.subr.bf16.mxu0 0
        %1725 = vmatpush1.bf16.msra.mxu0 0
        %1726 = vmatprep.subr.bf16.mxu0 0
        %1727 = vmatpush1.bf16.msra.mxu0 0
        %1728 = vmatprep.subr.bf16.mxu0 0
        %1729 = vmatpush1.bf16.msra.mxu0 0
        %1730 = vmatprep.subr.bf16.mxu0 0
        %1731 = vmatpush1.bf16.msra.mxu0 0
        %1732 = vmatprep.subr.bf16.mxu0 0
        %1733 = vmatpush1.bf16.msra.mxu0 0
        %1734 = vmatprep.subr.bf16.mxu0 0
        %1735 = vmatpush1.bf16.msra.mxu0 0
        %1736 = vmatprep.subr.bf16.mxu0 0
        %1737 = vmatpush1.bf16.msra.mxu0 0
        %1738 = vmatprep.subr.bf16.mxu0 0
        %1739 = vmatpush1.bf16.msra.mxu0 0
        %1740 = vmatprep.subr.bf16.mxu0 0
        %1741 = vmatpush1.bf16.msra.mxu0 0
        %1742 = vmatprep.subr.bf16.mxu0 0
        %1743 = vmatpush1.bf16.msra.mxu0 0
        %1744 = vmatprep.subr.bf16.mxu0 0
        %1745 = vmatpush1.bf16.msra.mxu0 0
        %1746 = vmatprep.mubr.bf16.mxu0 0
        %1747 = vmatmul.mubr.bf16.gmra.mrb[0].mxu0 %v1712
        %v1748 = vpop.f32.mrb[0].mxu0
        %v1749 = vadd.f32 0.0, %v1748
        %v1750 = vpop.f32.mrb[0].mxu0
        %v1751 = vpop.f32.mrb[0].mxu0
        %v1752 = vadd.f32 0.0, %v1751
        %v1753 = vpop.f32.mrb[0].mxu0
        %1754 = vdwg.mxu0
        %v1755 = vpack.c.bf16 %v1752, %v1749
        %s1756 = scalar_lea.vmem %s6, 48
        %v1757 = vld [vmem:[%s1756] sm:$0xff]
        %v1758 = vld [vmem:[%s1756 + $0x8] sm:$0xff]
        %v1759 = vpack.c.bf16 %v1758, %v1757
        %v1761 = vsel %vm530, %v1755, 0
        %1763 = vmatprep.subr.bf16.mxu0 0
        %1764 = vmatpush1.bf16.msra.mxu0 %v1759
        %1765 = vmatprep.subr.bf16.mxu0 0
        %1766 = vmatpush1.bf16.msra.mxu0 0
        %1767 = vmatprep.subr.bf16.mxu0 0
        %1768 = vmatpush1.bf16.msra.mxu0 0
        %1769 = vmatprep.subr.bf16.mxu0 0
        %1770 = vmatpush1.bf16.msra.mxu0 0
        %1771 = vmatprep.subr.bf16.mxu0 0
        %1772 = vmatpush1.bf16.msra.mxu0 0
        %1773 = vmatprep.subr.bf16.mxu0 0
        %1774 = vmatpush1.bf16.msra.mxu0 0
        %1775 = vmatprep.subr.bf16.mxu0 0
        %1776 = vmatpush1.bf16.msra.mxu0 0
        %1777 = vmatprep.subr.bf16.mxu0 0
        %1778 = vmatpush1.bf16.msra.mxu0 0
        %1779 = vmatprep.subr.bf16.mxu0 0
        %1780 = vmatpush1.bf16.msra.mxu0 0
        %1781 = vmatprep.subr.bf16.mxu0 0
        %1782 = vmatpush1.bf16.msra.mxu0 0
        %1783 = vmatprep.subr.bf16.mxu0 0
        %1784 = vmatpush1.bf16.msra.mxu0 0
        %1785 = vmatprep.subr.bf16.mxu0 0
        %1786 = vmatpush1.bf16.msra.mxu0 0
        %1787 = vmatprep.subr.bf16.mxu0 0
        %1788 = vmatpush1.bf16.msra.mxu0 0
        %1789 = vmatprep.subr.bf16.mxu0 0
        %1790 = vmatpush1.bf16.msra.mxu0 0
        %1791 = vmatprep.subr.bf16.mxu0 0
        %1792 = vmatpush1.bf16.msra.mxu0 0
        %1793 = vmatprep.subr.bf16.mxu0 0
        %1794 = vmatpush1.bf16.msra.mxu0 0
        %1795 = vmatprep.mubr.bf16.mxu0 0
        %1796 = vmatmul.mubr.bf16.gmra.mrb[0].mxu0 %v1761
        %v1797 = vpop.f32.mrb[0].mxu0
        %v1798 = vadd.f32 0.0, %v1797
        %v1799 = vpop.f32.mrb[0].mxu0
        %v1800 = vpop.f32.mrb[0].mxu0
        %v1801 = vadd.f32 0.0, %v1800
        %v1802 = vpop.f32.mrb[0].mxu0
        %1803 = vdwg.mxu0
        %v1804 = vadd.f32 %v1434, %v1798
        %v1805 = vadd.f32 %v1435, %v1801
        %s1806 = scalar_lea.vmem %s3, 512
        %v1807 = vld [vmem:[%s1806] sm:$0xff]
        %v1808 = vld [vmem:[%s1806 + $0x8] sm:$0xff]
        %v1809 = vld [vmem:[%s1806 + $0x10] sm:$0xff]
        %v1810 = vld [vmem:[%s1806 + $0x18] sm:$0xff]
        %v1811 = vld [vmem:[%s1806 + $0x20] sm:$0xff]
        %v1812 = vld [vmem:[%s1806 + $0x28] sm:$0xff]
        %v1813 = vld [vmem:[%s1806 + $0x30] sm:$0xff]
        %v1814 = vld [vmem:[%s1806 + $0x38] sm:$0xff]
        %v1815 = vld [vmem:[%s1806 + $0x40] sm:$0xff]
        %v1816 = vld [vmem:[%s1806 + $0x48] sm:$0xff]
        %v1817 = vld [vmem:[%s1806 + $0x50] sm:$0xff]
        %v1818 = vld [vmem:[%s1806 + $0x58] sm:$0xff]
        %v1819 = vld [vmem:[%s1806 + $0x60] sm:$0xff]
        %v1820 = vld [vmem:[%s1806 + $0x68] sm:$0xff]
        %v1821 = vld [vmem:[%s1806 + $0x70] sm:$0xff]
        %v1822 = vld [vmem:[%s1806 + $0x78] sm:$0xff]
        %v1823 = vpack.c.bf16 %v1808, %v1807
        %v1824 = vpack.c.bf16 %v1810, %v1809
        %v1825 = vpack.c.bf16 %v1812, %v1811
        %v1826 = vpack.c.bf16 %v1814, %v1813
        %v1827 = vpack.c.bf16 %v1816, %v1815
        %v1828 = vpack.c.bf16 %v1818, %v1817
        %v1829 = vpack.c.bf16 %v1820, %v1819
        %v1830 = vpack.c.bf16 %v1822, %v1821
        %1831 = vmatprep.subr.bf16.mxu0 0
        %1832 = vmatpush1.bf16.msra.mxu0 %v1823
        %1833 = vmatprep.subr.bf16.mxu0 0
        %1834 = vmatpush1.bf16.msra.mxu0 %v1824
        %1835 = vmatprep.subr.bf16.mxu0 0
        %1836 = vmatpush1.bf16.msra.mxu0 %v1825
        %1837 = vmatprep.subr.bf16.mxu0 0
        %1838 = vmatpush1.bf16.msra.mxu0 %v1826
        %1839 = vmatprep.subr.bf16.mxu0 0
        %1840 = vmatpush1.bf16.msra.mxu0 %v1827
        %1841 = vmatprep.subr.bf16.mxu0 0
        %1842 = vmatpush1.bf16.msra.mxu0 %v1828
        %1843 = vmatprep.subr.bf16.mxu0 0
        %1844 = vmatpush1.bf16.msra.mxu0 %v1829
        %1845 = vmatprep.subr.bf16.mxu0 0
        %1846 = vmatpush1.bf16.msra.mxu0 %v1830
        %1847 = vmatprep.subr.bf16.mxu0 0
        %1848 = vmatpush1.bf16.msra.mxu0 0
        %1849 = vmatprep.subr.bf16.mxu0 0
        %1850 = vmatpush1.bf16.msra.mxu0 0
        %1851 = vmatprep.subr.bf16.mxu0 0
        %1852 = vmatpush1.bf16.msra.mxu0 0
        %1853 = vmatprep.subr.bf16.mxu0 0
        %1854 = vmatpush1.bf16.msra.mxu0 0
        %1855 = vmatprep.subr.bf16.mxu0 0
        %1856 = vmatpush1.bf16.msra.mxu0 0
        %1857 = vmatprep.subr.bf16.mxu0 0
        %1858 = vmatpush1.bf16.msra.mxu0 0
        %1859 = vmatprep.subr.bf16.mxu0 0
        %1860 = vmatpush1.bf16.msra.mxu0 0
        %1861 = vmatprep.subr.bf16.mxu0 0
        %1862 = vmatpush1.bf16.msra.mxu0 0
        %1863 = vmatprep.mubr.bf16.mxu0 0
        %1864 = vmatmul.mubr.bf16.gmra.mrb[0].mxu0 %v327
        %v1865 = vpop.f32.mrb[0].mxu0
        %v1866 = vadd.f32 0.0, %v1865
        %v1867 = vpop.f32.mrb[0].mxu0
        %v1868 = vpop.f32.mrb[0].mxu0
        %v1869 = vadd.f32 0.0, %v1868
        %v1870 = vpop.f32.mrb[0].mxu0
        %1871 = vdwg.mxu0
        %s1872 = scalar_lea.vmem %s4, 512
        %v1873 = vld [vmem:[%s1872] sm:$0xff]
        %v1874 = vld [vmem:[%s1872 + $0x8] sm:$0xff]
        %v1875 = vld [vmem:[%s1872 + $0x10] sm:$0xff]
        %v1876 = vld [vmem:[%s1872 + $0x18] sm:$0xff]
        %v1877 = vld [vmem:[%s1872 + $0x20] sm:$0xff]
        %v1878 = vld [vmem:[%s1872 + $0x28] sm:$0xff]
        %v1879 = vld [vmem:[%s1872 + $0x30] sm:$0xff]
        %v1880 = vld [vmem:[%s1872 + $0x38] sm:$0xff]
        %v1881 = vld [vmem:[%s1872 + $0x40] sm:$0xff]
        %v1882 = vld [vmem:[%s1872 + $0x48] sm:$0xff]
        %v1883 = vld [vmem:[%s1872 + $0x50] sm:$0xff]
        %v1884 = vld [vmem:[%s1872 + $0x58] sm:$0xff]
        %v1885 = vld [vmem:[%s1872 + $0x60] sm:$0xff]
        %v1886 = vld [vmem:[%s1872 + $0x68] sm:$0xff]
        %v1887 = vld [vmem:[%s1872 + $0x70] sm:$0xff]
        %v1888 = vld [vmem:[%s1872 + $0x78] sm:$0xff]
        %v1889 = vpack.c.bf16 %v1874, %v1873
        %v1890 = vpack.c.bf16 %v1876, %v1875
        %v1891 = vpack.c.bf16 %v1878, %v1877
        %v1892 = vpack.c.bf16 %v1880, %v1879
        %v1893 = vpack.c.bf16 %v1882, %v1881
        %v1894 = vpack.c.bf16 %v1884, %v1883
        %v1895 = vpack.c.bf16 %v1886, %v1885
        %v1896 = vpack.c.bf16 %v1888, %v1887
        %1897 = vmatprep.subr.bf16.mxu0 0
        %1898 = vmatpush1.bf16.msra.mxu0 %v1889
        %1899 = vmatprep.subr.bf16.mxu0 0
        %1900 = vmatpush1.bf16.msra.mxu0 %v1890
        %1901 = vmatprep.subr.bf16.mxu0 0
        %1902 = vmatpush1.bf16.msra.mxu0 %v1891
        %1903 = vmatprep.subr.bf16.mxu0 0
        %1904 = vmatpush1.bf16.msra.mxu0 %v1892
        %1905 = vmatprep.subr.bf16.mxu0 0
        %1906 = vmatpush1.bf16.msra.mxu0 %v1893
        %1907 = vmatprep.subr.bf16.mxu0 0
        %1908 = vmatpush1.bf16.msra.mxu0 %v1894
        %1909 = vmatprep.subr.bf16.mxu0 0
        %1910 = vmatpush1.bf16.msra.mxu0 %v1895
        %1911 = vmatprep.subr.bf16.mxu0 0
        %1912 = vmatpush1.bf16.msra.mxu0 %v1896
        %1913 = vmatprep.subr.bf16.mxu0 0
        %1914 = vmatpush1.bf16.msra.mxu0 0
        %1915 = vmatprep.subr.bf16.mxu0 0
        %1916 = vmatpush1.bf16.msra.mxu0 0
        %1917 = vmatprep.subr.bf16.mxu0 0
        %1918 = vmatpush1.bf16.msra.mxu0 0
        %1919 = vmatprep.subr.bf16.mxu0 0
        %1920 = vmatpush1.bf16.msra.mxu0 0
        %1921 = vmatprep.subr.bf16.mxu0 0
        %1922 = vmatpush1.bf16.msra.mxu0 0
        %1923 = vmatprep.subr.bf16.mxu0 0
        %1924 = vmatpush1.bf16.msra.mxu0 0
        %1925 = vmatprep.subr.bf16.mxu0 0
        %1926 = vmatpush1.bf16.msra.mxu0 0
        %1927 = vmatprep.subr.bf16.mxu0 0
        %1928 = vmatpush1.bf16.msra.mxu0 0
        %1929 = vmatprep.mubr.bf16.mxu0 0
        %1930 = vmatmul.mubr.bf16.gmra.mrb[0].mxu0 %v330
        %v1931 = vpop.f32.mrb[0].mxu0
        %v1932 = vadd.f32 0.0, %v1931
        %v1933 = vpop.f32.mrb[0].mxu0
        %v1934 = vpop.f32.mrb[0].mxu0
        %v1935 = vadd.f32 0.0, %v1934
        %v1936 = vpop.f32.mrb[0].mxu0
        %1937 = vdwg.mxu0
        %s1938 = scalar_lea.vmem %s5, 512
        %v1939 = vld [vmem:[%s1938] sm:$0xff]
        %v1940 = vld [vmem:[%s1938 + $0x8] sm:$0xff]
        %v1941 = vld [vmem:[%s1938 + $0x10] sm:$0xff]
        %v1942 = vld [vmem:[%s1938 + $0x18] sm:$0xff]
        %v1943 = vld [vmem:[%s1938 + $0x20] sm:$0xff]
        %v1944 = vld [vmem:[%s1938 + $0x28] sm:$0xff]
        %v1945 = vld [vmem:[%s1938 + $0x30] sm:$0xff]
        %v1946 = vld [vmem:[%s1938 + $0x38] sm:$0xff]
        %v1947 = vld [vmem:[%s1938 + $0x40] sm:$0xff]
        %v1948 = vld [vmem:[%s1938 + $0x48] sm:$0xff]
        %v1949 = vld [vmem:[%s1938 + $0x50] sm:$0xff]
        %v1950 = vld [vmem:[%s1938 + $0x58] sm:$0xff]
        %v1951 = vld [vmem:[%s1938 + $0x60] sm:$0xff]
        %v1952 = vld [vmem:[%s1938 + $0x68] sm:$0xff]
        %v1953 = vld [vmem:[%s1938 + $0x70] sm:$0xff]
        %v1954 = vld [vmem:[%s1938 + $0x78] sm:$0xff]
        %v1955 = vpack.c.bf16 %v1940, %v1939
        %v1956 = vpack.c.bf16 %v1942, %v1941
        %v1957 = vpack.c.bf16 %v1944, %v1943
        %v1958 = vpack.c.bf16 %v1946, %v1945
        %v1959 = vpack.c.bf16 %v1948, %v1947
        %v1960 = vpack.c.bf16 %v1950, %v1949
        %v1961 = vpack.c.bf16 %v1952, %v1951
        %v1962 = vpack.c.bf16 %v1954, %v1953
        %1963 = vmatprep.subr.bf16.mxu0 0
        %1964 = vmatpush1.bf16.msra.mxu0 %v1955
        %1965 = vmatprep.subr.bf16.mxu0 0
        %1966 = vmatpush1.bf16.msra.mxu0 %v1956
        %1967 = vmatprep.subr.bf16.mxu0 0
        %1968 = vmatpush1.bf16.msra.mxu0 %v1957
        %1969 = vmatprep.subr.bf16.mxu0 0
        %1970 = vmatpush1.bf16.msra.mxu0 %v1958
        %1971 = vmatprep.subr.bf16.mxu0 0
        %1972 = vmatpush1.bf16.msra.mxu0 %v1959
        %1973 = vmatprep.subr.bf16.mxu0 0
        %1974 = vmatpush1.bf16.msra.mxu0 %v1960
        %1975 = vmatprep.subr.bf16.mxu0 0
        %1976 = vmatpush1.bf16.msra.mxu0 %v1961
        %1977 = vmatprep.subr.bf16.mxu0 0
        %1978 = vmatpush1.bf16.msra.mxu0 %v1962
        %1979 = vmatprep.subr.bf16.mxu0 0
        %1980 = vmatpush1.bf16.msra.mxu0 0
        %1981 = vmatprep.subr.bf16.mxu0 0
        %1982 = vmatpush1.bf16.msra.mxu0 0
        %1983 = vmatprep.subr.bf16.mxu0 0
        %1984 = vmatpush1.bf16.msra.mxu0 0
        %1985 = vmatprep.subr.bf16.mxu0 0
        %1986 = vmatpush1.bf16.msra.mxu0 0
        %1987 = vmatprep.subr.bf16.mxu0 0
        %1988 = vmatpush1.bf16.msra.mxu0 0
        %1989 = vmatprep.subr.bf16.mxu0 0
        %1990 = vmatpush1.bf16.msra.mxu0 0
        %1991 = vmatprep.subr.bf16.mxu0 0
        %1992 = vmatpush1.bf16.msra.mxu0 0
        %1993 = vmatprep.subr.bf16.mxu0 0
        %1994 = vmatpush1.bf16.msra.mxu0 0
        %1995 = vmatprep.mubr.bf16.mxu0 0
        %1996 = vmatmul.mubr.bf16.gmra.mrb[0].mxu0 %v330
        %v1997 = vpop.f32.mrb[0].mxu0
        %v1998 = vadd.f32 0.0, %v1997
        %v1999 = vpop.f32.mrb[0].mxu0
        %v2000 = vpop.f32.mrb[0].mxu0
        %v2001 = vadd.f32 0.0, %v2000
        %v2002 = vpop.f32.mrb[0].mxu0
        %2003 = vdwg.mxu0
        %v2004 = vpack.c.bf16 %v1869, %v1866
        %v2005 = vpack.c.bf16 %v1935, %v1932
        %v2007 = vsel %vm530, %v2004, 0
        %v2010 = vsel %vm530, %v2005, 0
        %2012 = vmatprep.subr.bf16.mxu0 0
        %2013 = vmatpush1.bf16.xpose.msra.mxu0 %v2010
        %2014 = vmatprep.subr.bf16.mxu0 0
        %2015 = vmatpush1.bf16.xpose.msra.mxu0 0
        %2016 = vmatprep.subr.bf16.mxu0 0
        %2017 = vmatpush1.bf16.xpose.msra.mxu0 0
        %2018 = vmatprep.subr.bf16.mxu0 0
        %2019 = vmatpush1.bf16.xpose.msra.mxu0 0
        %2020 = vmatprep.subr.bf16.mxu0 0
        %2021 = vmatpush1.bf16.xpose.msra.mxu0 0
        %2022 = vmatprep.subr.bf16.mxu0 0
        %2023 = vmatpush1.bf16.xpose.msra.mxu0 0
        %2024 = vmatprep.subr.bf16.mxu0 0
        %2025 = vmatpush1.bf16.xpose.msra.mxu0 0
        %2026 = vmatprep.subr.bf16.mxu0 0
        %2027 = vmatpush1.bf16.xpose.msra.mxu0 0
        %2028 = vmatprep.subr.bf16.mxu0 0
        %2029 = vmatpush1.bf16.xpose.msra.mxu0 0
        %2030 = vmatprep.subr.bf16.mxu0 0
        %2031 = vmatpush1.bf16.xpose.msra.mxu0 0
        %2032 = vmatprep.subr.bf16.mxu0 0
        %2033 = vmatpush1.bf16.xpose.msra.mxu0 0
        %2034 = vmatprep.subr.bf16.mxu0 0
        %2035 = vmatpush1.bf16.xpose.msra.mxu0 0
        %2036 = vmatprep.subr.bf16.mxu0 0
        %2037 = vmatpush1.bf16.xpose.msra.mxu0 0
        %2038 = vmatprep.subr.bf16.mxu0 0
        %2039 = vmatpush1.bf16.xpose.msra.mxu0 0
        %2040 = vmatprep.subr.bf16.mxu0 0
        %2041 = vmatpush1.bf16.xpose.msra.mxu0 0
        %2042 = vmatprep.subr.bf16.mxu0 0
        %2043 = vmatpush1.bf16.xpose.msra.mxu0 0
        %2044 = vmatprep.mubr.bf16.mxu0 0
        %2045 = vmatmul.mubr.bf16.gmra.mrb[0].mxu0 %v2007
        %v2046 = vpop.f32.mrb[0].mxu0
        %v2047 = vadd.f32 0.0, %v2046
        %v2048 = vpop.f32.mrb[0].mxu0
        %v2049 = vpop.f32.mrb[0].mxu0
        %v2050 = vadd.f32 0.0, %v2049
        %v2051 = vpop.f32.mrb[0].mxu0
        %2052 = vdwg.mxu0
        %v2053 = vmul.f32 %v2047, 0.25
        %v2054 = vmul.f32 %v2050, 0.25
        %v2055 = vadd.f32 %v2053, %v331
        %v2056 = vadd.f32 %v2054, %v332
        %v2057 = vsel %vm530, %v2055, -inf
        %2058 = vmax.xlane.f32.xlu0 %v2057
        %v2059 = vpop.xlane.xlu0 %2058
        %v2060 = vsel %vm530, %v2056, -inf
        %2061 = vmax.xlane.f32.xlu0 %v2060
        %v2062 = vpop.xlane.xlu0 %2061
        %v2063 = vsub.f32 %v2055, %v2059
        %v2064 = vsub.f32 %v2056, %v2062
        %v2065 = vmul.f32 %v2063, 1.442695
        %v2066 = vpow.pop %v2065
        %v2067 = vmul.f32 %v2064, 1.442695
        %v2068 = vpow.pop %v2067
        %v2069 = vsel %vm530, %v2066, 0.0
        %2070 = vadd.xlane.f32.xlu0 %v2069
        %v2071 = vpop.xlane.xlu0 %2070
        %v2072 = vsel %vm530, %v2068, 0.0
        %2073 = vadd.xlane.f32.xlu0 %v2072
        %v2074 = vpop.xlane.xlu0 %2073
        %v2075 = vrcp.pop %v2071
        %v2076 = vrcp.pop %v2074
        %v2077 = vmul.f32 %v2066, %v2075
        %v2078 = vmul.f32 %v2068, %v2076
        %v2079 = vpack.c.bf16 %v2078, %v2077
        %v2080 = vpack.c.bf16 %v2001, %v1998
        %v2082 = vsel %vm530, %v2079, 0
        %2084 = vmatprep.subr.bf16.mxu0 0
        %2085 = vmatpush1.bf16.msra.mxu0 %v2080
        %2086 = vmatprep.subr.bf16.mxu0 0
        %2087 = vmatpush1.bf16.msra.mxu0 0
        %2088 = vmatprep.subr.bf16.mxu0 0
        %2089 = vmatpush1.bf16.msra.mxu0 0
        %2090 = vmatprep.subr.bf16.mxu0 0
        %2091 = vmatpush1.bf16.msra.mxu0 0
        %2092 = vmatprep.subr.bf16.mxu0 0
        %2093 = vmatpush1.bf16.msra.mxu0 0
        %2094 = vmatprep.subr.bf16.mxu0 0
        %2095 = vmatpush1.bf16.msra.mxu0 0
        %2096 = vmatprep.subr.bf16.mxu0 0
        %2097 = vmatpush1.bf16.msra.mxu0 0
        %2098 = vmatprep.subr.bf16.mxu0 0
        %2099 = vmatpush1.bf16.msra.mxu0 0
        %2100 = vmatprep.subr.bf16.mxu0 0
        %2101 = vmatpush1.bf16.msra.mxu0 0
        %2102 = vmatprep.subr.bf16.mxu0 0
        %2103 = vmatpush1.bf16.msra.mxu0 0
        %2104 = vmatprep.subr.bf16.mxu0 0
        %2105 = vmatpush1.bf16.msra.mxu0 0
        %2106 = vmatprep.subr.bf16.mxu0 0
        %2107 = vmatpush1.bf16.msra.mxu0 0
        %2108 = vmatprep.subr.bf16.mxu0 0
        %2109 = vmatpush1.bf16.msra.mxu0 0
        %2110 = vmatprep.subr.bf16.mxu0 0
        %2111 = vmatpush1.bf16.msra.mxu0 0
        %2112 = vmatprep.subr.bf16.mxu0 0
        %2113 = vmatpush1.bf16.msra.mxu0 0
        %2114 = vmatprep.subr.bf16.mxu0 0
        %2115 = vmatpush1.bf16.msra.mxu0 0
        %2116 = vmatprep.mubr.bf16.mxu0 0
        %2117 = vmatmul.mubr.bf16.gmra.mrb[0].mxu0 %v2082
        %v2118 = vpop.f32.mrb[0].mxu0
        %v2119 = vadd.f32 0.0, %v2118
        %v2120 = vpop.f32.mrb[0].mxu0
        %v2121 = vpop.f32.mrb[0].mxu0
        %v2122 = vadd.f32 0.0, %v2121
        %v2123 = vpop.f32.mrb[0].mxu0
        %2124 = vdwg.mxu0
        %v2125 = vpack.c.bf16 %v2122, %v2119
        %s2126 = scalar_lea.vmem %s6, 64
        %v2127 = vld [vmem:[%s2126] sm:$0xff]
        %v2128 = vld [vmem:[%s2126 + $0x8] sm:$0xff]
        %v2129 = vpack.c.bf16 %v2128, %v2127
        %v2131 = vsel %vm530, %v2125, 0
        %2133 = vmatprep.subr.bf16.mxu0 0
        %2134 = vmatpush1.bf16.msra.mxu0 %v2129
        %2135 = vmatprep.subr.bf16.mxu0 0
        %2136 = vmatpush1.bf16.msra.mxu0 0
        %2137 = vmatprep.subr.bf16.mxu0 0
        %2138 = vmatpush1.bf16.msra.mxu0 0
        %2139 = vmatprep.subr.bf16.mxu0 0
        %2140 = vmatpush1.bf16.msra.mxu0 0
        %2141 = vmatprep.subr.bf16.mxu0 0
        %2142 = vmatpush1.bf16.msra.mxu0 0
        %2143 = vmatprep.subr.bf16.mxu0 0
        %2144 = vmatpush1.bf16.msra.mxu0 0
        %2145 = vmatprep.subr.bf16.mxu0 0
        %2146 = vmatpush1.bf16.msra.mxu0 0
        %2147 = vmatprep.subr.bf16.mxu0 0
        %2148 = vmatpush1.bf16.msra.mxu0 0
        %2149 = vmatprep.subr.bf16.mxu0 0
        %2150 = vmatpush1.bf16.msra.mxu0 0
        %2151 = vmatprep.subr.bf16.mxu0 0
        %2152 = vmatpush1.bf16.msra.mxu0 0
        %2153 = vmatprep.subr.bf16.mxu0 0
        %2154 = vmatpush1.bf16.msra.mxu0 0
        %2155 = vmatprep.subr.bf16.mxu0 0
        %2156 = vmatpush1.bf16.msra.mxu0 0
        %2157 = vmatprep.subr.bf16.mxu0 0
        %2158 = vmatpush1.bf16.msra.mxu0 0
        %2159 = vmatprep.subr.bf16.mxu0 0
        %2160 = vmatpush1.bf16.msra.mxu0 0
        %2161 = vmatprep.subr.bf16.mxu0 0
        %2162 = vmatpush1.bf16.msra.mxu0 0
        %2163 = vmatprep.subr.bf16.mxu0 0
        %2164 = vmatpush1.bf16.msra.mxu0 0
        %2165 = vmatprep.mubr.bf16.mxu0 0
        %2166 = vmatmul.mubr.bf16.gmra.mrb[0].mxu0 %v2131
        %v2167 = vpop.f32.mrb[0].mxu0
        %v2168 = vadd.f32 0.0, %v2167
        %v2169 = vpop.f32.mrb[0].mxu0
        %v2170 = vpop.f32.mrb[0].mxu0
        %v2171 = vadd.f32 0.0, %v2170
        %v2172 = vpop.f32.mrb[0].mxu0
        %2173 = vdwg.mxu0
        %v2174 = vadd.f32 %v1804, %v2168
        %v2175 = vadd.f32 %v1805, %v2171
        %s2176 = scalar_lea.vmem %s3, 640
        %v2177 = vld [vmem:[%s2176] sm:$0xff]
        %v2178 = vld [vmem:[%s2176 + $0x8] sm:$0xff]
        %v2179 = vld [vmem:[%s2176 + $0x10] sm:$0xff]
        %v2180 = vld [vmem:[%s2176 + $0x18] sm:$0xff]
        %v2181 = vld [vmem:[%s2176 + $0x20] sm:$0xff]
        %v2182 = vld [vmem:[%s2176 + $0x28] sm:$0xff]
        %v2183 = vld [vmem:[%s2176 + $0x30] sm:$0xff]
        %v2184 = vld [vmem:[%s2176 + $0x38] sm:$0xff]
        %v2185 = vld [vmem:[%s2176 + $0x40] sm:$0xff]
        %v2186 = vld [vmem:[%s2176 + $0x48] sm:$0xff]
        %v2187 = vld [vmem:[%s2176 + $0x50] sm:$0xff]
        %v2188 = vld [vmem:[%s2176 + $0x58] sm:$0xff]
        %v2189 = vld [vmem:[%s2176 + $0x60] sm:$0xff]
        %v2190 = vld [vmem:[%s2176 + $0x68] sm:$0xff]
        %v2191 = vld [vmem:[%s2176 + $0x70] sm:$0xff]
        %v2192 = vld [vmem:[%s2176 + $0x78] sm:$0xff]
        %v2193 = vpack.c.bf16 %v2178, %v2177
        %v2194 = vpack.c.bf16 %v2180, %v2179
        %v2195 = vpack.c.bf16 %v2182, %v2181
        %v2196 = vpack.c.bf16 %v2184, %v2183
        %v2197 = vpack.c.bf16 %v2186, %v2185
        %v2198 = vpack.c.bf16 %v2188, %v2187
        %v2199 = vpack.c.bf16 %v2190, %v2189
        %v2200 = vpack.c.bf16 %v2192, %v2191
        %2201 = vmatprep.subr.bf16.mxu0 0
        %2202 = vmatpush1.bf16.msra.mxu0 %v2193
        %2203 = vmatprep.subr.bf16.mxu0 0
        %2204 = vmatpush1.bf16.msra.mxu0 %v2194
        %2205 = vmatprep.subr.bf16.mxu0 0
        %2206 = vmatpush1.bf16.msra.mxu0 %v2195
        %2207 = vmatprep.subr.bf16.mxu0 0
        %2208 = vmatpush1.bf16.msra.mxu0 %v2196
        %2209 = vmatprep.subr.bf16.mxu0 0
        %2210 = vmatpush1.bf16.msra.mxu0 %v2197
        %2211 = vmatprep.subr.bf16.mxu0 0
        %2212 = vmatpush1.bf16.msra.mxu0 %v2198
        %2213 = vmatprep.subr.bf16.mxu0 0
        %2214 = vmatpush1.bf16.msra.mxu0 %v2199
        %2215 = vmatprep.subr.bf16.mxu0 0
        %2216 = vmatpush1.bf16.msra.mxu0 %v2200
        %2217 = vmatprep.subr.bf16.mxu0 0
        %2218 = vmatpush1.bf16.msra.mxu0 0
        %2219 = vmatprep.subr.bf16.mxu0 0
        %2220 = vmatpush1.bf16.msra.mxu0 0
        %2221 = vmatprep.subr.bf16.mxu0 0
        %2222 = vmatpush1.bf16.msra.mxu0 0
        %2223 = vmatprep.subr.bf16.mxu0 0
        %2224 = vmatpush1.bf16.msra.mxu0 0
        %2225 = vmatprep.subr.bf16.mxu0 0
        %2226 = vmatpush1.bf16.msra.mxu0 0
        %2227 = vmatprep.subr.bf16.mxu0 0
        %2228 = vmatpush1.bf16.msra.mxu0 0
        %2229 = vmatprep.subr.bf16.mxu0 0
        %2230 = vmatpush1.bf16.msra.mxu0 0
        %2231 = vmatprep.subr.bf16.mxu0 0
        %2232 = vmatpush1.bf16.msra.mxu0 0
        %2233 = vmatprep.mubr.bf16.mxu0 0
        %2234 = vmatmul.mubr.bf16.gmra.mrb[0].mxu0 %v327
        %v2235 = vpop.f32.mrb[0].mxu0
        %v2236 = vadd.f32 0.0, %v2235
        %v2237 = vpop.f32.mrb[0].mxu0
        %v2238 = vpop.f32.mrb[0].mxu0
        %v2239 = vadd.f32 0.0, %v2238
        %v2240 = vpop.f32.mrb[0].mxu0
        %2241 = vdwg.mxu0
        %s2242 = scalar_lea.vmem %s4, 640
        %v2243 = vld [vmem:[%s2242] sm:$0xff]
        %v2244 = vld [vmem:[%s2242 + $0x8] sm:$0xff]
        %v2245 = vld [vmem:[%s2242 + $0x10] sm:$0xff]
        %v2246 = vld [vmem:[%s2242 + $0x18] sm:$0xff]
        %v2247 = vld [vmem:[%s2242 + $0x20] sm:$0xff]
        %v2248 = vld [vmem:[%s2242 + $0x28] sm:$0xff]
        %v2249 = vld [vmem:[%s2242 + $0x30] sm:$0xff]
        %v2250 = vld [vmem:[%s2242 + $0x38] sm:$0xff]
        %v2251 = vld [vmem:[%s2242 + $0x40] sm:$0xff]
        %v2252 = vld [vmem:[%s2242 + $0x48] sm:$0xff]
        %v2253 = vld [vmem:[%s2242 + $0x50] sm:$0xff]
        %v2254 = vld [vmem:[%s2242 + $0x58] sm:$0xff]
        %v2255 = vld [vmem:[%s2242 + $0x60] sm:$0xff]
        %v2256 = vld [vmem:[%s2242 + $0x68] sm:$0xff]
        %v2257 = vld [vmem:[%s2242 + $0x70] sm:$0xff]
        %v2258 = vld [vmem:[%s2242 + $0x78] sm:$0xff]
        %v2259 = vpack.c.bf16 %v2244, %v2243
        %v2260 = vpack.c.bf16 %v2246, %v2245
        %v2261 = vpack.c.bf16 %v2248, %v2247
        %v2262 = vpack.c.bf16 %v2250, %v2249
        %v2263 = vpack.c.bf16 %v2252, %v2251
        %v2264 = vpack.c.bf16 %v2254, %v2253
        %v2265 = vpack.c.bf16 %v2256, %v2255
        %v2266 = vpack.c.bf16 %v2258, %v2257
        %2267 = vmatprep.subr.bf16.mxu0 0
        %2268 = vmatpush1.bf16.msra.mxu0 %v2259
        %2269 = vmatprep.subr.bf16.mxu0 0
        %2270 = vmatpush1.bf16.msra.mxu0 %v2260
        %2271 = vmatprep.subr.bf16.mxu0 0
        %2272 = vmatpush1.bf16.msra.mxu0 %v2261
        %2273 = vmatprep.subr.bf16.mxu0 0
        %2274 = vmatpush1.bf16.msra.mxu0 %v2262
        %2275 = vmatprep.subr.bf16.mxu0 0
        %2276 = vmatpush1.bf16.msra.mxu0 %v2263
        %2277 = vmatprep.subr.bf16.mxu0 0
        %2278 = vmatpush1.bf16.msra.mxu0 %v2264
        %2279 = vmatprep.subr.bf16.mxu0 0
        %2280 = vmatpush1.bf16.msra.mxu0 %v2265
        %2281 = vmatprep.subr.bf16.mxu0 0
        %2282 = vmatpush1.bf16.msra.mxu0 %v2266
        %2283 = vmatprep.subr.bf16.mxu0 0
        %2284 = vmatpush1.bf16.msra.mxu0 0
        %2285 = vmatprep.subr.bf16.mxu0 0
        %2286 = vmatpush1.bf16.msra.mxu0 0
        %2287 = vmatprep.subr.bf16.mxu0 0
        %2288 = vmatpush1.bf16.msra.mxu0 0
        %2289 = vmatprep.subr.bf16.mxu0 0
        %2290 = vmatpush1.bf16.msra.mxu0 0
        %2291 = vmatprep.subr.bf16.mxu0 0
        %2292 = vmatpush1.bf16.msra.mxu0 0
        %2293 = vmatprep.subr.bf16.mxu0 0
        %2294 = vmatpush1.bf16.msra.mxu0 0
        %2295 = vmatprep.subr.bf16.mxu0 0
        %2296 = vmatpush1.bf16.msra.mxu0 0
        %2297 = vmatprep.subr.bf16.mxu0 0
        %2298 = vmatpush1.bf16.msra.mxu0 0
        %2299 = vmatprep.mubr.bf16.mxu0 0
        %2300 = vmatmul.mubr.bf16.gmra.mrb[0].mxu0 %v330
        %v2301 = vpop.f32.mrb[0].mxu0
        %v2302 = vadd.f32 0.0, %v2301
        %v2303 = vpop.f32.mrb[0].mxu0
        %v2304 = vpop.f32.mrb[0].mxu0
        %v2305 = vadd.f32 0.0, %v2304
        %v2306 = vpop.f32.mrb[0].mxu0
        %2307 = vdwg.mxu0
        %s2308 = scalar_lea.vmem %s5, 640
        %v2309 = vld [vmem:[%s2308] sm:$0xff]
        %v2310 = vld [vmem:[%s2308 + $0x8] sm:$0xff]
        %v2311 = vld [vmem:[%s2308 + $0x10] sm:$0xff]
        %v2312 = vld [vmem:[%s2308 + $0x18] sm:$0xff]
        %v2313 = vld [vmem:[%s2308 + $0x20] sm:$0xff]
        %v2314 = vld [vmem:[%s2308 + $0x28] sm:$0xff]
        %v2315 = vld [vmem:[%s2308 + $0x30] sm:$0xff]
        %v2316 = vld [vmem:[%s2308 + $0x38] sm:$0xff]
        %v2317 = vld [vmem:[%s2308 + $0x40] sm:$0xff]
        %v2318 = vld [vmem:[%s2308 + $0x48] sm:$0xff]
        %v2319 = vld [vmem:[%s2308 + $0x50] sm:$0xff]
        %v2320 = vld [vmem:[%s2308 + $0x58] sm:$0xff]
        %v2321 = vld [vmem:[%s2308 + $0x60] sm:$0xff]
        %v2322 = vld [vmem:[%s2308 + $0x68] sm:$0xff]
        %v2323 = vld [vmem:[%s2308 + $0x70] sm:$0xff]
        %v2324 = vld [vmem:[%s2308 + $0x78] sm:$0xff]
        %v2325 = vpack.c.bf16 %v2310, %v2309
        %v2326 = vpack.c.bf16 %v2312, %v2311
        %v2327 = vpack.c.bf16 %v2314, %v2313
        %v2328 = vpack.c.bf16 %v2316, %v2315
        %v2329 = vpack.c.bf16 %v2318, %v2317
        %v2330 = vpack.c.bf16 %v2320, %v2319
        %v2331 = vpack.c.bf16 %v2322, %v2321
        %v2332 = vpack.c.bf16 %v2324, %v2323
        %2333 = vmatprep.subr.bf16.mxu0 0
        %2334 = vmatpush1.bf16.msra.mxu0 %v2325
        %2335 = vmatprep.subr.bf16.mxu0 0
        %2336 = vmatpush1.bf16.msra.mxu0 %v2326
        %2337 = vmatprep.subr.bf16.mxu0 0
        %2338 = vmatpush1.bf16.msra.mxu0 %v2327
        %2339 = vmatprep.subr.bf16.mxu0 0
        %2340 = vmatpush1.bf16.msra.mxu0 %v2328
        %2341 = vmatprep.subr.bf16.mxu0 0
        %2342 = vmatpush1.bf16.msra.mxu0 %v2329
        %2343 = vmatprep.subr.bf16.mxu0 0
        %2344 = vmatpush1.bf16.msra.mxu0 %v2330
        %2345 = vmatprep.subr.bf16.mxu0 0
        %2346 = vmatpush1.bf16.msra.mxu0 %v2331
        %2347 = vmatprep.subr.bf16.mxu0 0
        %2348 = vmatpush1.bf16.msra.mxu0 %v2332
        %2349 = vmatprep.subr.bf16.mxu0 0
        %2350 = vmatpush1.bf16.msra.mxu0 0
        %2351 = vmatprep.subr.bf16.mxu0 0
        %2352 = vmatpush1.bf16.msra.mxu0 0
        %2353 = vmatprep.subr.bf16.mxu0 0
        %2354 = vmatpush1.bf16.msra.mxu0 0
        %2355 = vmatprep.subr.bf16.mxu0 0
        %2356 = vmatpush1.bf16.msra.mxu0 0
        %2357 = vmatprep.subr.bf16.mxu0 0
        %2358 = vmatpush1.bf16.msra.mxu0 0
        %2359 = vmatprep.subr.bf16.mxu0 0
        %2360 = vmatpush1.bf16.msra.mxu0 0
        %2361 = vmatprep.subr.bf16.mxu0 0
        %2362 = vmatpush1.bf16.msra.mxu0 0
        %2363 = vmatprep.subr.bf16.mxu0 0
        %2364 = vmatpush1.bf16.msra.mxu0 0
        %2365 = vmatprep.mubr.bf16.mxu0 0
        %2366 = vmatmul.mubr.bf16.gmra.mrb[0].mxu0 %v330
        %v2367 = vpop.f32.mrb[0].mxu0
        %v2368 = vadd.f32 0.0, %v2367
        %v2369 = vpop.f32.mrb[0].mxu0
        %v2370 = vpop.f32.mrb[0].mxu0
        %v2371 = vadd.f32 0.0, %v2370
        %v2372 = vpop.f32.mrb[0].mxu0
        %2373 = vdwg.mxu0
        %v2374 = vpack.c.bf16 %v2239, %v2236
        %v2375 = vpack.c.bf16 %v2305, %v2302
        %v2377 = vsel %vm530, %v2374, 0
        %v2380 = vsel %vm530, %v2375, 0
        %2382 = vmatprep.subr.bf16.mxu0 0
        %2383 = vmatpush1.bf16.xpose.msra.mxu0 %v2380
        %2384 = vmatprep.subr.bf16.mxu0 0
        %2385 = vmatpush1.bf16.xpose.msra.mxu0 0
        %2386 = vmatprep.subr.bf16.mxu0 0
        %2387 = vmatpush1.bf16.xpose.msra.mxu0 0
        %2388 = vmatprep.subr.bf16.mxu0 0
        %2389 = vmatpush1.bf16.xpose.msra.mxu0 0
        %2390 = vmatprep.subr.bf16.mxu0 0
        %2391 = vmatpush1.bf16.xpose.msra.mxu0 0
        %2392 = vmatprep.subr.bf16.mxu0 0
        %2393 = vmatpush1.bf16.xpose.msra.mxu0 0
        %2394 = vmatprep.subr.bf16.mxu0 0
        %2395 = vmatpush1.bf16.xpose.msra.mxu0 0
        %2396 = vmatprep.subr.bf16.mxu0 0
        %2397 = vmatpush1.bf16.xpose.msra.mxu0 0
        %2398 = vmatprep.subr.bf16.mxu0 0
        %2399 = vmatpush1.bf16.xpose.msra.mxu0 0
        %2400 = vmatprep.subr.bf16.mxu0 0
        %2401 = vmatpush1.bf16.xpose.msra.mxu0 0
        %2402 = vmatprep.subr.bf16.mxu0 0
        %2403 = vmatpush1.bf16.xpose.msra.mxu0 0
        %2404 = vmatprep.subr.bf16.mxu0 0
        %2405 = vmatpush1.bf16.xpose.msra.mxu0 0
        %2406 = vmatprep.subr.bf16.mxu0 0
        %2407 = vmatpush1.bf16.xpose.msra.mxu0 0
        %2408 = vmatprep.subr.bf16.mxu0 0
        %2409 = vmatpush1.bf16.xpose.msra.mxu0 0
        %2410 = vmatprep.subr.bf16.mxu0 0
        %2411 = vmatpush1.bf16.xpose.msra.mxu0 0
        %2412 = vmatprep.subr.bf16.mxu0 0
        %2413 = vmatpush1.bf16.xpose.msra.mxu0 0
        %2414 = vmatprep.mubr.bf16.mxu0 0
        %2415 = vmatmul.mubr.bf16.gmra.mrb[0].mxu0 %v2377
        %v2416 = vpop.f32.mrb[0].mxu0
        %v2417 = vadd.f32 0.0, %v2416
        %v2418 = vpop.f32.mrb[0].mxu0
        %v2419 = vpop.f32.mrb[0].mxu0
        %v2420 = vadd.f32 0.0, %v2419
        %v2421 = vpop.f32.mrb[0].mxu0
        %2422 = vdwg.mxu0
        %v2423 = vmul.f32 %v2417, 0.25
        %v2424 = vmul.f32 %v2420, 0.25
        %v2425 = vadd.f32 %v2423, %v331
        %v2426 = vadd.f32 %v2424, %v332
        %v2427 = vsel %vm530, %v2425, -inf
        %2428 = vmax.xlane.f32.xlu0 %v2427
        %v2429 = vpop.xlane.xlu0 %2428
        %v2430 = vsel %vm530, %v2426, -inf
        %2431 = vmax.xlane.f32.xlu0 %v2430
        %v2432 = vpop.xlane.xlu0 %2431
        %v2433 = vsub.f32 %v2425, %v2429
        %v2434 = vsub.f32 %v2426, %v2432
        %v2435 = vmul.f32 %v2433, 1.442695
        %v2436 = vpow.pop %v2435
        %v2437 = vmul.f32 %v2434, 1.442695
        %v2438 = vpow.pop %v2437
        %v2439 = vsel %vm530, %v2436, 0.0
        %2440 = vadd.xlane.f32.xlu0 %v2439
        %v2441 = vpop.xlane.xlu0 %2440
        %v2442 = vsel %vm530, %v2438, 0.0
        %2443 = vadd.xlane.f32.xlu0 %v2442
        %v2444 = vpop.xlane.xlu0 %2443
        %v2445 = vrcp.pop %v2441
        %v2446 = vrcp.pop %v2444
        %v2447 = vmul.f32 %v2436, %v2445
        %v2448 = vmul.f32 %v2438, %v2446
        %v2449 = vpack.c.bf16 %v2448, %v2447
        %v2450 = vpack.c.bf16 %v2371, %v2368
        %v2452 = vsel %vm530, %v2449, 0
        %2454 = vmatprep.subr.bf16.mxu0 0
        %2455 = vmatpush1.bf16.msra.mxu0 %v2450
        %2456 = vmatprep.subr.bf16.mxu0 0
        %2457 = vmatpush1.bf16.msra.mxu0 0
        %2458 = vmatprep.subr.bf16.mxu0 0
        %2459 = vmatpush1.bf16.msra.mxu0 0
        %2460 = vmatprep.subr.bf16.mxu0 0
        %2461 = vmatpush1.bf16.msra.mxu0 0
        %2462 = vmatprep.subr.bf16.mxu0 0
        %2463 = vmatpush1.bf16.msra.mxu0 0
        %2464 = vmatprep.subr.bf16.mxu0 0
        %2465 = vmatpush1.bf16.msra.mxu0 0
        %2466 = vmatprep.subr.bf16.mxu0 0
        %2467 = vmatpush1.bf16.msra.mxu0 0
        %2468 = vmatprep.subr.bf16.mxu0 0
        %2469 = vmatpush1.bf16.msra.mxu0 0
        %2470 = vmatprep.subr.bf16.mxu0 0
        %2471 = vmatpush1.bf16.msra.mxu0 0
        %2472 = vmatprep.subr.bf16.mxu0 0
        %2473 = vmatpush1.bf16.msra.mxu0 0
        %2474 = vmatprep.subr.bf16.mxu0 0
        %2475 = vmatpush1.bf16.msra.mxu0 0
        %2476 = vmatprep.subr.bf16.mxu0 0
        %2477 = vmatpush1.bf16.msra.mxu0 0
        %2478 = vmatprep.subr.bf16.mxu0 0
        %2479 = vmatpush1.bf16.msra.mxu0 0
        %2480 = vmatprep.subr.bf16.mxu0 0
        %2481 = vmatpush1.bf16.msra.mxu0 0
        %2482 = vmatprep.subr.bf16.mxu0 0
        %2483 = vmatpush1.bf16.msra.mxu0 0
        %2484 = vmatprep.subr.bf16.mxu0 0
        %2485 = vmatpush1.bf16.msra.mxu0 0
        %2486 = vmatprep.mubr.bf16.mxu0 0
        %2487 = vmatmul.mubr.bf16.gmra.mrb[0].mxu0 %v2452
        %v2488 = vpop.f32.mrb[0].mxu0
        %v2489 = vadd.f32 0.0, %v2488
        %v2490 = vpop.f32.mrb[0].mxu0
        %v2491 = vpop.f32.mrb[0].mxu0
        %v2492 = vadd.f32 0.0, %v2491
        %v2493 = vpop.f32.mrb[0].mxu0
        %2494 = vdwg.mxu0
        %v2495 = vpack.c.bf16 %v2492, %v2489
        %s2496 = scalar_lea.vmem %s6, 80
        %v2497 = vld [vmem:[%s2496] sm:$0xff]
        %v2498 = vld [vmem:[%s2496 + $0x8] sm:$0xff]
        %v2499 = vpack.c.bf16 %v2498, %v2497
        %v2501 = vsel %vm530, %v2495, 0
        %2503 = vmatprep.subr.bf16.mxu0 0
        %2504 = vmatpush1.bf16.msra.mxu0 %v2499
        %2505 = vmatprep.subr.bf16.mxu0 0
        %2506 = vmatpush1.bf16.msra.mxu0 0
        %2507 = vmatprep.subr.bf16.mxu0 0
        %2508 = vmatpush1.bf16.msra.mxu0 0
        %2509 = vmatprep.subr.bf16.mxu0 0
        %2510 = vmatpush1.bf16.msra.mxu0 0
        %2511 = vmatprep.subr.bf16.mxu0 0
        %2512 = vmatpush1.bf16.msra.mxu0 0
        %2513 = vmatprep.subr.bf16.mxu0 0
        %2514 = vmatpush1.bf16.msra.mxu0 0
        %2515 = vmatprep.subr.bf16.mxu0 0
        %2516 = vmatpush1.bf16.msra.mxu0 0
        %2517 = vmatprep.subr.bf16.mxu0 0
        %2518 = vmatpush1.bf16.msra.mxu0 0
        %2519 = vmatprep.subr.bf16.mxu0 0
        %2520 = vmatpush1.bf16.msra.mxu0 0
        %2521 = vmatprep.subr.bf16.mxu0 0
        %2522 = vmatpush1.bf16.msra.mxu0 0
        %2523 = vmatprep.subr.bf16.mxu0 0
        %2524 = vmatpush1.bf16.msra.mxu0 0
        %2525 = vmatprep.subr.bf16.mxu0 0
        %2526 = vmatpush1.bf16.msra.mxu0 0
        %2527 = vmatprep.subr.bf16.mxu0 0
        %2528 = vmatpush1.bf16.msra.mxu0 0
        %2529 = vmatprep.subr.bf16.mxu0 0
        %2530 = vmatpush1.bf16.msra.mxu0 0
        %2531 = vmatprep.subr.bf16.mxu0 0
        %2532 = vmatpush1.bf16.msra.mxu0 0
        %2533 = vmatprep.subr.bf16.mxu0 0
        %2534 = vmatpush1.bf16.msra.mxu0 0
        %2535 = vmatprep.mubr.bf16.mxu0 0
        %2536 = vmatmul.mubr.bf16.gmra.mrb[0].mxu0 %v2501
        %v2537 = vpop.f32.mrb[0].mxu0
        %v2538 = vadd.f32 0.0, %v2537
        %v2539 = vpop.f32.mrb[0].mxu0
        %v2540 = vpop.f32.mrb[0].mxu0
        %v2541 = vadd.f32 0.0, %v2540
        %v2542 = vpop.f32.mrb[0].mxu0
        %2543 = vdwg.mxu0
        %v2544 = vadd.f32 %v2174, %v2538
        %v2545 = vadd.f32 %v2175, %v2541
        %s2546 = scalar_lea.vmem %s3, 768
        %v2547 = vld [vmem:[%s2546] sm:$0xff]
        %v2548 = vld [vmem:[%s2546 + $0x8] sm:$0xff]
        %v2549 = vld [vmem:[%s2546 + $0x10] sm:$0xff]
        %v2550 = vld [vmem:[%s2546 + $0x18] sm:$0xff]
        %v2551 = vld [vmem:[%s2546 + $0x20] sm:$0xff]
        %v2552 = vld [vmem:[%s2546 + $0x28] sm:$0xff]
        %v2553 = vld [vmem:[%s2546 + $0x30] sm:$0xff]
        %v2554 = vld [vmem:[%s2546 + $0x38] sm:$0xff]
        %v2555 = vld [vmem:[%s2546 + $0x40] sm:$0xff]
        %v2556 = vld [vmem:[%s2546 + $0x48] sm:$0xff]
        %v2557 = vld [vmem:[%s2546 + $0x50] sm:$0xff]
        %v2558 = vld [vmem:[%s2546 + $0x58] sm:$0xff]
        %v2559 = vld [vmem:[%s2546 + $0x60] sm:$0xff]
        %v2560 = vld [vmem:[%s2546 + $0x68] sm:$0xff]
        %v2561 = vld [vmem:[%s2546 + $0x70] sm:$0xff]
        %v2562 = vld [vmem:[%s2546 + $0x78] sm:$0xff]
        %v2563 = vpack.c.bf16 %v2548, %v2547
        %v2564 = vpack.c.bf16 %v2550, %v2549
        %v2565 = vpack.c.bf16 %v2552, %v2551
        %v2566 = vpack.c.bf16 %v2554, %v2553
        %v2567 = vpack.c.bf16 %v2556, %v2555
        %v2568 = vpack.c.bf16 %v2558, %v2557
        %v2569 = vpack.c.bf16 %v2560, %v2559
        %v2570 = vpack.c.bf16 %v2562, %v2561
        %2571 = vmatprep.subr.bf16.mxu0 0
        %2572 = vmatpush1.bf16.msra.mxu0 %v2563
        %2573 = vmatprep.subr.bf16.mxu0 0
        %2574 = vmatpush1.bf16.msra.mxu0 %v2564
        %2575 = vmatprep.subr.bf16.mxu0 0
        %2576 = vmatpush1.bf16.msra.mxu0 %v2565
        %2577 = vmatprep.subr.bf16.mxu0 0
        %2578 = vmatpush1.bf16.msra.mxu0 %v2566
        %2579 = vmatprep.subr.bf16.mxu0 0
        %2580 = vmatpush1.bf16.msra.mxu0 %v2567
        %2581 = vmatprep.subr.bf16.mxu0 0
        %2582 = vmatpush1.bf16.msra.mxu0 %v2568
        %2583 = vmatprep.subr.bf16.mxu0 0
        %2584 = vmatpush1.bf16.msra.mxu0 %v2569
        %2585 = vmatprep.subr.bf16.mxu0 0
        %2586 = vmatpush1.bf16.msra.mxu0 %v2570
        %2587 = vmatprep.subr.bf16.mxu0 0
        %2588 = vmatpush1.bf16.msra.mxu0 0
        %2589 = vmatprep.subr.bf16.mxu0 0
        %2590 = vmatpush1.bf16.msra.mxu0 0
        %2591 = vmatprep.subr.bf16.mxu0 0
        %2592 = vmatpush1.bf16.msra.mxu0 0
        %2593 = vmatprep.subr.bf16.mxu0 0
        %2594 = vmatpush1.bf16.msra.mxu0 0
        %2595 = vmatprep.subr.bf16.mxu0 0
        %2596 = vmatpush1.bf16.msra.mxu0 0
        %2597 = vmatprep.subr.bf16.mxu0 0
        %2598 = vmatpush1.bf16.msra.mxu0 0
        %2599 = vmatprep.subr.bf16.mxu0 0
        %2600 = vmatpush1.bf16.msra.mxu0 0
        %2601 = vmatprep.subr.bf16.mxu0 0
        %2602 = vmatpush1.bf16.msra.mxu0 0
        %2603 = vmatprep.mubr.bf16.mxu0 0
        %2604 = vmatmul.mubr.bf16.gmra.mrb[0].mxu0 %v327
        %v2605 = vpop.f32.mrb[0].mxu0
        %v2606 = vadd.f32 0.0, %v2605
        %v2607 = vpop.f32.mrb[0].mxu0
        %v2608 = vpop.f32.mrb[0].mxu0
        %v2609 = vadd.f32 0.0, %v2608
        %v2610 = vpop.f32.mrb[0].mxu0
        %2611 = vdwg.mxu0
        %s2612 = scalar_lea.vmem %s4, 768
        %v2613 = vld [vmem:[%s2612] sm:$0xff]
        %v2614 = vld [vmem:[%s2612 + $0x8] sm:$0xff]
        %v2615 = vld [vmem:[%s2612 + $0x10] sm:$0xff]
        %v2616 = vld [vmem:[%s2612 + $0x18] sm:$0xff]
        %v2617 = vld [vmem:[%s2612 + $0x20] sm:$0xff]
        %v2618 = vld [vmem:[%s2612 + $0x28] sm:$0xff]
        %v2619 = vld [vmem:[%s2612 + $0x30] sm:$0xff]
        %v2620 = vld [vmem:[%s2612 + $0x38] sm:$0xff]
        %v2621 = vld [vmem:[%s2612 + $0x40] sm:$0xff]
        %v2622 = vld [vmem:[%s2612 + $0x48] sm:$0xff]
        %v2623 = vld [vmem:[%s2612 + $0x50] sm:$0xff]
        %v2624 = vld [vmem:[%s2612 + $0x58] sm:$0xff]
        %v2625 = vld [vmem:[%s2612 + $0x60] sm:$0xff]
        %v2626 = vld [vmem:[%s2612 + $0x68] sm:$0xff]
        %v2627 = vld [vmem:[%s2612 + $0x70] sm:$0xff]
        %v2628 = vld [vmem:[%s2612 + $0x78] sm:$0xff]
        %v2629 = vpack.c.bf16 %v2614, %v2613
        %v2630 = vpack.c.bf16 %v2616, %v2615
        %v2631 = vpack.c.bf16 %v2618, %v2617
        %v2632 = vpack.c.bf16 %v2620, %v2619
        %v2633 = vpack.c.bf16 %v2622, %v2621
        %v2634 = vpack.c.bf16 %v2624, %v2623
        %v2635 = vpack.c.bf16 %v2626, %v2625
        %v2636 = vpack.c.bf16 %v2628, %v2627
        %2637 = vmatprep.subr.bf16.mxu0 0
        %2638 = vmatpush1.bf16.msra.mxu0 %v2629
        %2639 = vmatprep.subr.bf16.mxu0 0
        %2640 = vmatpush1.bf16.msra.mxu0 %v2630
        %2641 = vmatprep.subr.bf16.mxu0 0
        %2642 = vmatpush1.bf16.msra.mxu0 %v2631
        %2643 = vmatprep.subr.bf16.mxu0 0
        %2644 = vmatpush1.bf16.msra.mxu0 %v2632
        %2645 = vmatprep.subr.bf16.mxu0 0
        %2646 = vmatpush1.bf16.msra.mxu0 %v2633
        %2647 = vmatprep.subr.bf16.mxu0 0
        %2648 = vmatpush1.bf16.msra.mxu0 %v2634
        %2649 = vmatprep.subr.bf16.mxu0 0
        %2650 = vmatpush1.bf16.msra.mxu0 %v2635
        %2651 = vmatprep.subr.bf16.mxu0 0
        %2652 = vmatpush1.bf16.msra.mxu0 %v2636
        %2653 = vmatprep.subr.bf16.mxu0 0
        %2654 = vmatpush1.bf16.msra.mxu0 0
        %2655 = vmatprep.subr.bf16.mxu0 0
        %2656 = vmatpush1.bf16.msra.mxu0 0
        %2657 = vmatprep.subr.bf16.mxu0 0
        %2658 = vmatpush1.bf16.msra.mxu0 0
        %2659 = vmatprep.subr.bf16.mxu0 0
        %2660 = vmatpush1.bf16.msra.mxu0 0
        %2661 = vmatprep.subr.bf16.mxu0 0
        %2662 = vmatpush1.bf16.msra.mxu0 0
        %2663 = vmatprep.subr.bf16.mxu0 0
        %2664 = vmatpush1.bf16.msra.mxu0 0
        %2665 = vmatprep.subr.bf16.mxu0 0
        %2666 = vmatpush1.bf16.msra.mxu0 0
        %2667 = vmatprep.subr.bf16.mxu0 0
        %2668 = vmatpush1.bf16.msra.mxu0 0
        %2669 = vmatprep.mubr.bf16.mxu0 0
        %2670 = vmatmul.mubr.bf16.gmra.mrb[0].mxu0 %v330
        %v2671 = vpop.f32.mrb[0].mxu0
        %v2672 = vadd.f32 0.0, %v2671
        %v2673 = vpop.f32.mrb[0].mxu0
        %v2674 = vpop.f32.mrb[0].mxu0
        %v2675 = vadd.f32 0.0, %v2674
        %v2676 = vpop.f32.mrb[0].mxu0
        %2677 = vdwg.mxu0
        %s2678 = scalar_lea.vmem %s5, 768
        %v2679 = vld [vmem:[%s2678] sm:$0xff]
        %v2680 = vld [vmem:[%s2678 + $0x8] sm:$0xff]
        %v2681 = vld [vmem:[%s2678 + $0x10] sm:$0xff]
        %v2682 = vld [vmem:[%s2678 + $0x18] sm:$0xff]
        %v2683 = vld [vmem:[%s2678 + $0x20] sm:$0xff]
        %v2684 = vld [vmem:[%s2678 + $0x28] sm:$0xff]
        %v2685 = vld [vmem:[%s2678 + $0x30] sm:$0xff]
        %v2686 = vld [vmem:[%s2678 + $0x38] sm:$0xff]
        %v2687 = vld [vmem:[%s2678 + $0x40] sm:$0xff]
        %v2688 = vld [vmem:[%s2678 + $0x48] sm:$0xff]
        %v2689 = vld [vmem:[%s2678 + $0x50] sm:$0xff]
        %v2690 = vld [vmem:[%s2678 + $0x58] sm:$0xff]
        %v2691 = vld [vmem:[%s2678 + $0x60] sm:$0xff]
        %v2692 = vld [vmem:[%s2678 + $0x68] sm:$0xff]
        %v2693 = vld [vmem:[%s2678 + $0x70] sm:$0xff]
        %v2694 = vld [vmem:[%s2678 + $0x78] sm:$0xff]
        %v2695 = vpack.c.bf16 %v2680, %v2679
        %v2696 = vpack.c.bf16 %v2682, %v2681
        %v2697 = vpack.c.bf16 %v2684, %v2683
        %v2698 = vpack.c.bf16 %v2686, %v2685
        %v2699 = vpack.c.bf16 %v2688, %v2687
        %v2700 = vpack.c.bf16 %v2690, %v2689
        %v2701 = vpack.c.bf16 %v2692, %v2691
        %v2702 = vpack.c.bf16 %v2694, %v2693
        %2703 = vmatprep.subr.bf16.mxu0 0
        %2704 = vmatpush1.bf16.msra.mxu0 %v2695
        %2705 = vmatprep.subr.bf16.mxu0 0
        %2706 = vmatpush1.bf16.msra.mxu0 %v2696
        %2707 = vmatprep.subr.bf16.mxu0 0
        %2708 = vmatpush1.bf16.msra.mxu0 %v2697
        %2709 = vmatprep.subr.bf16.mxu0 0
        %2710 = vmatpush1.bf16.msra.mxu0 %v2698
        %2711 = vmatprep.subr.bf16.mxu0 0
        %2712 = vmatpush1.bf16.msra.mxu0 %v2699
        %2713 = vmatprep.subr.bf16.mxu0 0
        %2714 = vmatpush1.bf16.msra.mxu0 %v2700
        %2715 = vmatprep.subr.bf16.mxu0 0
        %2716 = vmatpush1.bf16.msra.mxu0 %v2701
        %2717 = vmatprep.subr.bf16.mxu0 0
        %2718 = vmatpush1.bf16.msra.mxu0 %v2702
        %2719 = vmatprep.subr.bf16.mxu0 0
        %2720 = vmatpush1.bf16.msra.mxu0 0
        %2721 = vmatprep.subr.bf16.mxu0 0
        %2722 = vmatpush1.bf16.msra.mxu0 0
        %2723 = vmatprep.subr.bf16.mxu0 0
        %2724 = vmatpush1.bf16.msra.mxu0 0
        %2725 = vmatprep.subr.bf16.mxu0 0
        %2726 = vmatpush1.bf16.msra.mxu0 0
        %2727 = vmatprep.subr.bf16.mxu0 0
        %2728 = vmatpush1.bf16.msra.mxu0 0
        %2729 = vmatprep.subr.bf16.mxu0 0
        %2730 = vmatpush1.bf16.msra.mxu0 0
        %2731 = vmatprep.subr.bf16.mxu0 0
        %2732 = vmatpush1.bf16.msra.mxu0 0
        %2733 = vmatprep.subr.bf16.mxu0 0
        %2734 = vmatpush1.bf16.msra.mxu0 0
        %2735 = vmatprep.mubr.bf16.mxu0 0
        %2736 = vmatmul.mubr.bf16.gmra.mrb[0].mxu0 %v330
        %v2737 = vpop.f32.mrb[0].mxu0
        %v2738 = vadd.f32 0.0, %v2737
        %v2739 = vpop.f32.mrb[0].mxu0
        %v2740 = vpop.f32.mrb[0].mxu0
        %v2741 = vadd.f32 0.0, %v2740
        %v2742 = vpop.f32.mrb[0].mxu0
        %2743 = vdwg.mxu0
        %v2744 = vpack.c.bf16 %v2609, %v2606
        %v2745 = vpack.c.bf16 %v2675, %v2672
        %v2747 = vsel %vm530, %v2744, 0
        %v2750 = vsel %vm530, %v2745, 0
        %2752 = vmatprep.subr.bf16.mxu0 0
        %2753 = vmatpush1.bf16.xpose.msra.mxu0 %v2750
        %2754 = vmatprep.subr.bf16.mxu0 0
        %2755 = vmatpush1.bf16.xpose.msra.mxu0 0
        %2756 = vmatprep.subr.bf16.mxu0 0
        %2757 = vmatpush1.bf16.xpose.msra.mxu0 0
        %2758 = vmatprep.subr.bf16.mxu0 0
        %2759 = vmatpush1.bf16.xpose.msra.mxu0 0
        %2760 = vmatprep.subr.bf16.mxu0 0
        %2761 = vmatpush1.bf16.xpose.msra.mxu0 0
        %2762 = vmatprep.subr.bf16.mxu0 0
        %2763 = vmatpush1.bf16.xpose.msra.mxu0 0
        %2764 = vmatprep.subr.bf16.mxu0 0
        %2765 = vmatpush1.bf16.xpose.msra.mxu0 0
        %2766 = vmatprep.subr.bf16.mxu0 0
        %2767 = vmatpush1.bf16.xpose.msra.mxu0 0
        %2768 = vmatprep.subr.bf16.mxu0 0
        %2769 = vmatpush1.bf16.xpose.msra.mxu0 0
        %2770 = vmatprep.subr.bf16.mxu0 0
        %2771 = vmatpush1.bf16.xpose.msra.mxu0 0
        %2772 = vmatprep.subr.bf16.mxu0 0
        %2773 = vmatpush1.bf16.xpose.msra.mxu0 0
        %2774 = vmatprep.subr.bf16.mxu0 0
        %2775 = vmatpush1.bf16.xpose.msra.mxu0 0
        %2776 = vmatprep.subr.bf16.mxu0 0
        %2777 = vmatpush1.bf16.xpose.msra.mxu0 0
        %2778 = vmatprep.subr.bf16.mxu0 0
        %2779 = vmatpush1.bf16.xpose.msra.mxu0 0
        %2780 = vmatprep.subr.bf16.mxu0 0
        %2781 = vmatpush1.bf16.xpose.msra.mxu0 0
        %2782 = vmatprep.subr.bf16.mxu0 0
        %2783 = vmatpush1.bf16.xpose.msra.mxu0 0
        %2784 = vmatprep.mubr.bf16.mxu0 0
        %2785 = vmatmul.mubr.bf16.gmra.mrb[0].mxu0 %v2747
        %v2786 = vpop.f32.mrb[0].mxu0
        %v2787 = vadd.f32 0.0, %v2786
        %v2788 = vpop.f32.mrb[0].mxu0
        %v2789 = vpop.f32.mrb[0].mxu0
        %v2790 = vadd.f32 0.0, %v2789
        %v2791 = vpop.f32.mrb[0].mxu0
        %2792 = vdwg.mxu0
        %v2793 = vmul.f32 %v2787, 0.25
        %v2794 = vmul.f32 %v2790, 0.25
        %v2795 = vadd.f32 %v2793, %v331
        %v2796 = vadd.f32 %v2794, %v332
        %v2797 = vsel %vm530, %v2795, -inf
        %2798 = vmax.xlane.f32.xlu0 %v2797
        %v2799 = vpop.xlane.xlu0 %2798
        %v2800 = vsel %vm530, %v2796, -inf
        %2801 = vmax.xlane.f32.xlu0 %v2800
        %v2802 = vpop.xlane.xlu0 %2801
        %v2803 = vsub.f32 %v2795, %v2799
        %v2804 = vsub.f32 %v2796, %v2802
        %v2805 = vmul.f32 %v2803, 1.442695
        %v2806 = vpow.pop %v2805
        %v2807 = vmul.f32 %v2804, 1.442695
        %v2808 = vpow.pop %v2807
        %v2809 = vsel %vm530, %v2806, 0.0
        %2810 = vadd.xlane.f32.xlu0 %v2809
        %v2811 = vpop.xlane.xlu0 %2810
        %v2812 = vsel %vm530, %v2808, 0.0
        %2813 = vadd.xlane.f32.xlu0 %v2812
        %v2814 = vpop.xlane.xlu0 %2813
        %v2815 = vrcp.pop %v2811
        %v2816 = vrcp.pop %v2814
        %v2817 = vmul.f32 %v2806, %v2815
        %v2818 = vmul.f32 %v2808, %v2816
        %v2819 = vpack.c.bf16 %v2818, %v2817
        %v2820 = vpack.c.bf16 %v2741, %v2738
        %v2822 = vsel %vm530, %v2819, 0
        %2824 = vmatprep.subr.bf16.mxu0 0
        %2825 = vmatpush1.bf16.msra.mxu0 %v2820
        %2826 = vmatprep.subr.bf16.mxu0 0
        %2827 = vmatpush1.bf16.msra.mxu0 0
        %2828 = vmatprep.subr.bf16.mxu0 0
        %2829 = vmatpush1.bf16.msra.mxu0 0
        %2830 = vmatprep.subr.bf16.mxu0 0
        %2831 = vmatpush1.bf16.msra.mxu0 0
        %2832 = vmatprep.subr.bf16.mxu0 0
        %2833 = vmatpush1.bf16.msra.mxu0 0
        %2834 = vmatprep.subr.bf16.mxu0 0
        %2835 = vmatpush1.bf16.msra.mxu0 0
        %2836 = vmatprep.subr.bf16.mxu0 0
        %2837 = vmatpush1.bf16.msra.mxu0 0
        %2838 = vmatprep.subr.bf16.mxu0 0
        %2839 = vmatpush1.bf16.msra.mxu0 0
        %2840 = vmatprep.subr.bf16.mxu0 0
        %2841 = vmatpush1.bf16.msra.mxu0 0
        %2842 = vmatprep.subr.bf16.mxu0 0
        %2843 = vmatpush1.bf16.msra.mxu0 0
        %2844 = vmatprep.subr.bf16.mxu0 0
        %2845 = vmatpush1.bf16.msra.mxu0 0
        %2846 = vmatprep.subr.bf16.mxu0 0
        %2847 = vmatpush1.bf16.msra.mxu0 0
        %2848 = vmatprep.subr.bf16.mxu0 0
        %2849 = vmatpush1.bf16.msra.mxu0 0
        %2850 = vmatprep.subr.bf16.mxu0 0
        %2851 = vmatpush1.bf16.msra.mxu0 0
        %2852 = vmatprep.subr.bf16.mxu0 0
        %2853 = vmatpush1.bf16.msra.mxu0 0
        %2854 = vmatprep.subr.bf16.mxu0 0
        %2855 = vmatpush1.bf16.msra.mxu0 0
        %2856 = vmatprep.mubr.bf16.mxu0 0
        %2857 = vmatmul.mubr.bf16.gmra.mrb[0].mxu0 %v2822
        %v2858 = vpop.f32.mrb[0].mxu0
        %v2859 = vadd.f32 0.0, %v2858
        %v2860 = vpop.f32.mrb[0].mxu0
        %v2861 = vpop.f32.mrb[0].mxu0
        %v2862 = vadd.f32 0.0, %v2861
        %v2863 = vpop.f32.mrb[0].mxu0
        %2864 = vdwg.mxu0
        %v2865 = vpack.c.bf16 %v2862, %v2859
        %s2866 = scalar_lea.vmem %s6, 96
        %v2867 = vld [vmem:[%s2866] sm:$0xff]
        %v2868 = vld [vmem:[%s2866 + $0x8] sm:$0xff]
        %v2869 = vpack.c.bf16 %v2868, %v2867
        %v2871 = vsel %vm530, %v2865, 0
        %2873 = vmatprep.subr.bf16.mxu0 0
        %2874 = vmatpush1.bf16.msra.mxu0 %v2869
        %2875 = vmatprep.subr.bf16.mxu0 0
        %2876 = vmatpush1.bf16.msra.mxu0 0
        %2877 = vmatprep.subr.bf16.mxu0 0
        %2878 = vmatpush1.bf16.msra.mxu0 0
        %2879 = vmatprep.subr.bf16.mxu0 0
        %2880 = vmatpush1.bf16.msra.mxu0 0
        %2881 = vmatprep.subr.bf16.mxu0 0
        %2882 = vmatpush1.bf16.msra.mxu0 0
        %2883 = vmatprep.subr.bf16.mxu0 0
        %2884 = vmatpush1.bf16.msra.mxu0 0
        %2885 = vmatprep.subr.bf16.mxu0 0
        %2886 = vmatpush1.bf16.msra.mxu0 0
        %2887 = vmatprep.subr.bf16.mxu0 0
        %2888 = vmatpush1.bf16.msra.mxu0 0
        %2889 = vmatprep.subr.bf16.mxu0 0
        %2890 = vmatpush1.bf16.msra.mxu0 0
        %2891 = vmatprep.subr.bf16.mxu0 0
        %2892 = vmatpush1.bf16.msra.mxu0 0
        %2893 = vmatprep.subr.bf16.mxu0 0
        %2894 = vmatpush1.bf16.msra.mxu0 0
        %2895 = vmatprep.subr.bf16.mxu0 0
        %2896 = vmatpush1.bf16.msra.mxu0 0
        %2897 = vmatprep.subr.bf16.mxu0 0
        %2898 = vmatpush1.bf16.msra.mxu0 0
        %2899 = vmatprep.subr.bf16.mxu0 0
        %2900 = vmatpush1.bf16.msra.mxu0 0
        %2901 = vmatprep.subr.bf16.mxu0 0
        %2902 = vmatpush1.bf16.msra.mxu0 0
        %2903 = vmatprep.subr.bf16.mxu0 0
        %2904 = vmatpush1.bf16.msra.mxu0 0
        %2905 = vmatprep.mubr.bf16.mxu0 0
        %2906 = vmatmul.mubr.bf16.gmra.mrb[0].mxu0 %v2871
        %v2907 = vpop.f32.mrb[0].mxu0
        %v2908 = vadd.f32 0.0, %v2907
        %v2909 = vpop.f32.mrb[0].mxu0
        %v2910 = vpop.f32.mrb[0].mxu0
        %v2911 = vadd.f32 0.0, %v2910
        %v2912 = vpop.f32.mrb[0].mxu0
        %2913 = vdwg.mxu0
        %v2914 = vadd.f32 %v2544, %v2908
        %v2915 = vadd.f32 %v2545, %v2911
        %s2916 = scalar_lea.vmem %s3, 896
        %v2917 = vld [vmem:[%s2916] sm:$0xff]
        %v2918 = vld [vmem:[%s2916 + $0x8] sm:$0xff]
        %v2919 = vld [vmem:[%s2916 + $0x10] sm:$0xff]
        %v2920 = vld [vmem:[%s2916 + $0x18] sm:$0xff]
        %v2921 = vld [vmem:[%s2916 + $0x20] sm:$0xff]
        %v2922 = vld [vmem:[%s2916 + $0x28] sm:$0xff]
        %v2923 = vld [vmem:[%s2916 + $0x30] sm:$0xff]
        %v2924 = vld [vmem:[%s2916 + $0x38] sm:$0xff]
        %v2925 = vld [vmem:[%s2916 + $0x40] sm:$0xff]
        %v2926 = vld [vmem:[%s2916 + $0x48] sm:$0xff]
        %v2927 = vld [vmem:[%s2916 + $0x50] sm:$0xff]
        %v2928 = vld [vmem:[%s2916 + $0x58] sm:$0xff]
        %v2929 = vld [vmem:[%s2916 + $0x60] sm:$0xff]
        %v2930 = vld [vmem:[%s2916 + $0x68] sm:$0xff]
        %v2931 = vld [vmem:[%s2916 + $0x70] sm:$0xff]
        %v2932 = vld [vmem:[%s2916 + $0x78] sm:$0xff]
        %v2933 = vpack.c.bf16 %v2918, %v2917
        %v2934 = vpack.c.bf16 %v2920, %v2919
        %v2935 = vpack.c.bf16 %v2922, %v2921
        %v2936 = vpack.c.bf16 %v2924, %v2923
        %v2937 = vpack.c.bf16 %v2926, %v2925
        %v2938 = vpack.c.bf16 %v2928, %v2927
        %v2939 = vpack.c.bf16 %v2930, %v2929
        %v2940 = vpack.c.bf16 %v2932, %v2931
        %2941 = vmatprep.subr.bf16.mxu0 0
        %2942 = vmatpush1.bf16.msra.mxu0 %v2933
        %2943 = vmatprep.subr.bf16.mxu0 0
        %2944 = vmatpush1.bf16.msra.mxu0 %v2934
        %2945 = vmatprep.subr.bf16.mxu0 0
        %2946 = vmatpush1.bf16.msra.mxu0 %v2935
        %2947 = vmatprep.subr.bf16.mxu0 0
        %2948 = vmatpush1.bf16.msra.mxu0 %v2936
        %2949 = vmatprep.subr.bf16.mxu0 0
        %2950 = vmatpush1.bf16.msra.mxu0 %v2937
        %2951 = vmatprep.subr.bf16.mxu0 0
        %2952 = vmatpush1.bf16.msra.mxu0 %v2938
        %2953 = vmatprep.subr.bf16.mxu0 0
        %2954 = vmatpush1.bf16.msra.mxu0 %v2939
        %2955 = vmatprep.subr.bf16.mxu0 0
        %2956 = vmatpush1.bf16.msra.mxu0 %v2940
        %2957 = vmatprep.subr.bf16.mxu0 0
        %2958 = vmatpush1.bf16.msra.mxu0 0
        %2959 = vmatprep.subr.bf16.mxu0 0
        %2960 = vmatpush1.bf16.msra.mxu0 0
        %2961 = vmatprep.subr.bf16.mxu0 0
        %2962 = vmatpush1.bf16.msra.mxu0 0
        %2963 = vmatprep.subr.bf16.mxu0 0
        %2964 = vmatpush1.bf16.msra.mxu0 0
        %2965 = vmatprep.subr.bf16.mxu0 0
        %2966 = vmatpush1.bf16.msra.mxu0 0
        %2967 = vmatprep.subr.bf16.mxu0 0
        %2968 = vmatpush1.bf16.msra.mxu0 0
        %2969 = vmatprep.subr.bf16.mxu0 0
        %2970 = vmatpush1.bf16.msra.mxu0 0
        %2971 = vmatprep.subr.bf16.mxu0 0
        %2972 = vmatpush1.bf16.msra.mxu0 0
        %2973 = vmatprep.mubr.bf16.mxu0 0
        %2974 = vmatmul.mubr.bf16.gmra.mrb[0].mxu0 %v327
        %v2975 = vpop.f32.mrb[0].mxu0
        %v2976 = vadd.f32 0.0, %v2975
        %v2977 = vpop.f32.mrb[0].mxu0
        %v2978 = vpop.f32.mrb[0].mxu0
        %v2979 = vadd.f32 0.0, %v2978
        %v2980 = vpop.f32.mrb[0].mxu0
        %2981 = vdwg.mxu0
        %s2982 = scalar_lea.vmem %s4, 896
        %v2983 = vld [vmem:[%s2982] sm:$0xff]
        %v2984 = vld [vmem:[%s2982 + $0x8] sm:$0xff]
        %v2985 = vld [vmem:[%s2982 + $0x10] sm:$0xff]
        %v2986 = vld [vmem:[%s2982 + $0x18] sm:$0xff]
        %v2987 = vld [vmem:[%s2982 + $0x20] sm:$0xff]
        %v2988 = vld [vmem:[%s2982 + $0x28] sm:$0xff]
        %v2989 = vld [vmem:[%s2982 + $0x30] sm:$0xff]
        %v2990 = vld [vmem:[%s2982 + $0x38] sm:$0xff]
        %v2991 = vld [vmem:[%s2982 + $0x40] sm:$0xff]
        %v2992 = vld [vmem:[%s2982 + $0x48] sm:$0xff]
        %v2993 = vld [vmem:[%s2982 + $0x50] sm:$0xff]
        %v2994 = vld [vmem:[%s2982 + $0x58] sm:$0xff]
        %v2995 = vld [vmem:[%s2982 + $0x60] sm:$0xff]
        %v2996 = vld [vmem:[%s2982 + $0x68] sm:$0xff]
        %v2997 = vld [vmem:[%s2982 + $0x70] sm:$0xff]
        %v2998 = vld [vmem:[%s2982 + $0x78] sm:$0xff]
        %v2999 = vpack.c.bf16 %v2984, %v2983
        %v3000 = vpack.c.bf16 %v2986, %v2985
        %v3001 = vpack.c.bf16 %v2988, %v2987
        %v3002 = vpack.c.bf16 %v2990, %v2989
        %v3003 = vpack.c.bf16 %v2992, %v2991
        %v3004 = vpack.c.bf16 %v2994, %v2993
        %v3005 = vpack.c.bf16 %v2996, %v2995
        %v3006 = vpack.c.bf16 %v2998, %v2997
        %3007 = vmatprep.subr.bf16.mxu0 0
        %3008 = vmatpush1.bf16.msra.mxu0 %v2999
        %3009 = vmatprep.subr.bf16.mxu0 0
        %3010 = vmatpush1.bf16.msra.mxu0 %v3000
        %3011 = vmatprep.subr.bf16.mxu0 0
        %3012 = vmatpush1.bf16.msra.mxu0 %v3001
        %3013 = vmatprep.subr.bf16.mxu0 0
        %3014 = vmatpush1.bf16.msra.mxu0 %v3002
        %3015 = vmatprep.subr.bf16.mxu0 0
        %3016 = vmatpush1.bf16.msra.mxu0 %v3003
        %3017 = vmatprep.subr.bf16.mxu0 0
        %3018 = vmatpush1.bf16.msra.mxu0 %v3004
        %3019 = vmatprep.subr.bf16.mxu0 0
        %3020 = vmatpush1.bf16.msra.mxu0 %v3005
        %3021 = vmatprep.subr.bf16.mxu0 0
        %3022 = vmatpush1.bf16.msra.mxu0 %v3006
        %3023 = vmatprep.subr.bf16.mxu0 0
        %3024 = vmatpush1.bf16.msra.mxu0 0
        %3025 = vmatprep.subr.bf16.mxu0 0
        %3026 = vmatpush1.bf16.msra.mxu0 0
        %3027 = vmatprep.subr.bf16.mxu0 0
        %3028 = vmatpush1.bf16.msra.mxu0 0
        %3029 = vmatprep.subr.bf16.mxu0 0
        %3030 = vmatpush1.bf16.msra.mxu0 0
        %3031 = vmatprep.subr.bf16.mxu0 0
        %3032 = vmatpush1.bf16.msra.mxu0 0
        %3033 = vmatprep.subr.bf16.mxu0 0
        %3034 = vmatpush1.bf16.msra.mxu0 0
        %3035 = vmatprep.subr.bf16.mxu0 0
        %3036 = vmatpush1.bf16.msra.mxu0 0
        %3037 = vmatprep.subr.bf16.mxu0 0
        %3038 = vmatpush1.bf16.msra.mxu0 0
        %3039 = vmatprep.mubr.bf16.mxu0 0
        %3040 = vmatmul.mubr.bf16.gmra.mrb[0].mxu0 %v330
        %v3041 = vpop.f32.mrb[0].mxu0
        %v3042 = vadd.f32 0.0, %v3041
        %v3043 = vpop.f32.mrb[0].mxu0
        %v3044 = vpop.f32.mrb[0].mxu0
        %v3045 = vadd.f32 0.0, %v3044
        %v3046 = vpop.f32.mrb[0].mxu0
        %3047 = vdwg.mxu0
        %s3048 = scalar_lea.vmem %s5, 896
        %v3049 = vld [vmem:[%s3048] sm:$0xff]
        %v3050 = vld [vmem:[%s3048 + $0x8] sm:$0xff]
        %v3051 = vld [vmem:[%s3048 + $0x10] sm:$0xff]
        %v3052 = vld [vmem:[%s3048 + $0x18] sm:$0xff]
        %v3053 = vld [vmem:[%s3048 + $0x20] sm:$0xff]
        %v3054 = vld [vmem:[%s3048 + $0x28] sm:$0xff]
        %v3055 = vld [vmem:[%s3048 + $0x30] sm:$0xff]
        %v3056 = vld [vmem:[%s3048 + $0x38] sm:$0xff]
        %v3057 = vld [vmem:[%s3048 + $0x40] sm:$0xff]
        %v3058 = vld [vmem:[%s3048 + $0x48] sm:$0xff]
        %v3059 = vld [vmem:[%s3048 + $0x50] sm:$0xff]
        %v3060 = vld [vmem:[%s3048 + $0x58] sm:$0xff]
        %v3061 = vld [vmem:[%s3048 + $0x60] sm:$0xff]
        %v3062 = vld [vmem:[%s3048 + $0x68] sm:$0xff]
        %v3063 = vld [vmem:[%s3048 + $0x70] sm:$0xff]
        %v3064 = vld [vmem:[%s3048 + $0x78] sm:$0xff]
        %v3065 = vpack.c.bf16 %v3050, %v3049
        %v3066 = vpack.c.bf16 %v3052, %v3051
        %v3067 = vpack.c.bf16 %v3054, %v3053
        %v3068 = vpack.c.bf16 %v3056, %v3055
        %v3069 = vpack.c.bf16 %v3058, %v3057
        %v3070 = vpack.c.bf16 %v3060, %v3059
        %v3071 = vpack.c.bf16 %v3062, %v3061
        %v3072 = vpack.c.bf16 %v3064, %v3063
        %3073 = vmatprep.subr.bf16.mxu0 0
        %3074 = vmatpush1.bf16.msra.mxu0 %v3065
        %3075 = vmatprep.subr.bf16.mxu0 0
        %3076 = vmatpush1.bf16.msra.mxu0 %v3066
        %3077 = vmatprep.subr.bf16.mxu0 0
        %3078 = vmatpush1.bf16.msra.mxu0 %v3067
        %3079 = vmatprep.subr.bf16.mxu0 0
        %3080 = vmatpush1.bf16.msra.mxu0 %v3068
        %3081 = vmatprep.subr.bf16.mxu0 0
        %3082 = vmatpush1.bf16.msra.mxu0 %v3069
        %3083 = vmatprep.subr.bf16.mxu0 0
        %3084 = vmatpush1.bf16.msra.mxu0 %v3070
        %3085 = vmatprep.subr.bf16.mxu0 0
        %3086 = vmatpush1.bf16.msra.mxu0 %v3071
        %3087 = vmatprep.subr.bf16.mxu0 0
        %3088 = vmatpush1.bf16.msra.mxu0 %v3072
        %3089 = vmatprep.subr.bf16.mxu0 0
        %3090 = vmatpush1.bf16.msra.mxu0 0
        %3091 = vmatprep.subr.bf16.mxu0 0
        %3092 = vmatpush1.bf16.msra.mxu0 0
        %3093 = vmatprep.subr.bf16.mxu0 0
        %3094 = vmatpush1.bf16.msra.mxu0 0
        %3095 = vmatprep.subr.bf16.mxu0 0
        %3096 = vmatpush1.bf16.msra.mxu0 0
        %3097 = vmatprep.subr.bf16.mxu0 0
        %3098 = vmatpush1.bf16.msra.mxu0 0
        %3099 = vmatprep.subr.bf16.mxu0 0
        %3100 = vmatpush1.bf16.msra.mxu0 0
        %3101 = vmatprep.subr.bf16.mxu0 0
        %3102 = vmatpush1.bf16.msra.mxu0 0
        %3103 = vmatprep.subr.bf16.mxu0 0
        %3104 = vmatpush1.bf16.msra.mxu0 0
        %3105 = vmatprep.mubr.bf16.mxu0 0
        %3106 = vmatmul.mubr.bf16.gmra.mrb[0].mxu0 %v330
        %v3107 = vpop.f32.mrb[0].mxu0
        %v3108 = vadd.f32 0.0, %v3107
        %v3109 = vpop.f32.mrb[0].mxu0
        %v3110 = vpop.f32.mrb[0].mxu0
        %v3111 = vadd.f32 0.0, %v3110
        %v3112 = vpop.f32.mrb[0].mxu0
        %3113 = vdwg.mxu0
        %v3114 = vpack.c.bf16 %v2979, %v2976
        %v3115 = vpack.c.bf16 %v3045, %v3042
        %v3117 = vsel %vm530, %v3114, 0
        %v3120 = vsel %vm530, %v3115, 0
        %3122 = vmatprep.subr.bf16.mxu0 0
        %3123 = vmatpush1.bf16.xpose.msra.mxu0 %v3120
        %3124 = vmatprep.subr.bf16.mxu0 0
        %3125 = vmatpush1.bf16.xpose.msra.mxu0 0
        %3126 = vmatprep.subr.bf16.mxu0 0
        %3127 = vmatpush1.bf16.xpose.msra.mxu0 0
        %3128 = vmatprep.subr.bf16.mxu0 0
        %3129 = vmatpush1.bf16.xpose.msra.mxu0 0
        %3130 = vmatprep.subr.bf16.mxu0 0
        %3131 = vmatpush1.bf16.xpose.msra.mxu0 0
        %3132 = vmatprep.subr.bf16.mxu0 0
        %3133 = vmatpush1.bf16.xpose.msra.mxu0 0
        %3134 = vmatprep.subr.bf16.mxu0 0
        %3135 = vmatpush1.bf16.xpose.msra.mxu0 0
        %3136 = vmatprep.subr.bf16.mxu0 0
        %3137 = vmatpush1.bf16.xpose.msra.mxu0 0
        %3138 = vmatprep.subr.bf16.mxu0 0
        %3139 = vmatpush1.bf16.xpose.msra.mxu0 0
        %3140 = vmatprep.subr.bf16.mxu0 0
        %3141 = vmatpush1.bf16.xpose.msra.mxu0 0
        %3142 = vmatprep.subr.bf16.mxu0 0
        %3143 = vmatpush1.bf16.xpose.msra.mxu0 0
        %3144 = vmatprep.subr.bf16.mxu0 0
        %3145 = vmatpush1.bf16.xpose.msra.mxu0 0
        %3146 = vmatprep.subr.bf16.mxu0 0
        %3147 = vmatpush1.bf16.xpose.msra.mxu0 0
        %3148 = vmatprep.subr.bf16.mxu0 0
        %3149 = vmatpush1.bf16.xpose.msra.mxu0 0
        %3150 = vmatprep.subr.bf16.mxu0 0
        %3151 = vmatpush1.bf16.xpose.msra.mxu0 0
        %3152 = vmatprep.subr.bf16.mxu0 0
        %3153 = vmatpush1.bf16.xpose.msra.mxu0 0
        %3154 = vmatprep.mubr.bf16.mxu0 0
        %3155 = vmatmul.mubr.bf16.gmra.mrb[0].mxu0 %v3117
        %v3156 = vpop.f32.mrb[0].mxu0
        %v3157 = vadd.f32 0.0, %v3156
        %v3158 = vpop.f32.mrb[0].mxu0
        %v3159 = vpop.f32.mrb[0].mxu0
        %v3160 = vadd.f32 0.0, %v3159
        %v3161 = vpop.f32.mrb[0].mxu0
        %3162 = vdwg.mxu0
        %v3163 = vmul.f32 %v3157, 0.25
        %v3164 = vmul.f32 %v3160, 0.25
        %v3165 = vadd.f32 %v3163, %v331
        %v3166 = vadd.f32 %v3164, %v332
        %v3167 = vsel %vm530, %v3165, -inf
        %3168 = vmax.xlane.f32.xlu0 %v3167
        %v3169 = vpop.xlane.xlu0 %3168
        %v3170 = vsel %vm530, %v3166, -inf
        %3171 = vmax.xlane.f32.xlu0 %v3170
        %v3172 = vpop.xlane.xlu0 %3171
        %v3173 = vsub.f32 %v3165, %v3169
        %v3174 = vsub.f32 %v3166, %v3172
        %v3175 = vmul.f32 %v3173, 1.442695
        %v3176 = vpow.pop %v3175
        %v3177 = vmul.f32 %v3174, 1.442695
        %v3178 = vpow.pop %v3177
        %v3179 = vsel %vm530, %v3176, 0.0
        %3180 = vadd.xlane.f32.xlu0 %v3179
        %v3181 = vpop.xlane.xlu0 %3180
        %v3182 = vsel %vm530, %v3178, 0.0
        %3183 = vadd.xlane.f32.xlu0 %v3182
        %v3184 = vpop.xlane.xlu0 %3183
        %v3185 = vrcp.pop %v3181
        %v3186 = vrcp.pop %v3184
        %v3187 = vmul.f32 %v3176, %v3185
        %v3188 = vmul.f32 %v3178, %v3186
        %v3189 = vpack.c.bf16 %v3188, %v3187
        %v3190 = vpack.c.bf16 %v3111, %v3108
        %v3192 = vsel %vm530, %v3189, 0
        %3194 = vmatprep.subr.bf16.mxu0 0
        %3195 = vmatpush1.bf16.msra.mxu0 %v3190
        %3196 = vmatprep.subr.bf16.mxu0 0
        %3197 = vmatpush1.bf16.msra.mxu0 0
        %3198 = vmatprep.subr.bf16.mxu0 0
        %3199 = vmatpush1.bf16.msra.mxu0 0
        %3200 = vmatprep.subr.bf16.mxu0 0
        %3201 = vmatpush1.bf16.msra.mxu0 0
        %3202 = vmatprep.subr.bf16.mxu0 0
        %3203 = vmatpush1.bf16.msra.mxu0 0
        %3204 = vmatprep.subr.bf16.mxu0 0
        %3205 = vmatpush1.bf16.msra.mxu0 0
        %3206 = vmatprep.subr.bf16.mxu0 0
        %3207 = vmatpush1.bf16.msra.mxu0 0
        %3208 = vmatprep.subr.bf16.mxu0 0
        %3209 = vmatpush1.bf16.msra.mxu0 0
        %3210 = vmatprep.subr.bf16.mxu0 0
        %3211 = vmatpush1.bf16.msra.mxu0 0
        %3212 = vmatprep.subr.bf16.mxu0 0
        %3213 = vmatpush1.bf16.msra.mxu0 0
        %3214 = vmatprep.subr.bf16.mxu0 0
        %3215 = vmatpush1.bf16.msra.mxu0 0
        %3216 = vmatprep.subr.bf16.mxu0 0
        %3217 = vmatpush1.bf16.msra.mxu0 0
        %3218 = vmatprep.subr.bf16.mxu0 0
        %3219 = vmatpush1.bf16.msra.mxu0 0
        %3220 = vmatprep.subr.bf16.mxu0 0
        %3221 = vmatpush1.bf16.msra.mxu0 0
        %3222 = vmatprep.subr.bf16.mxu0 0
        %3223 = vmatpush1.bf16.msra.mxu0 0
        %3224 = vmatprep.subr.bf16.mxu0 0
        %3225 = vmatpush1.bf16.msra.mxu0 0
        %3226 = vmatprep.mubr.bf16.mxu0 0
        %3227 = vmatmul.mubr.bf16.gmra.mrb[0].mxu0 %v3192
        %v3228 = vpop.f32.mrb[0].mxu0
        %v3229 = vadd.f32 0.0, %v3228
        %v3230 = vpop.f32.mrb[0].mxu0
        %v3231 = vpop.f32.mrb[0].mxu0
        %v3232 = vadd.f32 0.0, %v3231
        %v3233 = vpop.f32.mrb[0].mxu0
        %3234 = vdwg.mxu0
        %v3235 = vpack.c.bf16 %v3232, %v3229
        %s3236 = scalar_lea.vmem %s6, 112
        %v3237 = vld [vmem:[%s3236] sm:$0xff]
        %v3238 = vld [vmem:[%s3236 + $0x8] sm:$0xff]
        %v3239 = vpack.c.bf16 %v3238, %v3237
        %v3241 = vsel %vm530, %v3235, 0
        %3243 = vmatprep.subr.bf16.mxu0 0
        %3244 = vmatpush1.bf16.msra.mxu0 %v3239
        %3245 = vmatprep.subr.bf16.mxu0 0
        %3246 = vmatpush1.bf16.msra.mxu0 0
        %3247 = vmatprep.subr.bf16.mxu0 0
        %3248 = vmatpush1.bf16.msra.mxu0 0
        %3249 = vmatprep.subr.bf16.mxu0 0
        %3250 = vmatpush1.bf16.msra.mxu0 0
        %3251 = vmatprep.subr.bf16.mxu0 0
        %3252 = vmatpush1.bf16.msra.mxu0 0
        %3253 = vmatprep.subr.bf16.mxu0 0
        %3254 = vmatpush1.bf16.msra.mxu0 0
        %3255 = vmatprep.subr.bf16.mxu0 0
        %3256 = vmatpush1.bf16.msra.mxu0 0
        %3257 = vmatprep.subr.bf16.mxu0 0
        %3258 = vmatpush1.bf16.msra.mxu0 0
        %3259 = vmatprep.subr.bf16.mxu0 0
        %3260 = vmatpush1.bf16.msra.mxu0 0
        %3261 = vmatprep.subr.bf16.mxu0 0
        %3262 = vmatpush1.bf16.msra.mxu0 0
        %3263 = vmatprep.subr.bf16.mxu0 0
        %3264 = vmatpush1.bf16.msra.mxu0 0
        %3265 = vmatprep.subr.bf16.mxu0 0
        %3266 = vmatpush1.bf16.msra.mxu0 0
        %3267 = vmatprep.subr.bf16.mxu0 0
        %3268 = vmatpush1.bf16.msra.mxu0 0
        %3269 = vmatprep.subr.bf16.mxu0 0
        %3270 = vmatpush1.bf16.msra.mxu0 0
        %3271 = vmatprep.subr.bf16.mxu0 0
        %3272 = vmatpush1.bf16.msra.mxu0 0
        %3273 = vmatprep.subr.bf16.mxu0 0
        %3274 = vmatpush1.bf16.msra.mxu0 0
        %3275 = vmatprep.mubr.bf16.mxu0 0
        %3276 = vmatmul.mubr.bf16.gmra.mrb[0].mxu0 %v3241
        %v3277 = vpop.f32.mrb[0].mxu0
        %v3278 = vadd.f32 0.0, %v3277
        %v3279 = vpop.f32.mrb[0].mxu0
        %v3280 = vpop.f32.mrb[0].mxu0
        %v3281 = vadd.f32 0.0, %v3280
        %v3282 = vpop.f32.mrb[0].mxu0
        %3283 = vdwg.mxu0
        %v3284 = vadd.f32 %v2914, %v3278
        %v3285 = vadd.f32 %v2915, %v3281
        %v3286 = vld [vmem:[%s7] sm:$0x1]
        %v3288 = vlaneseq
        %v3289 = vshrl.u32 %v3288, 7
        %v3290 = vsub.s32 0, %v3289
        %v3291 = vrot.slane %v3286, %v3290
        %v3293 = vadd.f32 %v3284, %v3291
        %v3294 = vadd.f32 %v3285, %v3291
        %3295 = vst [vmem:[%s313] sm:$0xff] %v3293
        %3296 = vst [vmem:[%s313 + $0x8] sm:$0xff] %v3294
        %s3297 = sand.u32 %s208, 1
        %s3298 = scalar_lea.sflag [#allocation3], %s3297
        %s3299 = sand.u32 %s208, 1
        %s3300 = smul.addr %s3299, 16
        %s3301 = scalar_lea.vmem [#allocation2], %s3300
        // Predicated region
        $region53: #{forward.1} parent=51 // pred_check
          %p3302 = pneg %p218
        $region54: #{forward.1} parent=51 // pred_check_branch
          %3304 = sbr.rel (%p3302) target = $region56
        $region55: #{forward.1} parent=51 // pred_region
          %s3306 = ssub.s32 256, 256
          %3307 = vsyncadd %s3298, %s3306
          %s3308 = smul.addr %s22, 2
          %s3309 = smul.addr %s3308, 128
          %s3310 = scalar_lea.hbm %s8, %s3309
          %s3311 = sshll.u32 %s3301, 4
          %s3312 = int_to_ptr.vmem [resolvable:$true] %s3311
          %3317 = dma.vmem_to_hbm [thread:$0]  %s3312, 256, %s3310, %s3298, 128, 128, 8
        $region56: #{forward.1} parent=51 // pred_fallthru
          _
      $region52: #{forward.1} parent=5 // pred_fallthru
        _
      %p3318 = scmp.le.s32.totalorder 2, %s17
      // Predicated region
      $region57: #{forward.1} parent=5 // pred_check
        %p3319 = pneg %p3318
      $region58: #{forward.1} parent=5 // pred_check_branch
        %3321 = sbr.rel (%p3319) target = $region60
      $region59: #{forward.1} parent=5 // pred_region
        %s3322 = ssub.s32 %s17, 2
        // Predicated region
        $region61: #{forward.1} parent=59 // pred_check
          %p3323 = pneg %p224
        $region62: #{forward.1} parent=59 // pred_check_branch
          %3325 = sbr.rel (%p3323) target = $region64
        $region63: #{forward.1} parent=59 // pred_region
          %s3326 = sand.u32 %s209, 1
          %s3327 = scalar_lea.sflag [#allocation3], %s3326
          %s3328 = sand.u32 %s209, 1
          %s3329 = smul.addr %s3328, 16
          %s3330 = scalar_lea.vmem [#allocation2], %s3329
          %3331 = dma.done %s3327, 256
        $region64: #{forward.1} parent=59 // pred_fallthru
          _
      $region60: #{forward.1} parent=5 // pred_fallthru
        _
    $region6: #{forward.1} parent=1 // loop_footer
      %s21 = sadd.s32 1, %s17
    $region7: #{forward.1} parent=1 // loop_footer_branch
      %16 = sbr.rel target = $region3
    $region8: #{forward.1} parent=1 // loop_exit
      _
    %3332 = vsyncpa [#allocation3], 1
    %s3333 = scalar_lea.sflag [#allocation3], 1
    %3334 = vsyncpa %s3333, 1

</llo_original>
